<compile_context>
chip_gen: v5e
topology: v5e:2x2
jax: 0.10.0
libtpu: 0.0.40
codegen_flags: <defaults>
</compile_context>

<pallas_src>
import functools

import jax
import jax.numpy as jnp
from jax.experimental import pallas as pl
from jax.experimental.pallas import tpu as pltpu

EPS = 1e-5
LANE = 128


def _round_up(x, m):
    return (x + m - 1) // m * m


def _vmem_limit(block_bytes):
    """Scoped-VMEM budget: double-buffered blocks + headroom, capped vs physical VMEM."""
    try:
        cap = pltpu.get_tpu_info().vmem_capacity_bytes
    except Exception:
        cap = 64 * 1024 * 1024  # conservative default (v7x per-TensorCore VMEM)
    want = 2 * block_bytes + (8 << 20)
    return int(max(16 << 20, min(want, (3 * cap) // 4)))


# ---------------------------------------------------------------------------
# Kernel A: (optional BN+ReLU of the incoming activation) -> fused zero-pad ->
#           3x3 conv as a single im2col MXU matmul -> conv output + BN stats.
# ---------------------------------------------------------------------------
def _conv_stats_kernel(x_ref, scale_ref, shift_ref, w_ref,
                       y_ref, sum_ref, sq_ref, pad_scr, *, apply_act):
    """
    x_ref     : (1, H, W, Ci)  f32   input activation block (one batch image)
    scale_ref : (1, Ci)        f32   folded BN scale of the *input* (ignored if !apply_act)
    shift_ref : (1, Ci)        f32   folded BN shift of the *input*
    w_ref     : (9*Ci, Co)     bf16  3x3 weights, rows ordered (kh, kw, ci)
    y_ref     : (1, H, W, Co)  f32   raw conv output (pre-BN)
    sum_ref   : (1, 1, Co)     f32   per-image channel sum of y
    sq_ref    : (1, 1, Co)     f32   per-image channel sum of y^2
    pad_scr   : (H+2, W+2, Ci) f32   VMEM scratch holding the zero-padded activation
    """
    H, W, Co = y_ref.shape[1], y_ref.shape[2], y_ref.shape[3]
    Ci = x_ref.shape[3]

    x = x_ref[0]                                            # (H, W, Ci) f32
    if apply_act:
        scale = scale_ref[...].reshape(1, 1, Ci)
        shift = shift_ref[...].reshape(1, 1, Ci)
        a = jnp.maximum(x * scale + shift, 0.0)             # BN + ReLU in f32 (VPU)
    else:
        a = x

    # Fused "same" zero padding (no HBM-level jnp.pad round-trip).
    pad_scr[...] = jnp.zeros(pad_scr.shape, pad_scr.dtype)
    pad_scr[pl.ds(1, H), pl.ds(1, W), :] = a

    ap = pad_scr[...].astype(jnp.bfloat16)                  # single load, bf16 MXU operands

    # im2col: 9 static shifted slices concatenated along the contraction axis.
    cols = jnp.concatenate(
        [ap[kh:kh + H, kw:kw + W, :] for kh in range(3) for kw in range(3)],
        axis=-1)                                            # (H, W, 9*Ci) bf16
    lhs = cols.reshape(H * W, 9 * Ci)                       # flatten spatial -> 2D matmul

    acc = jnp.dot(lhs, w_ref[...],
                  preferred_element_type=jnp.float32)       # (H*W, Co) f32, one MXU matmul

    y_ref[...] = acc.reshape(1, H, W, Co)
    # Single-pass batch-norm statistics (reduced across the batch grid outside).
    sum_ref[...] = jnp.sum(acc, axis=0, keepdims=True).reshape(1, 1, Co)
    sq_ref[...] = jnp.sum(acc * acc, axis=0, keepdims=True).reshape(1, 1, Co)


# ---------------------------------------------------------------------------
# Kernel B: final BatchNorm (pre-folded scale/shift) + ReLU, elementwise.
# ---------------------------------------------------------------------------
def _bn_relu_kernel(y_ref, scale_ref, shift_ref, out_ref):
    C = out_ref.shape[3]
    scale = scale_ref[...].reshape(1, 1, 1, C)
    shift = shift_ref[...].reshape(1, 1, 1, C)
    out_ref[...] = jnp.maximum(y_ref[...] * scale + shift, 0.0)


# ---------------------------------------------------------------------------
# pallas_call wrappers
# ---------------------------------------------------------------------------
def _conv_stats_call(x, scale, shift, w, *, apply_act):
    N, H, W, Ci = x.shape
    Co = w.shape[1]
    block_bytes = (H * W * Ci * 4 + H * W * Co * 4 + w.size * 2
                   + (H + 2) * (W + 2) * Ci * 4
                   + H * W * 9 * Ci * 2 + H * W * Co * 4)
    return pl.pallas_call(
        functools.partial(_conv_stats_kernel, apply_act=apply_act),
        grid=(N,),
        in_specs=[
            pl.BlockSpec((1, H, W, Ci), lambda n: (n, 0, 0, 0)),
            pl.BlockSpec((1, Ci), lambda n: (0, 0)),
            pl.BlockSpec((1, Ci), lambda n: (0, 0)),
            pl.BlockSpec((9 * Ci, Co), lambda n: (0, 0)),
        ],
        out_specs=(
            pl.BlockSpec((1, H, W, Co), lambda n: (n, 0, 0, 0)),
            pl.BlockSpec((1, 1, Co), lambda n: (n, 0, 0)),
            pl.BlockSpec((1, 1, Co), lambda n: (n, 0, 0)),
        ),
        out_shape=(
            jax.ShapeDtypeStruct((N, H, W, Co), jnp.float32),
            jax.ShapeDtypeStruct((N, 1, Co), jnp.float32),
            jax.ShapeDtypeStruct((N, 1, Co), jnp.float32),
        ),
        scratch_shapes=[pltpu.VMEM((H + 2, W + 2, Ci), jnp.float32)],
        compiler_params=pltpu.CompilerParams(
            dimension_semantics=("parallel",),
            vmem_limit_bytes=_vmem_limit(block_bytes)),
    )(x, scale, shift, w)


def _bn_relu_call(y, scale, shift):
    N, H, W, C = y.shape
    block_bytes = 2 * H * W * C * 4
    return pl.pallas_call(
        _bn_relu_kernel,
        grid=(N,),
        in_specs=[
            pl.BlockSpec((1, H, W, C), lambda n: (n, 0, 0, 0)),
            pl.BlockSpec((1, C), lambda n: (0, 0)),
            pl.BlockSpec((1, C), lambda n: (0, 0)),
        ],
        out_specs=pl.BlockSpec((1, H, W, C), lambda n: (n, 0, 0, 0)),
        out_shape=jax.ShapeDtypeStruct((N, H, W, C), jnp.float32),
        compiler_params=pltpu.CompilerParams(
            dimension_semantics=("parallel",),
            vmem_limit_bytes=_vmem_limit(block_bytes)),
    )(y, scale, shift)


# ---------------------------------------------------------------------------
# Parameter packing + BN folding glue
# ---------------------------------------------------------------------------
def _pack_weight(w_hwio, ci_p, co_p):
    """(3,3,Ci,Co) HWIO -> zero-padded, im2col-reshaped (9*Ci_p, Co_p) bf16."""
    _, _, ci, co = w_hwio.shape
    w = jnp.pad(w_hwio.astype(jnp.float32),
                ((0, 0), (0, 0), (0, ci_p - ci), (0, co_p - co)))
    return w.reshape(9 * ci_p, co_p).astype(jnp.bfloat16)


def _pad_vec(v, c_p, fill):
    return jnp.pad(v.astype(jnp.float32), (0, c_p - v.shape[0]), constant_values=fill)


def _fold_bn(sums, sqs, npix, gamma, beta):
    """Training-mode batch statistics (biased variance) folded into scale/shift (f32)."""
    mean = jnp.sum(sums, axis=(0, 1)) / npix
    var = jnp.maximum(jnp.sum(sqs, axis=(0, 1)) / npix - mean * mean, 0.0)
    scale = gamma * jax.lax.rsqrt(var + EPS)
    shift = beta - mean * scale
    return scale.reshape(1, -1), shift.reshape(1, -1)


@jax.jit
def double_conv(x_nchw, params):
    """Forward pass of DoubleConv. Input/output in PyTorch NCHW layout."""
    N, Cin, H, W = x_nchw.shape
    Cout = params["gamma1"].shape[0]
    ci_p = _round_up(max(Cin, 8), 8)
    co_p = _round_up(Cout, LANE)

    # NCHW -> NHWC once around the whole block; channels padded for lane-dense layout.
    x = jnp.transpose(x_nchw, (0, 2, 3, 1)).astype(jnp.float32)
    x = jnp.pad(x, ((0, 0), (0, 0), (0, 0), (0, ci_p - Cin)))

    w1 = _pack_weight(params["w1"], ci_p, co_p)
    w2 = _pack_weight(params["w2"], co_p, co_p)
    g1 = _pad_vec(params["gamma1"], co_p, 1.0)
    b1 = _pad_vec(params["beta1"], co_p, 0.0)
    g2 = _pad_vec(params["gamma2"], co_p, 1.0)
    b2 = _pad_vec(params["beta2"], co_p, 0.0)

    ident_scale = jnp.ones((1, ci_p), jnp.float32)
    ident_shift = jnp.zeros((1, ci_p), jnp.float32)
    npix = N * H * W

    # layer 1: conv + batch statistics
    y1, s1, q1 = _conv_stats_call(x, ident_scale, ident_shift, w1, apply_act=False)
    scale1, shift1 = _fold_bn(s1, q1, npix, g1, b1)

    # layer 2: BN1 + ReLU fused into conv2 (+ its batch statistics)
    y2, s2, q2 = _conv_stats_call(y1, scale1, shift1, w2, apply_act=True)
    scale2, shift2 = _fold_bn(s2, q2, npix, g2, b2)

    # final BN2 + ReLU
    out = _bn_relu_call(y2, scale2, shift2)

    out = out[..., :Cout]                     # drop channel padding
    return jnp.transpose(out, (0, 3, 1, 2))   # NHWC -> NCHW


# ---------------------------------------------------------------------------
# Pure-JAX reference + test harness
# ---------------------------------------------------------------------------
def reference_double_conv(x_nchw, params, matmul_dtype=jnp.float32):
    """Reference via lax conv. matmul_dtype=bf16 mirrors the kernel's mixed-precision
    policy (bf16 MXU operands, f32 accumulation + f32 BatchNorm math)."""
    def block(x, w, gamma, beta):
        y = jax.lax.conv_general_dilated(
            x.astype(matmul_dtype), w.astype(matmul_dtype),
            window_strides=(1, 1), padding="SAME",
            dimension_numbers=("NHWC", "HWIO", "NHWC"),
            preferred_element_type=jnp.float32)
        mean = jnp.mean(y, axis=(0, 1, 2), keepdims=True)
        var = jnp.mean((y - mean) ** 2, axis=(0, 1, 2), keepdims=True)
        y = (y - mean) * jax.lax.rsqrt(var + EPS) * gamma + beta
        return jnp.maximum(y, 0.0)

    x = jnp.transpose(x_nchw, (0, 2, 3, 1))
    x = block(x, params["w1"], params["gamma1"], params["beta1"])
    x = block(x, params["w2"], params["gamma2"], params["beta2"])
    return jnp.transpose(x, (0, 3, 1, 2))


def init_params(key, in_channels, out_channels):
    k1, k2, k3, k4, k5, k6 = jax.random.split(key, 6)
    return {
        # HWIO conv weights (PyTorch Conv2d weight is OIHW; equivalent up to transpose).
        "w1": 0.1 * jax.random.normal(k1, (3, 3, in_channels, out_channels), jnp.float32),
        "w2": 0.1 * jax.random.normal(k2, (3, 3, out_channels, out_channels), jnp.float32),
        "gamma1": 1.0 + 0.1 * jax.random.normal(k3, (out_channels,), jnp.float32),
        "beta1": 0.1 * jax.random.normal(k4, (out_channels,), jnp.float32),
        "gamma2": 1.0 + 0.1 * jax.random.normal(k5, (out_channels,), jnp.float32),
        "beta2": 0.1 * jax.random.normal(k6, (out_channels,), jnp.float32),
    }


if __name__ == "__main__":
    key = jax.random.PRNGKey(0)
    kx, kp = jax.random.split(key)

    N, Cin, Cout, H, W = 2, 4, 8, 16, 16
    x = jax.random.normal(kx, (N, Cin, H, W), jnp.float32)  # NCHW, like PyTorch
    params = init_params(kp, Cin, Cout)

    out = jax.block_until_ready(double_conv(x, params))
    assert out.shape == (N, Cout, H, W), out.shape

    # Tight check vs a reference using the same mixed-precision policy
    # (bf16 MXU operands, f32 accumulation, f32 BatchNorm statistics).
    ref_bf16 = jax.block_until_ready(reference_double_conv(x, params, jnp.bfloat16))
    assert jnp.allclose(out, ref_bf16, atol=1e-2, rtol=1e-2), \
        float(jnp.max(jnp.abs(out - ref_bf16)))

    # Loose sanity check vs the pure-f32 PyTorch-equivalent reference.
    ref_f32 = jax.block_until_ready(reference_double_conv(x, params, jnp.float32))
    assert jnp.allclose(out, ref_f32, atol=1e-1, rtol=1e-1), \
        float(jnp.max(jnp.abs(out - ref_f32)))

    print("KERNEL_OK")
</pallas_src>

<mosaic_0001>
module attributes {stable_mosaic.version = 11 : i64} {
  func.func @_conv_stats_kernel(%arg0: i32, %arg1: memref<1x16x16x8xf32, #tpu.memory_space<vmem>>, %arg2: memref<1x8xf32, #tpu.memory_space<vmem>>, %arg3: memref<1x8xf32, #tpu.memory_space<vmem>>, %arg4: memref<72x128xbf16, #tpu.memory_space<vmem>>, %arg5: memref<1x16x16x128xf32, #tpu.memory_space<vmem>>, %arg6: memref<1x1x128xf32, #tpu.memory_space<vmem>>, %arg7: memref<1x1x128xf32, #tpu.memory_space<vmem>>, %arg8: memref<18x18x8xf32, #tpu.memory_space<vmem>>) attributes {dimension_semantics = [#tpu.dimension_semantics<parallel>], iteration_bounds = array<i64: 2>, scalar_prefetch = 0 : i64, scratch_operands = 1 : i64, tpu.core_type = #tpu.core_type<tc>, window_params = [{transform_indices = @transform_0, window_bounds = array<i64: 1, 16, 16, 8>}, {pipeline_mode = #tpu.pipeline_mode<synchronous>, transform_indices = @transform_1, window_bounds = array<i64: 1, 8>}, {pipeline_mode = #tpu.pipeline_mode<synchronous>, transform_indices = @transform_2, window_bounds = array<i64: 1, 8>}, {pipeline_mode = #tpu.pipeline_mode<synchronous>, transform_indices = @transform_3, window_bounds = array<i64: 72, 128>}, {transform_indices = @transform_4, window_bounds = array<i64: 1, 16, 16, 128>}, {transform_indices = @transform_5, window_bounds = array<i64: 1, 1, 128>}, {transform_indices = @transform_6, window_bounds = array<i64: 1, 1, 128>}]} {
    %c0 = arith.constant 0 : index
    %c0_0 = arith.constant 0 : index
    %c0_1 = arith.constant 0 : index
    %c0_2 = arith.constant 0 : index
    %0 = vector.load %arg1[%c0, %c0_0, %c0_1, %c0_2] : memref<1x16x16x8xf32, #tpu.memory_space<vmem>>, vector<1x16x16x8xf32>
    %1 = vector.shape_cast %0 : vector<1x16x16x8xf32> to vector<16x16x8xf32>
    %cst = arith.constant 0.000000e+00 : f32
    %2 = vector.broadcast %cst : f32 to vector<18x18x8xf32>
    %c0_3 = arith.constant 0 : index
    %c0_4 = arith.constant 0 : index
    %c0_5 = arith.constant 0 : index
    %3 = vector.load %arg8[%c0_3, %c0_4, %c0_5] : memref<18x18x8xf32, #tpu.memory_space<vmem>>, vector<18x18x8xf32>
    tpu.vector_store %arg8[%c0_3, %c0_4, %c0_5], %2 {strides = array<i32>} : memref<18x18x8xf32, #tpu.memory_space<vmem>>, vector<18x18x8xf32>,
    %c1 = arith.constant 1 : index
    %c1_6 = arith.constant 1 : index
    %c0_7 = arith.constant 0 : index
    %4 = vector.load %arg8[%c1, %c1_6, %c0_7] : memref<18x18x8xf32, #tpu.memory_space<vmem>>, vector<16x16x8xf32>
    tpu.vector_store %arg8[%c1, %c1_6, %c0_7], %1 {strides = array<i32>} : memref<18x18x8xf32, #tpu.memory_space<vmem>>, vector<16x16x8xf32>,
    %c0_8 = arith.constant 0 : index
    %c0_9 = arith.constant 0 : index
    %c0_10 = arith.constant 0 : index
    %5 = vector.load %arg8[%c0_8, %c0_9, %c0_10] : memref<18x18x8xf32, #tpu.memory_space<vmem>>, vector<18x18x8xf32>
    %6 = arith.truncf %5 : vector<18x18x8xf32> to vector<18x18x8xbf16>
    %7 = vector.extract_strided_slice %6 {offsets = [0, 0, 0], sizes = [16, 16, 8], strides = [1, 1, 1]} : vector<18x18x8xbf16> to vector<16x16x8xbf16>
    %8 = vector.extract_strided_slice %6 {offsets = [0, 1, 0], sizes = [16, 16, 8], strides = [1, 1, 1]} : vector<18x18x8xbf16> to vector<16x16x8xbf16>
    %9 = vector.extract_strided_slice %6 {offsets = [0, 2, 0], sizes = [16, 16, 8], strides = [1, 1, 1]} : vector<18x18x8xbf16> to vector<16x16x8xbf16>
    %10 = vector.extract_strided_slice %6 {offsets = [1, 0, 0], sizes = [16, 16, 8], strides = [1, 1, 1]} : vector<18x18x8xbf16> to vector<16x16x8xbf16>
    %11 = vector.extract_strided_slice %6 {offsets = [1, 1, 0], sizes = [16, 16, 8], strides = [1, 1, 1]} : vector<18x18x8xbf16> to vector<16x16x8xbf16>
    %12 = vector.extract_strided_slice %6 {offsets = [1, 2, 0], sizes = [16, 16, 8], strides = [1, 1, 1]} : vector<18x18x8xbf16> to vector<16x16x8xbf16>
    %13 = vector.extract_strided_slice %6 {offsets = [2, 0, 0], sizes = [16, 16, 8], strides = [1, 1, 1]} : vector<18x18x8xbf16> to vector<16x16x8xbf16>
    %14 = vector.extract_strided_slice %6 {offsets = [2, 1, 0], sizes = [16, 16, 8], strides = [1, 1, 1]} : vector<18x18x8xbf16> to vector<16x16x8xbf16>
    %15 = vector.extract_strided_slice %6 {offsets = [2, 2, 0], sizes = [16, 16, 8], strides = [1, 1, 1]} : vector<18x18x8xbf16> to vector<16x16x8xbf16>
    %16 = tpu.concatenate %7, %8, %9, %10, %11, %12, %13, %14, %15 in 2 : vector<16x16x8xbf16>, vector<16x16x8xbf16>, vector<16x16x8xbf16>, vector<16x16x8xbf16>, vector<16x16x8xbf16>, vector<16x16x8xbf16>, vector<16x16x8xbf16>, vector<16x16x8xbf16>, vector<16x16x8xbf16> -> vector<16x16x72xbf16>
    %17 = vector.shape_cast %16 : vector<16x16x72xbf16> to vector<256x72xbf16>
    %c0_11 = arith.constant 0 : index
    %c0_12 = arith.constant 0 : index
    %18 = vector.load %arg4[%c0_11, %c0_12] : memref<72x128xbf16, #tpu.memory_space<vmem>>, vector<72x128xbf16>
    %cst_13 = arith.constant dense<0.000000e+00> : vector<256x128xf32>
    %19 = tpu.matmul %17, %18, %cst_13 {dimension_numbers = #tpu.dot_dimension_numbers<[1], [0], [0], [1], [0, 0, 1, 1], [], []>} : vector<256x72xbf16>, vector<72x128xbf16>, vector<256x128xf32> -> vector<256x128xf32>
    %20 = vector.shape_cast %19 : vector<256x128xf32> to vector<1x16x16x128xf32>
    %c0_14 = arith.constant 0 : index
    %c0_15 = arith.constant 0 : index
    %c0_16 = arith.constant 0 : index
    %c0_17 = arith.constant 0 : index
    %21 = vector.load %arg5[%c0_14, %c0_15, %c0_16, %c0_17] : memref<1x16x16x128xf32, #tpu.memory_space<vmem>>, vector<1x16x16x128xf32>
    tpu.vector_store %arg5[%c0_14, %c0_15, %c0_16, %c0_17], %20 {strides = array<i32>} : memref<1x16x16x128xf32, #tpu.memory_space<vmem>>, vector<1x16x16x128xf32>,
    %cst_18 = arith.constant dense<0.000000e+00> : vector<128xf32>
    %22 = vector.multi_reduction <add>, %19, %cst_18 [0] : vector<256x128xf32> to vector<128xf32>
    %23 = vector.shape_cast %22 : vector<128xf32> to vector<1x128xf32>
    %24 = vector.shape_cast %23 : vector<1x128xf32> to vector<1x1x128xf32>
    %c0_19 = arith.constant 0 : index
    %c0_20 = arith.constant 0 : index
    %c0_21 = arith.constant 0 : index
    %25 = vector.load %arg6[%c0_19, %c0_20, %c0_21] : memref<1x1x128xf32, #tpu.memory_space<vmem>>, vector<1x1x128xf32>
    tpu.vector_store %arg6[%c0_19, %c0_20, %c0_21], %24 {strides = array<i32>} : memref<1x1x128xf32, #tpu.memory_space<vmem>>, vector<1x1x128xf32>,
    %26 = arith.mulf %19, %19 : vector<256x128xf32>
    %cst_22 = arith.constant dense<0.000000e+00> : vector<128xf32>
    %27 = vector.multi_reduction <add>, %26, %cst_22 [0] : vector<256x128xf32> to vector<128xf32>
    %28 = vector.shape_cast %27 : vector<128xf32> to vector<1x128xf32>
    %29 = vector.shape_cast %28 : vector<1x128xf32> to vector<1x1x128xf32>
    %c0_23 = arith.constant 0 : index
    %c0_24 = arith.constant 0 : index
    %c0_25 = arith.constant 0 : index
    %30 = vector.load %arg7[%c0_23, %c0_24, %c0_25] : memref<1x1x128xf32, #tpu.memory_space<vmem>>, vector<1x1x128xf32>
    tpu.vector_store %arg7[%c0_23, %c0_24, %c0_25], %29 {strides = array<i32>} : memref<1x1x128xf32, #tpu.memory_space<vmem>>, vector<1x1x128xf32>,
    return
  }
  func.func @transform_0(%arg0: i32) -> (i32, i32, i32, i32) {
    %c0_i32 = arith.constant 0 : i32
    %c0_i32_0 = arith.constant 0 : i32
    %c0_i32_1 = arith.constant 0 : i32
    %c0_i32_2 = arith.constant 0 : i32
    return %arg0, %c0_i32, %c0_i32_0, %c0_i32_1 : i32, i32, i32, i32
  }
  func.func @transform_1(%arg0: i32) -> (i32, i32) {
    %c0_i32 = arith.constant 0 : i32
    %c0_i32_0 = arith.constant 0 : i32
    %c0_i32_1 = arith.constant 0 : i32
    return %c0_i32, %c0_i32_0 : i32, i32
  }
  func.func @transform_2(%arg0: i32) -> (i32, i32) {
    %c0_i32 = arith.constant 0 : i32
    %c0_i32_0 = arith.constant 0 : i32
    %c0_i32_1 = arith.constant 0 : i32
    return %c0_i32, %c0_i32_0 : i32, i32
  }
  func.func @transform_3(%arg0: i32) -> (i32, i32) {
    %c0_i32 = arith.constant 0 : i32
    %c0_i32_0 = arith.constant 0 : i32
    %c0_i32_1 = arith.constant 0 : i32
    return %c0_i32, %c0_i32_0 : i32, i32
  }
  func.func @transform_4(%arg0: i32) -> (i32, i32, i32, i32) {
    %c0_i32 = arith.constant 0 : i32
    %c0_i32_0 = arith.constant 0 : i32
    %c0_i32_1 = arith.constant 0 : i32
    %c0_i32_2 = arith.constant 0 : i32
    return %arg0, %c0_i32, %c0_i32_0, %c0_i32_1 : i32, i32, i32, i32
  }
  func.func @transform_5(%arg0: i32) -> (i32, i32, i32) {
    %c0_i32 = arith.constant 0 : i32
    %c0_i32_0 = arith.constant 0 : i32
    %c0_i32_1 = arith.constant 0 : i32
    return %arg0, %c0_i32, %c0_i32_0 : i32, i32, i32
  }
  func.func @transform_6(%arg0: i32) -> (i32, i32, i32) {
    %c0_i32 = arith.constant 0 : i32
    %c0_i32_0 = arith.constant 0 : i32
    %c0_i32_1 = arith.constant 0 : i32
    return %arg0, %c0_i32, %c0_i32_0 : i32, i32, i32
  }
}

module attributes {stable_mosaic.version = 11 : i64} {
  func.func @_conv_stats_kernel(%arg0: i32, %arg1: memref<1x16x16x128xf32, #tpu.memory_space<vmem>>, %arg2: memref<1x128xf32, #tpu.memory_space<vmem>>, %arg3: memref<1x128xf32, #tpu.memory_space<vmem>>, %arg4: memref<1152x128xbf16, #tpu.memory_space<vmem>>, %arg5: memref<1x16x16x128xf32, #tpu.memory_space<vmem>>, %arg6: memref<1x1x128xf32, #tpu.memory_space<vmem>>, %arg7: memref<1x1x128xf32, #tpu.memory_space<vmem>>, %arg8: memref<18x18x128xf32, #tpu.memory_space<vmem>>) attributes {dimension_semantics = [#tpu.dimension_semantics<parallel>], iteration_bounds = array<i64: 2>, scalar_prefetch = 0 : i64, scratch_operands = 1 : i64, tpu.core_type = #tpu.core_type<tc>, window_params = [{transform_indices = @transform_0, window_bounds = array<i64: 1, 16, 16, 128>}, {pipeline_mode = #tpu.pipeline_mode<synchronous>, transform_indices = @transform_1, window_bounds = array<i64: 1, 128>}, {pipeline_mode = #tpu.pipeline_mode<synchronous>, transform_indices = @transform_2, window_bounds = array<i64: 1, 128>}, {pipeline_mode = #tpu.pipeline_mode<synchronous>, transform_indices = @transform_3, window_bounds = array<i64: 1152, 128>}, {transform_indices = @transform_4, window_bounds = array<i64: 1, 16, 16, 128>}, {transform_indices = @transform_5, window_bounds = array<i64: 1, 1, 128>}, {transform_indices = @transform_6, window_bounds = array<i64: 1, 1, 128>}]} {
    %c0 = arith.constant 0 : index
    %c0_0 = arith.constant 0 : index
    %c0_1 = arith.constant 0 : index
    %c0_2 = arith.constant 0 : index
    %0 = vector.load %arg1[%c0, %c0_0, %c0_1, %c0_2] : memref<1x16x16x128xf32, #tpu.memory_space<vmem>>, vector<1x16x16x128xf32>
    %1 = vector.shape_cast %0 : vector<1x16x16x128xf32> to vector<16x16x128xf32>
    %c0_3 = arith.constant 0 : index
    %c0_4 = arith.constant 0 : index
    %2 = vector.load %arg2[%c0_3, %c0_4] : memref<1x128xf32, #tpu.memory_space<vmem>>, vector<1x128xf32>
    %3 = vector.shape_cast %2 : vector<1x128xf32> to vector<1x1x128xf32>
    %c0_5 = arith.constant 0 : index
    %c0_6 = arith.constant 0 : index
    %4 = vector.load %arg3[%c0_5, %c0_6] : memref<1x128xf32, #tpu.memory_space<vmem>>, vector<1x128xf32>
    %5 = vector.shape_cast %4 : vector<1x128xf32> to vector<1x1x128xf32>
    %6 = vector.broadcast %3 : vector<1x1x128xf32> to vector<16x16x128xf32>
    %7 = arith.mulf %1, %6 : vector<16x16x128xf32>
    %8 = vector.broadcast %5 : vector<1x1x128xf32> to vector<16x16x128xf32>
    %9 = arith.addf %7, %8 : vector<16x16x128xf32>
    %cst = arith.constant 0.000000e+00 : f32
    %10 = vector.broadcast %cst : f32 to vector<16x16x128xf32>
    %11 = arith.maximumf %9, %10 : vector<16x16x128xf32>
    %cst_7 = arith.constant 0.000000e+00 : f32
    %12 = vector.broadcast %cst_7 : f32 to vector<18x18x128xf32>
    %c0_8 = arith.constant 0 : index
    %c0_9 = arith.constant 0 : index
    %c0_10 = arith.constant 0 : index
    %13 = vector.load %arg8[%c0_8, %c0_9, %c0_10] : memref<18x18x128xf32, #tpu.memory_space<vmem>>, vector<18x18x128xf32>
    tpu.vector_store %arg8[%c0_8, %c0_9, %c0_10], %12 {strides = array<i32>} : memref<18x18x128xf32, #tpu.memory_space<vmem>>, vector<18x18x128xf32>,
    %c1 = arith.constant 1 : index
    %c1_11 = arith.constant 1 : index
    %c0_12 = arith.constant 0 : index
    %14 = vector.load %arg8[%c1, %c1_11, %c0_12] : memref<18x18x128xf32, #tpu.memory_space<vmem>>, vector<16x16x128xf32>
    tpu.vector_store %arg8[%c1, %c1_11, %c0_12], %11 {strides = array<i32>} : memref<18x18x128xf32, #tpu.memory_space<vmem>>, vector<16x16x128xf32>,
    %c0_13 = arith.constant 0 : index
    %c0_14 = arith.constant 0 : index
    %c0_15 = arith.constant 0 : index
    %15 = vector.load %arg8[%c0_13, %c0_14, %c0_15] : memref<18x18x128xf32, #tpu.memory_space<vmem>>, vector<18x18x128xf32>
    %16 = arith.truncf %15 : vector<18x18x128xf32> to vector<18x18x128xbf16>
    %17 = vector.extract_strided_slice %16 {offsets = [0, 0, 0], sizes = [16, 16, 128], strides = [1, 1, 1]} : vector<18x18x128xbf16> to vector<16x16x128xbf16>
    %18 = vector.extract_strided_slice %16 {offsets = [0, 1, 0], sizes = [16, 16, 128], strides = [1, 1, 1]} : vector<18x18x128xbf16> to vector<16x16x128xbf16>
    %19 = vector.extract_strided_slice %16 {offsets = [0, 2, 0], sizes = [16, 16, 128], strides = [1, 1, 1]} : vector<18x18x128xbf16> to vector<16x16x128xbf16>
    %20 = vector.extract_strided_slice %16 {offsets = [1, 0, 0], sizes = [16, 16, 128], strides = [1, 1, 1]} : vector<18x18x128xbf16> to vector<16x16x128xbf16>
    %21 = vector.extract_strided_slice %16 {offsets = [1, 1, 0], sizes = [16, 16, 128], strides = [1, 1, 1]} : vector<18x18x128xbf16> to vector<16x16x128xbf16>
    %22 = vector.extract_strided_slice %16 {offsets = [1, 2, 0], sizes = [16, 16, 128], strides = [1, 1, 1]} : vector<18x18x128xbf16> to vector<16x16x128xbf16>
    %23 = vector.extract_strided_slice %16 {offsets = [2, 0, 0], sizes = [16, 16, 128], strides = [1, 1, 1]} : vector<18x18x128xbf16> to vector<16x16x128xbf16>
    %24 = vector.extract_strided_slice %16 {offsets = [2, 1, 0], sizes = [16, 16, 128], strides = [1, 1, 1]} : vector<18x18x128xbf16> to vector<16x16x128xbf16>
    %25 = vector.extract_strided_slice %16 {offsets = [2, 2, 0], sizes = [16, 16, 128], strides = [1, 1, 1]} : vector<18x18x128xbf16> to vector<16x16x128xbf16>
    %26 = tpu.concatenate %17, %18, %19, %20, %21, %22, %23, %24, %25 in 2 : vector<16x16x128xbf16>, vector<16x16x128xbf16>, vector<16x16x128xbf16>, vector<16x16x128xbf16>, vector<16x16x128xbf16>, vector<16x16x128xbf16>, vector<16x16x128xbf16>, vector<16x16x128xbf16>, vector<16x16x128xbf16> -> vector<16x16x1152xbf16>
    %27 = vector.shape_cast %26 : vector<16x16x1152xbf16> to vector<256x1152xbf16>
    %c0_16 = arith.constant 0 : index
    %c0_17 = arith.constant 0 : index
    %28 = vector.load %arg4[%c0_16, %c0_17] : memref<1152x128xbf16, #tpu.memory_space<vmem>>, vector<1152x128xbf16>
    %cst_18 = arith.constant dense<0.000000e+00> : vector<256x128xf32>
    %29 = tpu.matmul %27, %28, %cst_18 {dimension_numbers = #tpu.dot_dimension_numbers<[1], [0], [0], [1], [0, 0, 1, 1], [], []>} : vector<256x1152xbf16>, vector<1152x128xbf16>, vector<256x128xf32> -> vector<256x128xf32>
    %30 = vector.shape_cast %29 : vector<256x128xf32> to vector<1x16x16x128xf32>
    %c0_19 = arith.constant 0 : index
    %c0_20 = arith.constant 0 : index
    %c0_21 = arith.constant 0 : index
    %c0_22 = arith.constant 0 : index
    %31 = vector.load %arg5[%c0_19, %c0_20, %c0_21, %c0_22] : memref<1x16x16x128xf32, #tpu.memory_space<vmem>>, vector<1x16x16x128xf32>
    tpu.vector_store %arg5[%c0_19, %c0_20, %c0_21, %c0_22], %30 {strides = array<i32>} : memref<1x16x16x128xf32, #tpu.memory_space<vmem>>, vector<1x16x16x128xf32>,
    %cst_23 = arith.constant dense<0.000000e+00> : vector<128xf32>
    %32 = vector.multi_reduction <add>, %29, %cst_23 [0] : vector<256x128xf32> to vector<128xf32>
    %33 = vector.shape_cast %32 : vector<128xf32> to vector<1x128xf32>
    %34 = vector.shape_cast %33 : vector<1x128xf32> to vector<1x1x128xf32>
    %c0_24 = arith.constant 0 : index
    %c0_25 = arith.constant 0 : index
    %c0_26 = arith.constant 0 : index
    %35 = vector.load %arg6[%c0_24, %c0_25, %c0_26] : memref<1x1x128xf32, #tpu.memory_space<vmem>>, vector<1x1x128xf32>
    tpu.vector_store %arg6[%c0_24, %c0_25, %c0_26], %34 {strides = array<i32>} : memref<1x1x128xf32, #tpu.memory_space<vmem>>, vector<1x1x128xf32>,
    %36 = arith.mulf %29, %29 : vector<256x128xf32>
    %cst_27 = arith.constant dense<0.000000e+00> : vector<128xf32>
    %37 = vector.multi_reduction <add>, %36, %cst_27 [0] : vector<256x128xf32> to vector<128xf32>
    %38 = vector.shape_cast %37 : vector<128xf32> to vector<1x128xf32>
    %39 = vector.shape_cast %38 : vector<1x128xf32> to vector<1x1x128xf32>
    %c0_28 = arith.constant 0 : index
    %c0_29 = arith.constant 0 : index
    %c0_30 = arith.constant 0 : index
    %40 = vector.load %arg7[%c0_28, %c0_29, %c0_30] : memref<1x1x128xf32, #tpu.memory_space<vmem>>, vector<1x1x128xf32>
    tpu.vector_store %arg7[%c0_28, %c0_29, %c0_30], %39 {strides = array<i32>} : memref<1x1x128xf32, #tpu.memory_space<vmem>>, vector<1x1x128xf32>,
    return
  }
  func.func @transform_0(%arg0: i32) -> (i32, i32, i32, i32) {
    %c0_i32 = arith.constant 0 : i32
    %c0_i32_0 = arith.constant 0 : i32
    %c0_i32_1 = arith.constant 0 : i32
    %c0_i32_2 = arith.constant 0 : i32
    return %arg0, %c0_i32, %c0_i32_0, %c0_i32_1 : i32, i32, i32, i32
  }
  func.func @transform_1(%arg0: i32) -> (i32, i32) {
    %c0_i32 = arith.constant 0 : i32
    %c0_i32_0 = arith.constant 0 : i32
    %c0_i32_1 = arith.constant 0 : i32
    return %c0_i32, %c0_i32_0 : i32, i32
  }
  func.func @transform_2(%arg0: i32) -> (i32, i32) {
    %c0_i32 = arith.constant 0 : i32
    %c0_i32_0 = arith.constant 0 : i32
    %c0_i32_1 = arith.constant 0 : i32
    return %c0_i32, %c0_i32_0 : i32, i32
  }
  func.func @transform_3(%arg0: i32) -> (i32, i32) {
    %c0_i32 = arith.constant 0 : i32
    %c0_i32_0 = arith.constant 0 : i32
    %c0_i32_1 = arith.constant 0 : i32
    return %c0_i32, %c0_i32_0 : i32, i32
  }
  func.func @transform_4(%arg0: i32) -> (i32, i32, i32, i32) {
    %c0_i32 = arith.constant 0 : i32
    %c0_i32_0 = arith.constant 0 : i32
    %c0_i32_1 = arith.constant 0 : i32
    %c0_i32_2 = arith.constant 0 : i32
    return %arg0, %c0_i32, %c0_i32_0, %c0_i32_1 : i32, i32, i32, i32
  }
  func.func @transform_5(%arg0: i32) -> (i32, i32, i32) {
    %c0_i32 = arith.constant 0 : i32
    %c0_i32_0 = arith.constant 0 : i32
    %c0_i32_1 = arith.constant 0 : i32
    return %arg0, %c0_i32, %c0_i32_0 : i32, i32, i32
  }
  func.func @transform_6(%arg0: i32) -> (i32, i32, i32) {
    %c0_i32 = arith.constant 0 : i32
    %c0_i32_0 = arith.constant 0 : i32
    %c0_i32_1 = arith.constant 0 : i32
    return %arg0, %c0_i32, %c0_i32_0 : i32, i32, i32
  }
}

module attributes {stable_mosaic.version = 11 : i64} {
  func.func @_bn_relu_kernel(%arg0: i32, %arg1: memref<1x16x16x128xf32, #tpu.memory_space<vmem>>, %arg2: memref<1x128xf32, #tpu.memory_space<vmem>>, %arg3: memref<1x128xf32, #tpu.memory_space<vmem>>, %arg4: memref<1x16x16x128xf32, #tpu.memory_space<vmem>>) attributes {dimension_semantics = [#tpu.dimension_semantics<parallel>], iteration_bounds = array<i64: 2>, scalar_prefetch = 0 : i64, scratch_operands = 0 : i64, tpu.core_type = #tpu.core_type<tc>, window_params = [{transform_indices = @transform_0, window_bounds = array<i64: 1, 16, 16, 128>}, {pipeline_mode = #tpu.pipeline_mode<synchronous>, transform_indices = @transform_1, window_bounds = array<i64: 1, 128>}, {pipeline_mode = #tpu.pipeline_mode<synchronous>, transform_indices = @transform_2, window_bounds = array<i64: 1, 128>}, {transform_indices = @transform_3, window_bounds = array<i64: 1, 16, 16, 128>}]} {
    %c0 = arith.constant 0 : index
    %c0_0 = arith.constant 0 : index
    %0 = vector.load %arg2[%c0, %c0_0] : memref<1x128xf32, #tpu.memory_space<vmem>>, vector<1x128xf32>
    %1 = vector.shape_cast %0 : vector<1x128xf32> to vector<1x1x1x128xf32>
    %c0_1 = arith.constant 0 : index
    %c0_2 = arith.constant 0 : index
    %2 = vector.load %arg3[%c0_1, %c0_2] : memref<1x128xf32, #tpu.memory_space<vmem>>, vector<1x128xf32>
    %3 = vector.shape_cast %2 : vector<1x128xf32> to vector<1x1x1x128xf32>
    %c0_3 = arith.constant 0 : index
    %c0_4 = arith.constant 0 : index
    %c0_5 = arith.constant 0 : index
    %c0_6 = arith.constant 0 : index
    %4 = vector.load %arg1[%c0_3, %c0_4, %c0_5, %c0_6] : memref<1x16x16x128xf32, #tpu.memory_space<vmem>>, vector<1x16x16x128xf32>
    %5 = vector.broadcast %1 : vector<1x1x1x128xf32> to vector<1x16x16x128xf32>
    %6 = arith.mulf %4, %5 : vector<1x16x16x128xf32>
    %7 = vector.broadcast %3 : vector<1x1x1x128xf32> to vector<1x16x16x128xf32>
    %8 = arith.addf %6, %7 : vector<1x16x16x128xf32>
    %cst = arith.constant 0.000000e+00 : f32
    %9 = vector.broadcast %cst : f32 to vector<1x16x16x128xf32>
    %10 = arith.maximumf %8, %9 : vector<1x16x16x128xf32>
    %c0_7 = arith.constant 0 : index
    %c0_8 = arith.constant 0 : index
    %c0_9 = arith.constant 0 : index
    %c0_10 = arith.constant 0 : index
    %11 = vector.load %arg4[%c0_7, %c0_8, %c0_9, %c0_10] : memref<1x16x16x128xf32, #tpu.memory_space<vmem>>, vector<1x16x16x128xf32>
    tpu.vector_store %arg4[%c0_7, %c0_8, %c0_9, %c0_10], %10 {strides = array<i32>} : memref<1x16x16x128xf32, #tpu.memory_space<vmem>>, vector<1x16x16x128xf32>,
    return
  }
  func.func @transform_0(%arg0: i32) -> (i32, i32, i32, i32) {
    %c0_i32 = arith.constant 0 : i32
    %c0_i32_0 = arith.constant 0 : i32
    %c0_i32_1 = arith.constant 0 : i32
    %c0_i32_2 = arith.constant 0 : i32
    return %arg0, %c0_i32, %c0_i32_0, %c0_i32_1 : i32, i32, i32, i32
  }
  func.func @transform_1(%arg0: i32) -> (i32, i32) {
    %c0_i32 = arith.constant 0 : i32
    %c0_i32_0 = arith.constant 0 : i32
    %c0_i32_1 = arith.constant 0 : i32
    return %c0_i32, %c0_i32_0 : i32, i32
  }
  func.func @transform_2(%arg0: i32) -> (i32, i32) {
    %c0_i32 = arith.constant 0 : i32
    %c0_i32_0 = arith.constant 0 : i32
    %c0_i32_1 = arith.constant 0 : i32
    return %c0_i32, %c0_i32_0 : i32, i32
  }
  func.func @transform_3(%arg0: i32) -> (i32, i32, i32, i32) {
    %c0_i32 = arith.constant 0 : i32
    %c0_i32_0 = arith.constant 0 : i32
    %c0_i32_1 = arith.constant 0 : i32
    %c0_i32_2 = arith.constant 0 : i32
    return %arg0, %c0_i32, %c0_i32_0, %c0_i32_1 : i32, i32, i32, i32
  }
}

</mosaic_0001>

<llo_original>
// kernel: double_conv.5
$region0: #{double_conv.5}
  #allocation0 [shape = 'u32[]', space=smem, size = 0x4, offset = 0x4, fixed_abs, tag = 'smem constant byte address 0x4 - core index']
  #allocation1 [shape = 'u32[72,128]{1,0:T(1,128)}', space=vmem, size = 0x9000, scoped, tag = 'internal scratch']
  %s0 = inlined_call_operand.vmem [shape: f32[2,16,16,128], index: 0, kind: input, shape index: {}]
  %s1 = inlined_call_operand.vmem [shape: f32[1,128], index: 1, kind: input, shape index: {}]
  %s2 = inlined_call_operand.vmem [shape: f32[1,128], index: 2, kind: input, shape index: {}]
  %s3 = inlined_call_operand.vmem [shape: f32[2,16,16,128], index: 3, kind: output, shape index: {}]
  %s4 = sld [smem:[#allocation0]]
  $region45: #{double_conv.5} parent=0
    _
  %s6 = ssub.s32 1, %s4
  %s7 = scalar_select 0, %s6, %s4
  loop: start=0, step=1, limit=4
  $region2: #{double_conv.5} parent=0 // loop_pre_header
    _
  $region3: #{double_conv.5} parent=0 // loop_header
    %s9 = sphi 0, %s13
    %p10 = scmp.ge.s32.totalorder %s9, 4
    %s19 = sphi 0, %s21
    %s22 = sphi 0, %s19
    %s23 = sphi 0, %s22
    %s39 = sphi 0, %s23
    %s43 = sphi 0, %s43
    %s45 = sphi 0, %s43
    %s46 = sphi 0, %s45
    %s60 = sphi 0, %s46
    %s64 = sphi 0, %s64
    %s66 = sphi 0, %s64
    %s67 = sphi 0, %s66
    %s81 = sphi 0, %s67
    %s87 = sphi 0, %s89
    %s90 = sphi 0, %s87
    %s91 = sphi 0, %s90
    %s107 = sphi 0, %s91
  $region4: #{double_conv.5} parent=0 // loop_header_branch
    %12 = sbr.rel (%p10) target = $region8
  $region5: #{double_conv.5} parent=0 // loop_body
    %s14 = ssub.s32 %s9, 1
    %s15 = ssub.s32 %s9, 2
    %s16 = sadd.s32 %s9, 1
    %s17 = ssub.s32 %s9, %s16
    %p18 = scmp.eq.s32.totalorder %s17, 0
    %s20 = sadd.s32 %s19, 1
    %s21 = scalar_select %p18, %s19, %s20
    %p24 = pneg %p18
    %p25 = scmp.eq.s32.totalorder %s9, 1
    %p26 = por %p24, %p25
    %p27 = scmp.ne.s32.totalorder %s19, %s22
    %p28 = scmp.eq.s32.totalorder %s9, 0
    %p29 = por %p27, %p28
    %p30 = scmp.ne.s32.totalorder %s19, %s22
    %p31 = scmp.eq.s32.totalorder %s14, 1
    %p32 = por %p30, %p31
    %p33 = scmp.ne.s32.totalorder %s22, %s23
    %p34 = scmp.eq.s32.totalorder %s14, 0
    %p35 = por %p33, %p34
    %p36 = scmp.ne.s32.totalorder %s22, %s23
    %p37 = scmp.eq.s32.totalorder %s15, 1
    %p38 = por %p36, %p37
    %p40 = scmp.ne.s32.totalorder %s23, %s39
    %p41 = scmp.eq.s32.totalorder %s15, 0
    %p42 = por %p40, %p41
    %s44 = sadd.s32 %s43, 1
    %p47 = scmp.eq.s32.totalorder %s9, 1
    %p48 = scmp.ne.s32.totalorder %s43, %s45
    %p49 = scmp.eq.s32.totalorder %s9, 0
    %p50 = por %p48, %p49
    %p51 = scmp.ne.s32.totalorder %s43, %s45
    %p52 = scmp.eq.s32.totalorder %s14, 1
    %p53 = por %p51, %p52
    %p54 = scmp.ne.s32.totalorder %s45, %s46
    %p55 = scmp.eq.s32.totalorder %s14, 0
    %p56 = por %p54, %p55
    %p57 = scmp.ne.s32.totalorder %s45, %s46
    %p58 = scmp.eq.s32.totalorder %s15, 1
    %p59 = por %p57, %p58
    %p61 = scmp.ne.s32.totalorder %s46, %s60
    %p62 = scmp.eq.s32.totalorder %s15, 0
    %p63 = por %p61, %p62
    %s65 = sadd.s32 %s64, 1
    %p68 = scmp.eq.s32.totalorder %s9, 1
    %p69 = scmp.ne.s32.totalorder %s64, %s66
    %p70 = scmp.eq.s32.totalorder %s9, 0
    %p71 = por %p69, %p70
    %p72 = scmp.ne.s32.totalorder %s64, %s66
    %p73 = scmp.eq.s32.totalorder %s14, 1
    %p74 = por %p72, %p73
    %p75 = scmp.ne.s32.totalorder %s66, %s67
    %p76 = scmp.eq.s32.totalorder %s14, 0
    %p77 = por %p75, %p76
    %p78 = scmp.ne.s32.totalorder %s66, %s67
    %p79 = scmp.eq.s32.totalorder %s15, 1
    %p80 = por %p78, %p79
    %p82 = scmp.ne.s32.totalorder %s67, %s81
    %p83 = scmp.eq.s32.totalorder %s15, 0
    %p84 = por %p82, %p83
    %s85 = ssub.s32 %s9, %s16
    %p86 = scmp.eq.s32.totalorder %s85, 0
    %s88 = sadd.s32 %s87, 1
    %s89 = scalar_select %p86, %s87, %s88
    %p92 = pneg %p86
    %p93 = scmp.eq.s32.totalorder %s9, 1
    %p94 = por %p92, %p93
    %p95 = scmp.ne.s32.totalorder %s87, %s90
    %p96 = scmp.eq.s32.totalorder %s9, 0
    %p97 = por %p95, %p96
    %p98 = scmp.ne.s32.totalorder %s87, %s90
    %p99 = scmp.eq.s32.totalorder %s14, 1
    %p100 = por %p98, %p99
    %p101 = scmp.ne.s32.totalorder %s90, %s91
    %p102 = scmp.eq.s32.totalorder %s14, 0
    %p103 = por %p101, %p102
    %p104 = scmp.ne.s32.totalorder %s90, %s91
    %p105 = scmp.eq.s32.totalorder %s15, 1
    %p106 = por %p104, %p105
    %p108 = scmp.ne.s32.totalorder %s91, %s107
    %p109 = scmp.eq.s32.totalorder %s15, 0
    %p110 = por %p108, %p109
    %p111 = scmp.le.s32.totalorder 1, %s9
    %p112 = scmp.lt.s32.totalorder %s9, 3
    %p113 = pnand %p111, %p112
    %p114 = pneg %p113
    // Predicated region
    $region9: #{double_conv.5} parent=5 // pred_check
      _
    $region10: #{double_conv.5} parent=5 // pred_check_branch
      %116 = sbr.rel (%p113) target = $region12
    $region11: #{double_conv.5} parent=5 // pred_region
      %s117 = ssub.s32 %s9, 1
      // Predicated region
      $region13: #{double_conv.5} parent=11 // pred_check
        %p118 = pneg %p56
      $region14: #{double_conv.5} parent=11 // pred_check_branch
        %120 = sbr.rel (%p118) target = $region16
      $region15: #{double_conv.5} parent=11 // pred_region
        _
      $region16: #{double_conv.5} parent=11 // pred_fallthru
        _
      // Predicated region
      $region17: #{double_conv.5} parent=11 // pred_check
        %p121 = pneg %p77
      $region18: #{double_conv.5} parent=11 // pred_check_branch
        %123 = sbr.rel (%p121) target = $region20
      $region19: #{double_conv.5} parent=11 // pred_region
        _
      $region20: #{double_conv.5} parent=11 // pred_fallthru
        _
    $region12: #{double_conv.5} parent=5 // pred_fallthru
      _
    %p124 = scmp.lt.s32.totalorder %s9, 2
    // Predicated region
    $region21: #{double_conv.5} parent=5 // pred_check
      %p125 = pneg %p124
    $region22: #{double_conv.5} parent=5 // pred_check_branch
      %127 = sbr.rel (%p125) target = $region24
    $region23: #{double_conv.5} parent=5 // pred_region
      // Predicated region
      $region25: #{double_conv.5} parent=23 // pred_check
        %p128 = pneg %p29
      $region26: #{double_conv.5} parent=23 // pred_check_branch
        %130 = sbr.rel (%p128) target = $region28
      $region27: #{double_conv.5} parent=23 // pred_region
        %p131 = scmp.lt.s32.totalorder %s9, 1
        %s132 = scalar_select %p131, %s9, 1
        %s133 = smul.addr %s132, 32
        %s134 = smul.addr %s133, 8
        %s135 = scalar_lea.vmem %s0, %s134
      $region28: #{double_conv.5} parent=23 // pred_fallthru
        _
    $region24: #{double_conv.5} parent=5 // pred_fallthru
      _
    %p136 = scmp.le.s32.totalorder 1, %s9
    %p137 = scmp.lt.s32.totalorder %s9, 3
    %p138 = pnand %p136, %p137
    %p139 = pneg %p138
    // Predicated region
    $region29: #{double_conv.5} parent=5 // pred_check
      _
    $region30: #{double_conv.5} parent=5 // pred_check_branch
      %141 = sbr.rel (%p138) target = $region32
    $region31: #{double_conv.5} parent=5 // pred_region
      %s142 = ssub.s32 %s9, 1
      %p143 = scmp.lt.s32.totalorder %s14, 1
      %s144 = scalar_select %p143, %s14, 1
      %s145 = smul.addr %s144, 32
      %s146 = smul.addr %s145, 8
      %s147 = scalar_lea.vmem %s0, %s146
      %p148 = pneg %p35
      %p149 = pneg %p32
      %p150 = pneg %p56
      %p151 = pneg %p53
      %p152 = pneg %p77
      %p153 = pneg %p74
      %p154 = pneg %p103
      %p155 = pneg %p100
      %p156 = scmp.lt.s32.totalorder %s14, 1
      %s157 = scalar_select %p156, %s14, 1
      %s158 = smul.addr %s157, 32
      %s159 = smul.addr %s158, 8
      %s160 = scalar_lea.vmem %s3, %s159
      %p161 = scmp.lt.s32.totalorder %s14, 1
      %s162 = scalar_select %p161, %s14, 1
      %s163 = smul.addr %s162, 32
      %s164 = smul.addr %s163, 8
      %s165 = scalar_lea.vmem %s0, %s164
      %p166 = scmp.lt.s32.totalorder %s14, 1
      %s167 = scalar_select %p166, %s14, 1
      %s168 = smul.addr %s167, 32
      %s169 = smul.addr %s168, 8
      %s170 = scalar_lea.vmem %s3, %s169
      %v171 = vld [vmem:[%s1] sm:$0x1]
      %v172 = vld [vmem:[%s2] sm:$0x1]
      %v173 = vld [vmem:[%s165] sm:$0xff]
      %v174 = vld [vmem:[%s165 + $0x8] sm:$0xff]
      %v175 = vld [vmem:[%s165 + $0x10] sm:$0xff]
      %v176 = vld [vmem:[%s165 + $0x18] sm:$0xff]
      %v177 = vld [vmem:[%s165 + $0x20] sm:$0xff]
      %v178 = vld [vmem:[%s165 + $0x28] sm:$0xff]
      %v179 = vld [vmem:[%s165 + $0x30] sm:$0xff]
      %v180 = vld [vmem:[%s165 + $0x38] sm:$0xff]
      %v181 = vld [vmem:[%s165 + $0x40] sm:$0xff]
      %v182 = vld [vmem:[%s165 + $0x48] sm:$0xff]
      %v183 = vld [vmem:[%s165 + $0x50] sm:$0xff]
      %v184 = vld [vmem:[%s165 + $0x58] sm:$0xff]
      %v185 = vld [vmem:[%s165 + $0x60] sm:$0xff]
      %v186 = vld [vmem:[%s165 + $0x68] sm:$0xff]
      %v187 = vld [vmem:[%s165 + $0x70] sm:$0xff]
      %v188 = vld [vmem:[%s165 + $0x78] sm:$0xff]
      %v189 = vld [vmem:[%s165 + $0x80] sm:$0xff]
      %v190 = vld [vmem:[%s165 + $0x88] sm:$0xff]
      %v191 = vld [vmem:[%s165 + $0x90] sm:$0xff]
      %v192 = vld [vmem:[%s165 + $0x98] sm:$0xff]
      %v193 = vld [vmem:[%s165 + $0xa0] sm:$0xff]
      %v194 = vld [vmem:[%s165 + $0xa8] sm:$0xff]
      %v195 = vld [vmem:[%s165 + $0xb0] sm:$0xff]
      %v196 = vld [vmem:[%s165 + $0xb8] sm:$0xff]
      %v197 = vld [vmem:[%s165 + $0xc0] sm:$0xff]
      %v198 = vld [vmem:[%s165 + $0xc8] sm:$0xff]
      %v199 = vld [vmem:[%s165 + $0xd0] sm:$0xff]
      %v200 = vld [vmem:[%s165 + $0xd8] sm:$0xff]
      %v201 = vld [vmem:[%s165 + $0xe0] sm:$0xff]
      %v202 = vld [vmem:[%s165 + $0xe8] sm:$0xff]
      %v203 = vld [vmem:[%s165 + $0xf0] sm:$0xff]
      %v204 = vld [vmem:[%s165 + $0xf8] sm:$0xff]
      %v206 = vperm.slane %v171, 0
      %v208 = vmul.f32 %v173, %v206
      %v209 = vmul.f32 %v174, %v206
      %v210 = vmul.f32 %v175, %v206
      %v211 = vmul.f32 %v176, %v206
      %v212 = vmul.f32 %v177, %v206
      %v213 = vmul.f32 %v178, %v206
      %v214 = vmul.f32 %v179, %v206
      %v215 = vmul.f32 %v180, %v206
      %v216 = vmul.f32 %v181, %v206
      %v217 = vmul.f32 %v182, %v206
      %v218 = vmul.f32 %v183, %v206
      %v219 = vmul.f32 %v184, %v206
      %v220 = vmul.f32 %v185, %v206
      %v221 = vmul.f32 %v186, %v206
      %v222 = vmul.f32 %v187, %v206
      %v223 = vmul.f32 %v188, %v206
      %v224 = vmul.f32 %v189, %v206
      %v225 = vmul.f32 %v190, %v206
      %v226 = vmul.f32 %v191, %v206
      %v227 = vmul.f32 %v192, %v206
      %v228 = vmul.f32 %v193, %v206
      %v229 = vmul.f32 %v194, %v206
      %v230 = vmul.f32 %v195, %v206
      %v231 = vmul.f32 %v196, %v206
      %v232 = vmul.f32 %v197, %v206
      %v233 = vmul.f32 %v198, %v206
      %v234 = vmul.f32 %v199, %v206
      %v235 = vmul.f32 %v200, %v206
      %v236 = vmul.f32 %v201, %v206
      %v237 = vmul.f32 %v202, %v206
      %v238 = vmul.f32 %v203, %v206
      %v239 = vmul.f32 %v204, %v206
      %v241 = vperm.slane %v172, 0
      %v243 = vadd.f32 %v208, %v241
      %v244 = vadd.f32 %v209, %v241
      %v245 = vadd.f32 %v210, %v241
      %v246 = vadd.f32 %v211, %v241
      %v247 = vadd.f32 %v212, %v241
      %v248 = vadd.f32 %v213, %v241
      %v249 = vadd.f32 %v214, %v241
      %v250 = vadd.f32 %v215, %v241
      %v251 = vadd.f32 %v216, %v241
      %v252 = vadd.f32 %v217, %v241
      %v253 = vadd.f32 %v218, %v241
      %v254 = vadd.f32 %v219, %v241
      %v255 = vadd.f32 %v220, %v241
      %v256 = vadd.f32 %v221, %v241
      %v257 = vadd.f32 %v222, %v241
      %v258 = vadd.f32 %v223, %v241
      %v259 = vadd.f32 %v224, %v241
      %v260 = vadd.f32 %v225, %v241
      %v261 = vadd.f32 %v226, %v241
      %v262 = vadd.f32 %v227, %v241
      %v263 = vadd.f32 %v228, %v241
      %v264 = vadd.f32 %v229, %v241
      %v265 = vadd.f32 %v230, %v241
      %v266 = vadd.f32 %v231, %v241
      %v267 = vadd.f32 %v232, %v241
      %v268 = vadd.f32 %v233, %v241
      %v269 = vadd.f32 %v234, %v241
      %v270 = vadd.f32 %v235, %v241
      %v271 = vadd.f32 %v236, %v241
      %v272 = vadd.f32 %v237, %v241
      %v273 = vadd.f32 %v238, %v241
      %v274 = vadd.f32 %v239, %v241
      %v275 = vmax.f32 %v243, 0.0
      %v276 = vmax.f32 %v244, 0.0
      %v277 = vmax.f32 %v245, 0.0
      %v278 = vmax.f32 %v246, 0.0
      %v279 = vmax.f32 %v247, 0.0
      %v280 = vmax.f32 %v248, 0.0
      %v281 = vmax.f32 %v249, 0.0
      %v282 = vmax.f32 %v250, 0.0
      %v283 = vmax.f32 %v251, 0.0
      %v284 = vmax.f32 %v252, 0.0
      %v285 = vmax.f32 %v253, 0.0
      %v286 = vmax.f32 %v254, 0.0
      %v287 = vmax.f32 %v255, 0.0
      %v288 = vmax.f32 %v256, 0.0
      %v289 = vmax.f32 %v257, 0.0
      %v290 = vmax.f32 %v258, 0.0
      %v291 = vmax.f32 %v259, 0.0
      %v292 = vmax.f32 %v260, 0.0
      %v293 = vmax.f32 %v261, 0.0
      %v294 = vmax.f32 %v262, 0.0
      %v295 = vmax.f32 %v263, 0.0
      %v296 = vmax.f32 %v264, 0.0
      %v297 = vmax.f32 %v265, 0.0
      %v298 = vmax.f32 %v266, 0.0
      %v299 = vmax.f32 %v267, 0.0
      %v300 = vmax.f32 %v268, 0.0
      %v301 = vmax.f32 %v269, 0.0
      %v302 = vmax.f32 %v270, 0.0
      %v303 = vmax.f32 %v271, 0.0
      %v304 = vmax.f32 %v272, 0.0
      %v305 = vmax.f32 %v273, 0.0
      %v306 = vmax.f32 %v274, 0.0
      %307 = vst [vmem:[%s170] sm:$0xff] %v275
      %308 = vst [vmem:[%s170 + $0x8] sm:$0xff] %v276
      %309 = vst [vmem:[%s170 + $0x10] sm:$0xff] %v277
      %310 = vst [vmem:[%s170 + $0x18] sm:$0xff] %v278
      %311 = vst [vmem:[%s170 + $0x20] sm:$0xff] %v279
      %312 = vst [vmem:[%s170 + $0x28] sm:$0xff] %v280
      %313 = vst [vmem:[%s170 + $0x30] sm:$0xff] %v281
      %314 = vst [vmem:[%s170 + $0x38] sm:$0xff] %v282
      %315 = vst [vmem:[%s170 + $0x40] sm:$0xff] %v283
      %316 = vst [vmem:[%s170 + $0x48] sm:$0xff] %v284
      %317 = vst [vmem:[%s170 + $0x50] sm:$0xff] %v285
      %318 = vst [vmem:[%s170 + $0x58] sm:$0xff] %v286
      %319 = vst [vmem:[%s170 + $0x60] sm:$0xff] %v287
      %320 = vst [vmem:[%s170 + $0x68] sm:$0xff] %v288
      %321 = vst [vmem:[%s170 + $0x70] sm:$0xff] %v289
      %322 = vst [vmem:[%s170 + $0x78] sm:$0xff] %v290
      %323 = vst [vmem:[%s170 + $0x80] sm:$0xff] %v291
      %324 = vst [vmem:[%s170 + $0x88] sm:$0xff] %v292
      %325 = vst [vmem:[%s170 + $0x90] sm:$0xff] %v293
      %326 = vst [vmem:[%s170 + $0x98] sm:$0xff] %v294
      %327 = vst [vmem:[%s170 + $0xa0] sm:$0xff] %v295
      %328 = vst [vmem:[%s170 + $0xa8] sm:$0xff] %v296
      %329 = vst [vmem:[%s170 + $0xb0] sm:$0xff] %v297
      %330 = vst [vmem:[%s170 + $0xb8] sm:$0xff] %v298
      %331 = vst [vmem:[%s170 + $0xc0] sm:$0xff] %v299
      %332 = vst [vmem:[%s170 + $0xc8] sm:$0xff] %v300
      %333 = vst [vmem:[%s170 + $0xd0] sm:$0xff] %v301
      %334 = vst [vmem:[%s170 + $0xd8] sm:$0xff] %v302
      %335 = vst [vmem:[%s170 + $0xe0] sm:$0xff] %v303
      %336 = vst [vmem:[%s170 + $0xe8] sm:$0xff] %v304
      %337 = vst [vmem:[%s170 + $0xf0] sm:$0xff] %v305
      %338 = vst [vmem:[%s170 + $0xf8] sm:$0xff] %v306
      %p339 = scmp.lt.s32.totalorder %s14, 1
      %s340 = scalar_select %p339, %s14, 1
      %s341 = smul.addr %s340, 32
      %s342 = smul.addr %s341, 8
      %s343 = scalar_lea.vmem %s3, %s342
      // Predicated region
      $region33: #{double_conv.5} parent=31 // pred_check
        %p344 = pneg %p100
      $region34: #{double_conv.5} parent=31 // pred_check_branch
        %346 = sbr.rel (%p344) target = $region36
      $region35: #{double_conv.5} parent=31 // pred_region
        _
      $region36: #{double_conv.5} parent=31 // pred_fallthru
        _
    $region32: #{double_conv.5} parent=5 // pred_fallthru
      _
    %p347 = scmp.le.s32.totalorder 2, %s9
    // Predicated region
    $region37: #{double_conv.5} parent=5 // pred_check
      %p348 = pneg %p347
    $region38: #{double_conv.5} parent=5 // pred_check_branch
      %350 = sbr.rel (%p348) target = $region40
    $region39: #{double_conv.5} parent=5 // pred_region
      %s351 = ssub.s32 %s9, 2
      // Predicated region
      $region41: #{double_conv.5} parent=39 // pred_check
        %p352 = pneg %p106
      $region42: #{double_conv.5} parent=39 // pred_check_branch
        %354 = sbr.rel (%p352) target = $region44
      $region43: #{double_conv.5} parent=39 // pred_region
        %p355 = scmp.lt.s32.totalorder %s15, 1
        %s356 = scalar_select %p355, %s15, 1
        %s357 = smul.addr %s356, 32
        %s358 = smul.addr %s357, 8
        %s359 = scalar_lea.vmem %s3, %s358
      $region44: #{double_conv.5} parent=39 // pred_fallthru
        _
    $region40: #{double_conv.5} parent=5 // pred_fallthru
      _
  $region6: #{double_conv.5} parent=0 // loop_footer
    %s13 = sadd.s32 1, %s9
  $region7: #{double_conv.5} parent=0 // loop_footer_branch
    %8 = sbr.rel target = $region3
  $region8: #{double_conv.5} parent=0 // loop_exit
    _

// kernel: double_conv.3
$region0: #{double_conv.3}
  #allocation0 [shape = 'u32[]', space=smem, size = 0x4, offset = 0x4, fixed_abs, tag = 'smem constant byte address 0x4 - core index']
  #allocation1 [shape = 'u32[72,128]{1,0:T(1,128)}', space=vmem, size = 0x9000, scoped, tag = 'internal scratch']
  #allocation2 [shape = 'f32[18,18,8]{2,1,0:T(8,128)}', space=vmem, size = 0x36000, scoped, tag = 'scratch operand']
  %s0 = inlined_call_operand.vmem [shape: f32[2,16,16,8], index: 0, kind: input, shape index: {}]
  %s1 = inlined_call_operand.vmem [shape: f32[1,8], index: 1, kind: input, shape index: {}]
  %s2 = inlined_call_operand.vmem [shape: f32[1,8], index: 2, kind: input, shape index: {}]
  %s3 = inlined_call_operand.vmem [shape: bf16[72,128], index: 3, kind: input, shape index: {}]
  %s4 = inlined_call_operand.vmem [shape: f32[2,16,16,128], index: 4, kind: output, shape index: {0}]
  %s5 = inlined_call_operand.vmem [shape: f32[2,1,128], index: 5, kind: output, shape index: {1}]
  %s6 = inlined_call_operand.vmem [shape: f32[2,1,128], index: 6, kind: output, shape index: {2}]
  %7 = xla_tuple %s4, %s5, %s6
  %s8 = sld [smem:[#allocation0]]
  $region65: #{double_conv.3} parent=0
    _
  %s10 = ssub.s32 1, %s8
  %s11 = scalar_select 0, %s10, %s8
  loop: start=0, step=1, limit=4
  $region2: #{double_conv.3} parent=0 // loop_pre_header
    _
  $region3: #{double_conv.3} parent=0 // loop_header
    %s13 = sphi 0, %s17
    %p14 = scmp.ge.s32.totalorder %s13, 4
    %s23 = sphi 0, %s25
    %s26 = sphi 0, %s23
    %s27 = sphi 0, %s26
    %s43 = sphi 0, %s27
    %s47 = sphi 0, %s47
    %s49 = sphi 0, %s47
    %s50 = sphi 0, %s49
    %s64 = sphi 0, %s50
    %s68 = sphi 0, %s68
    %s70 = sphi 0, %s68
    %s71 = sphi 0, %s70
    %s85 = sphi 0, %s71
    %s89 = sphi 0, %s89
    %s91 = sphi 0, %s89
    %s92 = sphi 0, %s91
    %s106 = sphi 0, %s92
    %s112 = sphi 0, %s114
    %s115 = sphi 0, %s112
    %s116 = sphi 0, %s115
    %s132 = sphi 0, %s116
    %s138 = sphi 0, %s140
    %s141 = sphi 0, %s138
    %s142 = sphi 0, %s141
    %s158 = sphi 0, %s142
    %s164 = sphi 0, %s166
    %s167 = sphi 0, %s164
    %s168 = sphi 0, %s167
    %s184 = sphi 0, %s168
  $region4: #{double_conv.3} parent=0 // loop_header_branch
    %16 = sbr.rel (%p14) target = $region8
  $region5: #{double_conv.3} parent=0 // loop_body
    %s18 = ssub.s32 %s13, 1
    %s19 = ssub.s32 %s13, 2
    %s20 = sadd.s32 %s13, 1
    %s21 = ssub.s32 %s13, %s20
    %p22 = scmp.eq.s32.totalorder %s21, 0
    %s24 = sadd.s32 %s23, 1
    %s25 = scalar_select %p22, %s23, %s24
    %p28 = pneg %p22
    %p29 = scmp.eq.s32.totalorder %s13, 1
    %p30 = por %p28, %p29
    %p31 = scmp.ne.s32.totalorder %s23, %s26
    %p32 = scmp.eq.s32.totalorder %s13, 0
    %p33 = por %p31, %p32
    %p34 = scmp.ne.s32.totalorder %s23, %s26
    %p35 = scmp.eq.s32.totalorder %s18, 1
    %p36 = por %p34, %p35
    %p37 = scmp.ne.s32.totalorder %s26, %s27
    %p38 = scmp.eq.s32.totalorder %s18, 0
    %p39 = por %p37, %p38
    %p40 = scmp.ne.s32.totalorder %s26, %s27
    %p41 = scmp.eq.s32.totalorder %s19, 1
    %p42 = por %p40, %p41
    %p44 = scmp.ne.s32.totalorder %s27, %s43
    %p45 = scmp.eq.s32.totalorder %s19, 0
    %p46 = por %p44, %p45
    %s48 = sadd.s32 %s47, 1
    %p51 = scmp.eq.s32.totalorder %s13, 1
    %p52 = scmp.ne.s32.totalorder %s47, %s49
    %p53 = scmp.eq.s32.totalorder %s13, 0
    %p54 = por %p52, %p53
    %p55 = scmp.ne.s32.totalorder %s47, %s49
    %p56 = scmp.eq.s32.totalorder %s18, 1
    %p57 = por %p55, %p56
    %p58 = scmp.ne.s32.totalorder %s49, %s50
    %p59 = scmp.eq.s32.totalorder %s18, 0
    %p60 = por %p58, %p59
    %p61 = scmp.ne.s32.totalorder %s49, %s50
    %p62 = scmp.eq.s32.totalorder %s19, 1
    %p63 = por %p61, %p62
    %p65 = scmp.ne.s32.totalorder %s50, %s64
    %p66 = scmp.eq.s32.totalorder %s19, 0
    %p67 = por %p65, %p66
    %s69 = sadd.s32 %s68, 1
    %p72 = scmp.eq.s32.totalorder %s13, 1
    %p73 = scmp.ne.s32.totalorder %s68, %s70
    %p74 = scmp.eq.s32.totalorder %s13, 0
    %p75 = por %p73, %p74
    %p76 = scmp.ne.s32.totalorder %s68, %s70
    %p77 = scmp.eq.s32.totalorder %s18, 1
    %p78 = por %p76, %p77
    %p79 = scmp.ne.s32.totalorder %s70, %s71
    %p80 = scmp.eq.s32.totalorder %s18, 0
    %p81 = por %p79, %p80
    %p82 = scmp.ne.s32.totalorder %s70, %s71
    %p83 = scmp.eq.s32.totalorder %s19, 1
    %p84 = por %p82, %p83
    %p86 = scmp.ne.s32.totalorder %s71, %s85
    %p87 = scmp.eq.s32.totalorder %s19, 0
    %p88 = por %p86, %p87
    %s90 = sadd.s32 %s89, 1
    %p93 = scmp.eq.s32.totalorder %s13, 1
    %p94 = scmp.ne.s32.totalorder %s89, %s91
    %p95 = scmp.eq.s32.totalorder %s13, 0
    %p96 = por %p94, %p95
    %p97 = scmp.ne.s32.totalorder %s89, %s91
    %p98 = scmp.eq.s32.totalorder %s18, 1
    %p99 = por %p97, %p98
    %p100 = scmp.ne.s32.totalorder %s91, %s92
    %p101 = scmp.eq.s32.totalorder %s18, 0
    %p102 = por %p100, %p101
    %p103 = scmp.ne.s32.totalorder %s91, %s92
    %p104 = scmp.eq.s32.totalorder %s19, 1
    %p105 = por %p103, %p104
    %p107 = scmp.ne.s32.totalorder %s92, %s106
    %p108 = scmp.eq.s32.totalorder %s19, 0
    %p109 = por %p107, %p108
    %s110 = ssub.s32 %s13, %s20
    %p111 = scmp.eq.s32.totalorder %s110, 0
    %s113 = sadd.s32 %s112, 1
    %s114 = scalar_select %p111, %s112, %s113
    %p117 = pneg %p111
    %p118 = scmp.eq.s32.totalorder %s13, 1
    %p119 = por %p117, %p118
    %p120 = scmp.ne.s32.totalorder %s112, %s115
    %p121 = scmp.eq.s32.totalorder %s13, 0
    %p122 = por %p120, %p121
    %p123 = scmp.ne.s32.totalorder %s112, %s115
    %p124 = scmp.eq.s32.totalorder %s18, 1
    %p125 = por %p123, %p124
    %p126 = scmp.ne.s32.totalorder %s115, %s116
    %p127 = scmp.eq.s32.totalorder %s18, 0
    %p128 = por %p126, %p127
    %p129 = scmp.ne.s32.totalorder %s115, %s116
    %p130 = scmp.eq.s32.totalorder %s19, 1
    %p131 = por %p129, %p130
    %p133 = scmp.ne.s32.totalorder %s116, %s132
    %p134 = scmp.eq.s32.totalorder %s19, 0
    %p135 = por %p133, %p134
    %s136 = ssub.s32 %s13, %s20
    %p137 = scmp.eq.s32.totalorder %s136, 0
    %s139 = sadd.s32 %s138, 1
    %s140 = scalar_select %p137, %s138, %s139
    %p143 = pneg %p137
    %p144 = scmp.eq.s32.totalorder %s13, 1
    %p145 = por %p143, %p144
    %p146 = scmp.ne.s32.totalorder %s138, %s141
    %p147 = scmp.eq.s32.totalorder %s13, 0
    %p148 = por %p146, %p147
    %p149 = scmp.ne.s32.totalorder %s138, %s141
    %p150 = scmp.eq.s32.totalorder %s18, 1
    %p151 = por %p149, %p150
    %p152 = scmp.ne.s32.totalorder %s141, %s142
    %p153 = scmp.eq.s32.totalorder %s18, 0
    %p154 = por %p152, %p153
    %p155 = scmp.ne.s32.totalorder %s141, %s142
    %p156 = scmp.eq.s32.totalorder %s19, 1
    %p157 = por %p155, %p156
    %p159 = scmp.ne.s32.totalorder %s142, %s158
    %p160 = scmp.eq.s32.totalorder %s19, 0
    %p161 = por %p159, %p160
    %s162 = ssub.s32 %s13, %s20
    %p163 = scmp.eq.s32.totalorder %s162, 0
    %s165 = sadd.s32 %s164, 1
    %s166 = scalar_select %p163, %s164, %s165
    %p169 = pneg %p163
    %p170 = scmp.eq.s32.totalorder %s13, 1
    %p171 = por %p169, %p170
    %p172 = scmp.ne.s32.totalorder %s164, %s167
    %p173 = scmp.eq.s32.totalorder %s13, 0
    %p174 = por %p172, %p173
    %p175 = scmp.ne.s32.totalorder %s164, %s167
    %p176 = scmp.eq.s32.totalorder %s18, 1
    %p177 = por %p175, %p176
    %p178 = scmp.ne.s32.totalorder %s167, %s168
    %p179 = scmp.eq.s32.totalorder %s18, 0
    %p180 = por %p178, %p179
    %p181 = scmp.ne.s32.totalorder %s167, %s168
    %p182 = scmp.eq.s32.totalorder %s19, 1
    %p183 = por %p181, %p182
    %p185 = scmp.ne.s32.totalorder %s168, %s184
    %p186 = scmp.eq.s32.totalorder %s19, 0
    %p187 = por %p185, %p186
    %p188 = scmp.le.s32.totalorder 1, %s13
    %p189 = scmp.lt.s32.totalorder %s13, 3
    %p190 = pnand %p188, %p189
    %p191 = pneg %p190
    // Predicated region
    $region9: #{double_conv.3} parent=5 // pred_check
      _
    $region10: #{double_conv.3} parent=5 // pred_check_branch
      %193 = sbr.rel (%p190) target = $region12
    $region11: #{double_conv.3} parent=5 // pred_region
      %s194 = ssub.s32 %s13, 1
      // Predicated region
      $region13: #{double_conv.3} parent=11 // pred_check
        %p195 = pneg %p60
      $region14: #{double_conv.3} parent=11 // pred_check_branch
        %197 = sbr.rel (%p195) target = $region16
      $region15: #{double_conv.3} parent=11 // pred_region
        _
      $region16: #{double_conv.3} parent=11 // pred_fallthru
        _
      // Predicated region
      $region17: #{double_conv.3} parent=11 // pred_check
        %p198 = pneg %p81
      $region18: #{double_conv.3} parent=11 // pred_check_branch
        %200 = sbr.rel (%p198) target = $region20
      $region19: #{double_conv.3} parent=11 // pred_region
        _
      $region20: #{double_conv.3} parent=11 // pred_fallthru
        _
      // Predicated region
      $region21: #{double_conv.3} parent=11 // pred_check
        %p201 = pneg %p102
      $region22: #{double_conv.3} parent=11 // pred_check_branch
        %203 = sbr.rel (%p201) target = $region24
      $region23: #{double_conv.3} parent=11 // pred_region
        _
      $region24: #{double_conv.3} parent=11 // pred_fallthru
        _
    $region12: #{double_conv.3} parent=5 // pred_fallthru
      _
    %p204 = scmp.lt.s32.totalorder %s13, 2
    // Predicated region
    $region25: #{double_conv.3} parent=5 // pred_check
      %p205 = pneg %p204
    $region26: #{double_conv.3} parent=5 // pred_check_branch
      %207 = sbr.rel (%p205) target = $region28
    $region27: #{double_conv.3} parent=5 // pred_region
      // Predicated region
      $region29: #{double_conv.3} parent=27 // pred_check
        %p208 = pneg %p33
      $region30: #{double_conv.3} parent=27 // pred_check_branch
        %210 = sbr.rel (%p208) target = $region32
      $region31: #{double_conv.3} parent=27 // pred_region
        %p211 = scmp.lt.s32.totalorder %s13, 1
        %s212 = scalar_select %p211, %s13, 1
        %s213 = smul.addr %s212, 32
        %s214 = smul.addr %s213, 8
        %s215 = scalar_lea.vmem %s0, %s214
      $region32: #{double_conv.3} parent=27 // pred_fallthru
        _
    $region28: #{double_conv.3} parent=5 // pred_fallthru
      _
    %p216 = scmp.le.s32.totalorder 1, %s13
    %p217 = scmp.lt.s32.totalorder %s13, 3
    %p218 = pnand %p216, %p217
    %p219 = pneg %p218
    // Predicated region
    $region33: #{double_conv.3} parent=5 // pred_check
      _
    $region34: #{double_conv.3} parent=5 // pred_check_branch
      %221 = sbr.rel (%p218) target = $region36
    $region35: #{double_conv.3} parent=5 // pred_region
      %s222 = ssub.s32 %s13, 1
      %p223 = scmp.lt.s32.totalorder %s18, 1
      %s224 = scalar_select %p223, %s18, 1
      %s225 = smul.addr %s224, 32
      %s226 = smul.addr %s225, 8
      %s227 = scalar_lea.vmem %s0, %s226
      %p228 = pneg %p39
      %p229 = pneg %p36
      %p230 = pneg %p60
      %p231 = pneg %p57
      %p232 = pneg %p81
      %p233 = pneg %p78
      %p234 = pneg %p102
      %p235 = pneg %p99
      %p236 = pneg %p128
      %p237 = pneg %p125
      %p238 = scmp.lt.s32.totalorder %s18, 1
      %s239 = scalar_select %p238, %s18, 1
      %s240 = smul.addr %s239, 32
      %s241 = smul.addr %s240, 8
      %s242 = scalar_lea.vmem %s4, %s241
      %p243 = pneg %p154
      %p244 = pneg %p151
      %p245 = scmp.lt.s32.totalorder %s18, 1
      %s246 = scalar_select %p245, %s18, 1
      %s247 = scalar_lea.vmem %s5, %s246
      %p248 = pneg %p180
      %p249 = pneg %p177
      %p250 = scmp.lt.s32.totalorder %s18, 1
      %s251 = scalar_select %p250, %s18, 1
      %s252 = scalar_lea.vmem %s6, %s251
      %p253 = scmp.lt.s32.totalorder %s18, 1
      %s254 = scalar_select %p253, %s18, 1
      %s255 = smul.addr %s254, 32
      %s256 = smul.addr %s255, 8
      %s257 = scalar_lea.vmem %s0, %s256
      %p258 = scmp.lt.s32.totalorder %s18, 1
      %s259 = scalar_select %p258, %s18, 1
      %s260 = smul.addr %s259, 32
      %s261 = smul.addr %s260, 8
      %s262 = scalar_lea.vmem %s4, %s261
      %p263 = scmp.lt.s32.totalorder %s18, 1
      %s264 = scalar_select %p263, %s18, 1
      %s265 = scalar_lea.vmem %s5, %s264
      %p266 = scmp.lt.s32.totalorder %s18, 1
      %s267 = scalar_select %p266, %s18, 1
      %s268 = scalar_lea.vmem %s6, %s267
      %v270 = vld [vmem:[%s257] sm:$0xff]
      %v271 = vld [vmem:[%s257 + $0x8] sm:$0xff]
      %v272 = vld [vmem:[%s257 + $0x10] sm:$0xff]
      %v273 = vld [vmem:[%s257 + $0x18] sm:$0xff]
      %v274 = vld [vmem:[%s257 + $0x20] sm:$0xff]
      %v275 = vld [vmem:[%s257 + $0x28] sm:$0xff]
      %v276 = vld [vmem:[%s257 + $0x30] sm:$0xff]
      %v277 = vld [vmem:[%s257 + $0x38] sm:$0xff]
      %v278 = vld [vmem:[%s257 + $0x40] sm:$0xff]
      %v279 = vld [vmem:[%s257 + $0x48] sm:$0xff]
      %v280 = vld [vmem:[%s257 + $0x50] sm:$0xff]
      %v281 = vld [vmem:[%s257 + $0x58] sm:$0xff]
      %v282 = vld [vmem:[%s257 + $0x60] sm:$0xff]
      %v283 = vld [vmem:[%s257 + $0x68] sm:$0xff]
      %v284 = vld [vmem:[%s257 + $0x70] sm:$0xff]
      %v285 = vld [vmem:[%s257 + $0x78] sm:$0xff]
      %v286 = vld [vmem:[%s257 + $0x80] sm:$0xff]
      %v287 = vld [vmem:[%s257 + $0x88] sm:$0xff]
      %v288 = vld [vmem:[%s257 + $0x90] sm:$0xff]
      %v289 = vld [vmem:[%s257 + $0x98] sm:$0xff]
      %v290 = vld [vmem:[%s257 + $0xa0] sm:$0xff]
      %v291 = vld [vmem:[%s257 + $0xa8] sm:$0xff]
      %v292 = vld [vmem:[%s257 + $0xb0] sm:$0xff]
      %v293 = vld [vmem:[%s257 + $0xb8] sm:$0xff]
      %v294 = vld [vmem:[%s257 + $0xc0] sm:$0xff]
      %v295 = vld [vmem:[%s257 + $0xc8] sm:$0xff]
      %v296 = vld [vmem:[%s257 + $0xd0] sm:$0xff]
      %v297 = vld [vmem:[%s257 + $0xd8] sm:$0xff]
      %v298 = vld [vmem:[%s257 + $0xe0] sm:$0xff]
      %v299 = vld [vmem:[%s257 + $0xe8] sm:$0xff]
      %v300 = vld [vmem:[%s257 + $0xf0] sm:$0xff]
      %v301 = vld [vmem:[%s257 + $0xf8] sm:$0xff]
      %vm302 = vcmask 64512
      %303 = vst.msk [vmem:[#allocation2] sm:$0xff] %vm302, 0.0
      %304 = vst.msk [vmem:[#allocation2 + $0x8] sm:$0xff] %vm302, 0.0
      %vm305 = vcmask 58368
      %306 = vst.msk [vmem:[#allocation2 + $0x10] sm:$0x3] %vm305, 0.0
      %307 = vst.msk [vmem:[#allocation2 + $0x18] sm:$0xff] %vm302, 0.0
      %308 = vst.msk [vmem:[#allocation2 + $0x20] sm:$0xff] %vm302, 0.0
      %309 = vst.msk [vmem:[#allocation2 + $0x28] sm:$0x3] %vm305, 0.0
      %310 = vst.msk [vmem:[#allocation2 + $0x30] sm:$0xff] %vm302, 0.0
      %311 = vst.msk [vmem:[#allocation2 + $0x38] sm:$0xff] %vm302, 0.0
      %312 = vst.msk [vmem:[#allocation2 + $0x40] sm:$0x3] %vm305, 0.0
      %313 = vst.msk [vmem:[#allocation2 + $0x48] sm:$0xff] %vm302, 0.0
      %314 = vst.msk [vmem:[#allocation2 + $0x50] sm:$0xff] %vm302, 0.0
      %315 = vst.msk [vmem:[#allocation2 + $0x58] sm:$0x3] %vm305, 0.0
      %316 = vst.msk [vmem:[#allocation2 + $0x60] sm:$0xff] %vm302, 0.0
      %317 = vst.msk [vmem:[#allocation2 + $0x68] sm:$0xff] %vm302, 0.0
      %318 = vst.msk [vmem:[#allocation2 + $0x70] sm:$0x3] %vm305, 0.0
      %319 = vst.msk [vmem:[#allocation2 + $0x78] sm:$0xff] %vm302, 0.0
      %320 = vst.msk [vmem:[#allocation2 + $0x80] sm:$0xff] %vm302, 0.0
      %321 = vst.msk [vmem:[#allocation2 + $0x88] sm:$0x3] %vm305, 0.0
      %322 = vst.msk [vmem:[#allocation2 + $0x90] sm:$0xff] %vm302, 0.0
      %323 = vst.msk [vmem:[#allocation2 + $0x98] sm:$0xff] %vm302, 0.0
      %324 = vst.msk [vmem:[#allocation2 + $0xa0] sm:$0x3] %vm305, 0.0
      %325 = vst.msk [vmem:[#allocation2 + $0xa8] sm:$0xff] %vm302, 0.0
      %326 = vst.msk [vmem:[#allocation2 + $0xb0] sm:$0xff] %vm302, 0.0
      %327 = vst.msk [vmem:[#allocation2 + $0xb8] sm:$0x3] %vm305, 0.0
      %328 = vst.msk [vmem:[#allocation2 + $0xc0] sm:$0xff] %vm302, 0.0
      %329 = vst.msk [vmem:[#allocation2 + $0xc8] sm:$0xff] %vm302, 0.0
      %330 = vst.msk [vmem:[#allocation2 + $0xd0] sm:$0x3] %vm305, 0.0
      %331 = vst.msk [vmem:[#allocation2 + $0xd8] sm:$0xff] %vm302, 0.0
      %332 = vst.msk [vmem:[#allocation2 + $0xe0] sm:$0xff] %vm302, 0.0
      %333 = vst.msk [vmem:[#allocation2 + $0xe8] sm:$0x3] %vm305, 0.0
      %334 = vst.msk [vmem:[#allocation2 + $0xf0] sm:$0xff] %vm302, 0.0
      %335 = vst.msk [vmem:[#allocation2 + $0xf8] sm:$0xff] %vm302, 0.0
      %336 = vst.msk [vmem:[#allocation2 + $0x100] sm:$0x3] %vm305, 0.0
      %337 = vst.msk [vmem:[#allocation2 + $0x108] sm:$0xff] %vm302, 0.0
      %338 = vst.msk [vmem:[#allocation2 + $0x110] sm:$0xff] %vm302, 0.0
      %339 = vst.msk [vmem:[#allocation2 + $0x118] sm:$0x3] %vm305, 0.0
      %340 = vst.msk [vmem:[#allocation2 + $0x120] sm:$0xff] %vm302, 0.0
      %341 = vst.msk [vmem:[#allocation2 + $0x128] sm:$0xff] %vm302, 0.0
      %342 = vst.msk [vmem:[#allocation2 + $0x130] sm:$0x3] %vm305, 0.0
      %343 = vst.msk [vmem:[#allocation2 + $0x138] sm:$0xff] %vm302, 0.0
      %344 = vst.msk [vmem:[#allocation2 + $0x140] sm:$0xff] %vm302, 0.0
      %345 = vst.msk [vmem:[#allocation2 + $0x148] sm:$0x3] %vm305, 0.0
      %346 = vst.msk [vmem:[#allocation2 + $0x150] sm:$0xff] %vm302, 0.0
      %347 = vst.msk [vmem:[#allocation2 + $0x158] sm:$0xff] %vm302, 0.0
      %348 = vst.msk [vmem:[#allocation2 + $0x160] sm:$0x3] %vm305, 0.0
      %349 = vst.msk [vmem:[#allocation2 + $0x168] sm:$0xff] %vm302, 0.0
      %350 = vst.msk [vmem:[#allocation2 + $0x170] sm:$0xff] %vm302, 0.0
      %351 = vst.msk [vmem:[#allocation2 + $0x178] sm:$0x3] %vm305, 0.0
      %352 = vst.msk [vmem:[#allocation2 + $0x180] sm:$0xff] %vm302, 0.0
      %353 = vst.msk [vmem:[#allocation2 + $0x188] sm:$0xff] %vm302, 0.0
      %354 = vst.msk [vmem:[#allocation2 + $0x190] sm:$0x3] %vm305, 0.0
      %355 = vst.msk [vmem:[#allocation2 + $0x198] sm:$0xff] %vm302, 0.0
      %356 = vst.msk [vmem:[#allocation2 + $0x1a0] sm:$0xff] %vm302, 0.0
      %357 = vst.msk [vmem:[#allocation2 + $0x1a8] sm:$0x3] %vm305, 0.0
      %s358 = scalar_lea.vmem [#allocation2], 24
      %359 = vst.msk [vmem:[%s358 + $0x1] sm:$0xff] %vm302, %v270
      %360 = vst.msk [vmem:[%s358 + $0x9] sm:$0xff] %vm302, %v271
      %361 = vst.msk [vmem:[%s358 + $0x19] sm:$0xff] %vm302, %v272
      %362 = vst.msk [vmem:[%s358 + $0x21] sm:$0xff] %vm302, %v273
      %363 = vst.msk [vmem:[%s358 + $0x31] sm:$0xff] %vm302, %v274
      %364 = vst.msk [vmem:[%s358 + $0x39] sm:$0xff] %vm302, %v275
      %365 = vst.msk [vmem:[%s358 + $0x49] sm:$0xff] %vm302, %v276
      %366 = vst.msk [vmem:[%s358 + $0x51] sm:$0xff] %vm302, %v277
      %367 = vst.msk [vmem:[%s358 + $0x61] sm:$0xff] %vm302, %v278
      %368 = vst.msk [vmem:[%s358 + $0x69] sm:$0xff] %vm302, %v279
      %369 = vst.msk [vmem:[%s358 + $0x79] sm:$0xff] %vm302, %v280
      %370 = vst.msk [vmem:[%s358 + $0x81] sm:$0xff] %vm302, %v281
      %371 = vst.msk [vmem:[%s358 + $0x91] sm:$0xff] %vm302, %v282
      %372 = vst.msk [vmem:[%s358 + $0x99] sm:$0xff] %vm302, %v283
      %373 = vst.msk [vmem:[%s358 + $0xa9] sm:$0xff] %vm302, %v284
      %374 = vst.msk [vmem:[%s358 + $0xb1] sm:$0xff] %vm302, %v285
      %375 = vst.msk [vmem:[%s358 + $0xc1] sm:$0xff] %vm302, %v286
      %376 = vst.msk [vmem:[%s358 + $0xc9] sm:$0xff] %vm302, %v287
      %377 = vst.msk [vmem:[%s358 + $0xd9] sm:$0xff] %vm302, %v288
      %378 = vst.msk [vmem:[%s358 + $0xe1] sm:$0xff] %vm302, %v289
      %379 = vst.msk [vmem:[%s358 + $0xf1] sm:$0xff] %vm302, %v290
      %380 = vst.msk [vmem:[%s358 + $0xf9] sm:$0xff] %vm302, %v291
      %381 = vst.msk [vmem:[%s358 + $0x109] sm:$0xff] %vm302, %v292
      %382 = vst.msk [vmem:[%s358 + $0x111] sm:$0xff] %vm302, %v293
      %383 = vst.msk [vmem:[%s358 + $0x121] sm:$0xff] %vm302, %v294
      %384 = vst.msk [vmem:[%s358 + $0x129] sm:$0xff] %vm302, %v295
      %385 = vst.msk [vmem:[%s358 + $0x139] sm:$0xff] %vm302, %v296
      %386 = vst.msk [vmem:[%s358 + $0x141] sm:$0xff] %vm302, %v297
      %387 = vst.msk [vmem:[%s358 + $0x151] sm:$0xff] %vm302, %v298
      %388 = vst.msk [vmem:[%s358 + $0x159] sm:$0xff] %vm302, %v299
      %389 = vst.msk [vmem:[%s358 + $0x169] sm:$0xff] %vm302, %v300
      %390 = vst.msk [vmem:[%s358 + $0x171] sm:$0xff] %vm302, %v301
      %v391 = vld [vmem:[#allocation2] sm:$0xff]
      %v392 = vld [vmem:[#allocation2 + $0x8] sm:$0xff]
      %v393 = vld [vmem:[#allocation2 + $0x10] sm:$0x3]
      %v394 = vld [vmem:[#allocation2 + $0x18] sm:$0xff]
      %v395 = vld [vmem:[#allocation2 + $0x20] sm:$0xff]
      %v396 = vld [vmem:[#allocation2 + $0x28] sm:$0x3]
      %v397 = vld [vmem:[#allocation2 + $0x30] sm:$0xff]
      %v398 = vld [vmem:[#allocation2 + $0x38] sm:$0xff]
      %v399 = vld [vmem:[#allocation2 + $0x40] sm:$0x3]
      %v400 = vld [vmem:[#allocation2 + $0x48] sm:$0xff]
      %v401 = vld [vmem:[#allocation2 + $0x50] sm:$0xff]
      %v402 = vld [vmem:[#allocation2 + $0x58] sm:$0x3]
      %v403 = vld [vmem:[#allocation2 + $0x60] sm:$0xff]
      %v404 = vld [vmem:[#allocation2 + $0x68] sm:$0xff]
      %v405 = vld [vmem:[#allocation2 + $0x70] sm:$0x3]
      %v406 = vld [vmem:[#allocation2 + $0x78] sm:$0xff]
      %v407 = vld [vmem:[#allocation2 + $0x80] sm:$0xff]
      %v408 = vld [vmem:[#allocation2 + $0x88] sm:$0x3]
      %v409 = vld [vmem:[#allocation2 + $0x90] sm:$0xff]
      %v410 = vld [vmem:[#allocation2 + $0x98] sm:$0xff]
      %v411 = vld [vmem:[#allocation2 + $0xa0] sm:$0x3]
      %v412 = vld [vmem:[#allocation2 + $0xa8] sm:$0xff]
      %v413 = vld [vmem:[#allocation2 + $0xb0] sm:$0xff]
      %v414 = vld [vmem:[#allocation2 + $0xb8] sm:$0x3]
      %v415 = vld [vmem:[#allocation2 + $0xc0] sm:$0xff]
      %v416 = vld [vmem:[#allocation2 + $0xc8] sm:$0xff]
      %v417 = vld [vmem:[#allocation2 + $0xd0] sm:$0x3]
      %v418 = vld [vmem:[#allocation2 + $0xd8] sm:$0xff]
      %v419 = vld [vmem:[#allocation2 + $0xe0] sm:$0xff]
      %v420 = vld [vmem:[#allocation2 + $0xe8] sm:$0x3]
      %v421 = vld [vmem:[#allocation2 + $0xf0] sm:$0xff]
      %v422 = vld [vmem:[#allocation2 + $0xf8] sm:$0xff]
      %v423 = vld [vmem:[#allocation2 + $0x100] sm:$0x3]
      %v424 = vld [vmem:[#allocation2 + $0x108] sm:$0xff]
      %v425 = vld [vmem:[#allocation2 + $0x110] sm:$0xff]
      %v426 = vld [vmem:[#allocation2 + $0x118] sm:$0x3]
      %v427 = vld [vmem:[#allocation2 + $0x120] sm:$0xff]
      %v428 = vld [vmem:[#allocation2 + $0x128] sm:$0xff]
      %v429 = vld [vmem:[#allocation2 + $0x130] sm:$0x3]
      %v430 = vld [vmem:[#allocation2 + $0x138] sm:$0xff]
      %v431 = vld [vmem:[#allocation2 + $0x140] sm:$0xff]
      %v432 = vld [vmem:[#allocation2 + $0x148] sm:$0x3]
      %v433 = vld [vmem:[#allocation2 + $0x150] sm:$0xff]
      %v434 = vld [vmem:[#allocation2 + $0x158] sm:$0xff]
      %v435 = vld [vmem:[#allocation2 + $0x160] sm:$0x3]
      %v436 = vld [vmem:[#allocation2 + $0x168] sm:$0xff]
      %v437 = vld [vmem:[#allocation2 + $0x170] sm:$0xff]
      %v438 = vld [vmem:[#allocation2 + $0x178] sm:$0x3]
      %v439 = vld [vmem:[#allocation2 + $0x180] sm:$0xff]
      %v440 = vld [vmem:[#allocation2 + $0x188] sm:$0xff]
      %v441 = vld [vmem:[#allocation2 + $0x190] sm:$0x3]
      %v442 = vld [vmem:[#allocation2 + $0x198] sm:$0xff]
      %v443 = vld [vmem:[#allocation2 + $0x1a0] sm:$0xff]
      %v444 = vld [vmem:[#allocation2 + $0x1a8] sm:$0x3]
      %v445 = vpack.c.bf16 %v391, %v391
      %v446 = vpack.c.bf16 %v392, %v392
      %v447 = vpack.c.bf16 %v393, %v393
      %v448 = vpack.c.bf16 %v394, %v394
      %v449 = vpack.c.bf16 %v395, %v395
      %v450 = vpack.c.bf16 %v396, %v396
      %v451 = vpack.c.bf16 %v397, %v397
      %v452 = vpack.c.bf16 %v398, %v398
      %v453 = vpack.c.bf16 %v399, %v399
      %v454 = vpack.c.bf16 %v400, %v400
      %v455 = vpack.c.bf16 %v401, %v401
      %v456 = vpack.c.bf16 %v402, %v402
      %v457 = vpack.c.bf16 %v403, %v403
      %v458 = vpack.c.bf16 %v404, %v404
      %v459 = vpack.c.bf16 %v405, %v405
      %v460 = vpack.c.bf16 %v406, %v406
      %v461 = vpack.c.bf16 %v407, %v407
      %v462 = vpack.c.bf16 %v408, %v408
      %v463 = vpack.c.bf16 %v409, %v409
      %v464 = vpack.c.bf16 %v410, %v410
      %v465 = vpack.c.bf16 %v411, %v411
      %v466 = vpack.c.bf16 %v412, %v412
      %v467 = vpack.c.bf16 %v413, %v413
      %v468 = vpack.c.bf16 %v414, %v414
      %v469 = vpack.c.bf16 %v415, %v415
      %v470 = vpack.c.bf16 %v416, %v416
      %v471 = vpack.c.bf16 %v417, %v417
      %v472 = vpack.c.bf16 %v418, %v418
      %v473 = vpack.c.bf16 %v419, %v419
      %v474 = vpack.c.bf16 %v420, %v420
      %v475 = vpack.c.bf16 %v421, %v421
      %v476 = vpack.c.bf16 %v422, %v422
      %v477 = vpack.c.bf16 %v423, %v423
      %v478 = vpack.c.bf16 %v424, %v424
      %v479 = vpack.c.bf16 %v425, %v425
      %v480 = vpack.c.bf16 %v426, %v426
      %v481 = vpack.c.bf16 %v427, %v427
      %v482 = vpack.c.bf16 %v428, %v428
      %v483 = vpack.c.bf16 %v429, %v429
      %v484 = vpack.c.bf16 %v430, %v430
      %v485 = vpack.c.bf16 %v431, %v431
      %v486 = vpack.c.bf16 %v432, %v432
      %v487 = vpack.c.bf16 %v433, %v433
      %v488 = vpack.c.bf16 %v434, %v434
      %v489 = vpack.c.bf16 %v435, %v435
      %v490 = vpack.c.bf16 %v436, %v436
      %v491 = vpack.c.bf16 %v437, %v437
      %v492 = vpack.c.bf16 %v438, %v438
      %v493 = vpack.c.bf16 %v439, %v439
      %v494 = vpack.c.bf16 %v440, %v440
      %v495 = vpack.c.bf16 %v441, %v441
      %v496 = vpack.c.bf16 %v442, %v442
      %v497 = vpack.c.bf16 %v443, %v443
      %v498 = vpack.c.bf16 %v444, %v444
      %v531 = vunpack.c.l.b16 %v445
      %v532 = vunpack.c.l.b16 %v446
      %v533 = vunpack.c.l.b16 %v448
      %v534 = vunpack.c.l.b16 %v449
      %v535 = vunpack.c.l.b16 %v451
      %v536 = vunpack.c.l.b16 %v452
      %v537 = vunpack.c.l.b16 %v454
      %v538 = vunpack.c.l.b16 %v455
      %v539 = vunpack.c.l.b16 %v457
      %v540 = vunpack.c.l.b16 %v458
      %v541 = vunpack.c.l.b16 %v460
      %v542 = vunpack.c.l.b16 %v461
      %v543 = vunpack.c.l.b16 %v463
      %v544 = vunpack.c.l.b16 %v464
      %v545 = vunpack.c.l.b16 %v466
      %v546 = vunpack.c.l.b16 %v467
      %v547 = vunpack.c.l.b16 %v469
      %v548 = vunpack.c.l.b16 %v470
      %v549 = vunpack.c.l.b16 %v472
      %v550 = vunpack.c.l.b16 %v473
      %v551 = vunpack.c.l.b16 %v475
      %v552 = vunpack.c.l.b16 %v476
      %v553 = vunpack.c.l.b16 %v478
      %v554 = vunpack.c.l.b16 %v479
      %v555 = vunpack.c.l.b16 %v481
      %v556 = vunpack.c.l.b16 %v482
      %v557 = vunpack.c.l.b16 %v484
      %v558 = vunpack.c.l.b16 %v485
      %v559 = vunpack.c.l.b16 %v487
      %v560 = vunpack.c.l.b16 %v488
      %v561 = vunpack.c.l.b16 %v490
      %v562 = vunpack.c.l.b16 %v491
      %v563 = vpack.c.b16 %v532, %v531
      %v564 = vpack.c.b16 %v534, %v533
      %v565 = vpack.c.b16 %v536, %v535
      %v566 = vpack.c.b16 %v538, %v537
      %v567 = vpack.c.b16 %v540, %v539
      %v568 = vpack.c.b16 %v542, %v541
      %v569 = vpack.c.b16 %v544, %v543
      %v570 = vpack.c.b16 %v546, %v545
      %v571 = vpack.c.b16 %v548, %v547
      %v572 = vpack.c.b16 %v550, %v549
      %v573 = vpack.c.b16 %v552, %v551
      %v574 = vpack.c.b16 %v554, %v553
      %v575 = vpack.c.b16 %v556, %v555
      %v576 = vpack.c.b16 %v558, %v557
      %v577 = vpack.c.b16 %v560, %v559
      %v578 = vpack.c.b16 %v562, %v561
      %v595 = vunpack.c.l.b16 %v447
      %v596 = vunpack.c.l.b16 %v450
      %v597 = vunpack.c.l.b16 %v453
      %v598 = vunpack.c.l.b16 %v456
      %v599 = vunpack.c.l.b16 %v459
      %v600 = vunpack.c.l.b16 %v462
      %v601 = vunpack.c.l.b16 %v465
      %v602 = vunpack.c.l.b16 %v468
      %v603 = vunpack.c.l.b16 %v471
      %v604 = vunpack.c.l.b16 %v474
      %v605 = vunpack.c.l.b16 %v477
      %v606 = vunpack.c.l.b16 %v480
      %v607 = vunpack.c.l.b16 %v483
      %v608 = vunpack.c.l.b16 %v486
      %v609 = vunpack.c.l.b16 %v489
      %v610 = vunpack.c.l.b16 %v492
      %v611 = vpack.c.b16 %v595, %v595
      %v612 = vpack.c.b16 %v596, %v596
      %v613 = vpack.c.b16 %v597, %v597
      %v614 = vpack.c.b16 %v598, %v598
      %v615 = vpack.c.b16 %v599, %v599
      %v616 = vpack.c.b16 %v600, %v600
      %v617 = vpack.c.b16 %v601, %v601
      %v618 = vpack.c.b16 %v602, %v602
      %v619 = vpack.c.b16 %v603, %v603
      %v620 = vpack.c.b16 %v604, %v604
      %v621 = vpack.c.b16 %v605, %v605
      %v622 = vpack.c.b16 %v606, %v606
      %v623 = vpack.c.b16 %v607, %v607
      %v624 = vpack.c.b16 %v608, %v608
      %v625 = vpack.c.b16 %v609, %v609
      %v626 = vpack.c.b16 %v610, %v610
      %vm627 = vsmask.f32 7424
      %v629 = vshrl.u32 %v563, 16
      %v631 = vshll.u32 %v563, 16
      %v633 = vrot.slane %v631, 1
      %v634 = vor.u32 %v629, %v633
      %v636 = vshll.u32 %v611, 16
      %v638 = vrot.slane %v636, 1
      %v639 = vsel %vm627, %v634, %v638
      %v641 = vshrl.u32 %v564, 16
      %v643 = vshll.u32 %v564, 16
      %v645 = vrot.slane %v643, 1
      %v646 = vor.u32 %v641, %v645
      %v648 = vshll.u32 %v612, 16
      %v650 = vrot.slane %v648, 1
      %v651 = vsel %vm627, %v646, %v650
      %v653 = vshrl.u32 %v565, 16
      %v655 = vshll.u32 %v565, 16
      %v657 = vrot.slane %v655, 1
      %v658 = vor.u32 %v653, %v657
      %v660 = vshll.u32 %v613, 16
      %v662 = vrot.slane %v660, 1
      %v663 = vsel %vm627, %v658, %v662
      %v665 = vshrl.u32 %v566, 16
      %v667 = vshll.u32 %v566, 16
      %v669 = vrot.slane %v667, 1
      %v670 = vor.u32 %v665, %v669
      %v672 = vshll.u32 %v614, 16
      %v674 = vrot.slane %v672, 1
      %v675 = vsel %vm627, %v670, %v674
      %v677 = vshrl.u32 %v567, 16
      %v679 = vshll.u32 %v567, 16
      %v681 = vrot.slane %v679, 1
      %v682 = vor.u32 %v677, %v681
      %v684 = vshll.u32 %v615, 16
      %v686 = vrot.slane %v684, 1
      %v687 = vsel %vm627, %v682, %v686
      %v689 = vshrl.u32 %v568, 16
      %v691 = vshll.u32 %v568, 16
      %v693 = vrot.slane %v691, 1
      %v694 = vor.u32 %v689, %v693
      %v696 = vshll.u32 %v616, 16
      %v698 = vrot.slane %v696, 1
      %v699 = vsel %vm627, %v694, %v698
      %v701 = vshrl.u32 %v569, 16
      %v703 = vshll.u32 %v569, 16
      %v705 = vrot.slane %v703, 1
      %v706 = vor.u32 %v701, %v705
      %v708 = vshll.u32 %v617, 16
      %v710 = vrot.slane %v708, 1
      %v711 = vsel %vm627, %v706, %v710
      %v713 = vshrl.u32 %v570, 16
      %v715 = vshll.u32 %v570, 16
      %v717 = vrot.slane %v715, 1
      %v718 = vor.u32 %v713, %v717
      %v720 = vshll.u32 %v618, 16
      %v722 = vrot.slane %v720, 1
      %v723 = vsel %vm627, %v718, %v722
      %v725 = vshrl.u32 %v571, 16
      %v727 = vshll.u32 %v571, 16
      %v729 = vrot.slane %v727, 1
      %v730 = vor.u32 %v725, %v729
      %v732 = vshll.u32 %v619, 16
      %v734 = vrot.slane %v732, 1
      %v735 = vsel %vm627, %v730, %v734
      %v737 = vshrl.u32 %v572, 16
      %v739 = vshll.u32 %v572, 16
      %v741 = vrot.slane %v739, 1
      %v742 = vor.u32 %v737, %v741
      %v744 = vshll.u32 %v620, 16
      %v746 = vrot.slane %v744, 1
      %v747 = vsel %vm627, %v742, %v746
      %v749 = vshrl.u32 %v573, 16
      %v751 = vshll.u32 %v573, 16
      %v753 = vrot.slane %v751, 1
      %v754 = vor.u32 %v749, %v753
      %v756 = vshll.u32 %v621, 16
      %v758 = vrot.slane %v756, 1
      %v759 = vsel %vm627, %v754, %v758
      %v761 = vshrl.u32 %v574, 16
      %v763 = vshll.u32 %v574, 16
      %v765 = vrot.slane %v763, 1
      %v766 = vor.u32 %v761, %v765
      %v768 = vshll.u32 %v622, 16
      %v770 = vrot.slane %v768, 1
      %v771 = vsel %vm627, %v766, %v770
      %v773 = vshrl.u32 %v575, 16
      %v775 = vshll.u32 %v575, 16
      %v777 = vrot.slane %v775, 1
      %v778 = vor.u32 %v773, %v777
      %v780 = vshll.u32 %v623, 16
      %v782 = vrot.slane %v780, 1
      %v783 = vsel %vm627, %v778, %v782
      %v785 = vshrl.u32 %v576, 16
      %v787 = vshll.u32 %v576, 16
      %v789 = vrot.slane %v787, 1
      %v790 = vor.u32 %v785, %v789
      %v792 = vshll.u32 %v624, 16
      %v794 = vrot.slane %v792, 1
      %v795 = vsel %vm627, %v790, %v794
      %v797 = vshrl.u32 %v577, 16
      %v799 = vshll.u32 %v577, 16
      %v801 = vrot.slane %v799, 1
      %v802 = vor.u32 %v797, %v801
      %v804 = vshll.u32 %v625, 16
      %v806 = vrot.slane %v804, 1
      %v807 = vsel %vm627, %v802, %v806
      %v809 = vshrl.u32 %v578, 16
      %v811 = vshll.u32 %v578, 16
      %v813 = vrot.slane %v811, 1
      %v814 = vor.u32 %v809, %v813
      %v816 = vshll.u32 %v626, 16
      %v818 = vrot.slane %v816, 1
      %v819 = vsel %vm627, %v814, %v818
      %820 = vrot.lane.b32.xlu0 %v639, 8
      %v821 = vpop.permute.xlu0 %820
      %822 = vrot.lane.b32.xlu0 %v651, 8
      %v823 = vpop.permute.xlu0 %822
      %824 = vrot.lane.b32.xlu0 %v663, 8
      %v825 = vpop.permute.xlu0 %824
      %826 = vrot.lane.b32.xlu0 %v675, 8
      %v827 = vpop.permute.xlu0 %826
      %828 = vrot.lane.b32.xlu0 %v687, 8
      %v829 = vpop.permute.xlu0 %828
      %830 = vrot.lane.b32.xlu0 %v699, 8
      %v831 = vpop.permute.xlu0 %830
      %832 = vrot.lane.b32.xlu0 %v711, 8
      %v833 = vpop.permute.xlu0 %832
      %834 = vrot.lane.b32.xlu0 %v723, 8
      %v835 = vpop.permute.xlu0 %834
      %836 = vrot.lane.b32.xlu0 %v735, 8
      %v837 = vpop.permute.xlu0 %836
      %838 = vrot.lane.b32.xlu0 %v747, 8
      %v839 = vpop.permute.xlu0 %838
      %840 = vrot.lane.b32.xlu0 %v759, 8
      %v841 = vpop.permute.xlu0 %840
      %842 = vrot.lane.b32.xlu0 %v771, 8
      %v843 = vpop.permute.xlu0 %842
      %844 = vrot.lane.b32.xlu0 %v783, 8
      %v845 = vpop.permute.xlu0 %844
      %846 = vrot.lane.b32.xlu0 %v795, 8
      %v847 = vpop.permute.xlu0 %846
      %848 = vrot.lane.b32.xlu0 %v807, 8
      %v849 = vpop.permute.xlu0 %848
      %850 = vrot.lane.b32.xlu0 %v819, 8
      %v851 = vpop.permute.xlu0 %850
      %vm852 = vcmask 1046528
      %v853 = vrot.slane %v563, 1
      %v854 = vrot.slane %v611, 1
      %v855 = vsel %vm852, %v853, %v854
      %v856 = vrot.slane %v564, 1
      %v857 = vrot.slane %v612, 1
      %v858 = vsel %vm852, %v856, %v857
      %v859 = vrot.slane %v565, 1
      %v860 = vrot.slane %v613, 1
      %v861 = vsel %vm852, %v859, %v860
      %v862 = vrot.slane %v566, 1
      %v863 = vrot.slane %v614, 1
      %v864 = vsel %vm852, %v862, %v863
      %v865 = vrot.slane %v567, 1
      %v866 = vrot.slane %v615, 1
      %v867 = vsel %vm852, %v865, %v866
      %v868 = vrot.slane %v568, 1
      %v869 = vrot.slane %v616, 1
      %v870 = vsel %vm852, %v868, %v869
      %v871 = vrot.slane %v569, 1
      %v872 = vrot.slane %v617, 1
      %v873 = vsel %vm852, %v871, %v872
      %v874 = vrot.slane %v570, 1
      %v875 = vrot.slane %v618, 1
      %v876 = vsel %vm852, %v874, %v875
      %v877 = vrot.slane %v571, 1
      %v878 = vrot.slane %v619, 1
      %v879 = vsel %vm852, %v877, %v878
      %v880 = vrot.slane %v572, 1
      %v881 = vrot.slane %v620, 1
      %v882 = vsel %vm852, %v880, %v881
      %v883 = vrot.slane %v573, 1
      %v884 = vrot.slane %v621, 1
      %v885 = vsel %vm852, %v883, %v884
      %v886 = vrot.slane %v574, 1
      %v887 = vrot.slane %v622, 1
      %v888 = vsel %vm852, %v886, %v887
      %v889 = vrot.slane %v575, 1
      %v890 = vrot.slane %v623, 1
      %v891 = vsel %vm852, %v889, %v890
      %v892 = vrot.slane %v576, 1
      %v893 = vrot.slane %v624, 1
      %v894 = vsel %vm852, %v892, %v893
      %v895 = vrot.slane %v577, 1
      %v896 = vrot.slane %v625, 1
      %v897 = vsel %vm852, %v895, %v896
      %v898 = vrot.slane %v578, 1
      %v899 = vrot.slane %v626, 1
      %v900 = vsel %vm852, %v898, %v899
      %901 = vrot.lane.b32.xlu0 %v855, 16
      %v902 = vpop.permute.xlu0 %901
      %903 = vrot.lane.b32.xlu0 %v858, 16
      %v904 = vpop.permute.xlu0 %903
      %905 = vrot.lane.b32.xlu0 %v861, 16
      %v906 = vpop.permute.xlu0 %905
      %907 = vrot.lane.b32.xlu0 %v864, 16
      %v908 = vpop.permute.xlu0 %907
      %909 = vrot.lane.b32.xlu0 %v867, 16
      %v910 = vpop.permute.xlu0 %909
      %911 = vrot.lane.b32.xlu0 %v870, 16
      %v912 = vpop.permute.xlu0 %911
      %913 = vrot.lane.b32.xlu0 %v873, 16
      %v914 = vpop.permute.xlu0 %913
      %915 = vrot.lane.b32.xlu0 %v876, 16
      %v916 = vpop.permute.xlu0 %915
      %917 = vrot.lane.b32.xlu0 %v879, 16
      %v918 = vpop.permute.xlu0 %917
      %919 = vrot.lane.b32.xlu0 %v882, 16
      %v920 = vpop.permute.xlu0 %919
      %921 = vrot.lane.b32.xlu0 %v885, 16
      %v922 = vpop.permute.xlu0 %921
      %923 = vrot.lane.b32.xlu0 %v888, 16
      %v924 = vpop.permute.xlu0 %923
      %925 = vrot.lane.b32.xlu0 %v891, 16
      %v926 = vpop.permute.xlu0 %925
      %927 = vrot.lane.b32.xlu0 %v894, 16
      %v928 = vpop.permute.xlu0 %927
      %929 = vrot.lane.b32.xlu0 %v897, 16
      %v930 = vpop.permute.xlu0 %929
      %931 = vrot.lane.b32.xlu0 %v900, 16
      %v932 = vpop.permute.xlu0 %931
      %v935 = vunpack.c.l.b16 %v493
      %v936 = vunpack.c.l.b16 %v494
      %v937 = vpack.c.b16 %v936, %v935
      %938 = vrot.lane.b32.xlu0 %v564, 24
      %v939 = vpop.permute.xlu0 %938
      %940 = vrot.lane.b32.xlu0 %v565, 24
      %v941 = vpop.permute.xlu0 %940
      %942 = vrot.lane.b32.xlu0 %v566, 24
      %v943 = vpop.permute.xlu0 %942
      %944 = vrot.lane.b32.xlu0 %v567, 24
      %v945 = vpop.permute.xlu0 %944
      %946 = vrot.lane.b32.xlu0 %v568, 24
      %v947 = vpop.permute.xlu0 %946
      %948 = vrot.lane.b32.xlu0 %v569, 24
      %v949 = vpop.permute.xlu0 %948
      %950 = vrot.lane.b32.xlu0 %v570, 24
      %v951 = vpop.permute.xlu0 %950
      %952 = vrot.lane.b32.xlu0 %v571, 24
      %v953 = vpop.permute.xlu0 %952
      %954 = vrot.lane.b32.xlu0 %v572, 24
      %v955 = vpop.permute.xlu0 %954
      %956 = vrot.lane.b32.xlu0 %v573, 24
      %v957 = vpop.permute.xlu0 %956
      %958 = vrot.lane.b32.xlu0 %v574, 24
      %v959 = vpop.permute.xlu0 %958
      %960 = vrot.lane.b32.xlu0 %v575, 24
      %v961 = vpop.permute.xlu0 %960
      %962 = vrot.lane.b32.xlu0 %v576, 24
      %v963 = vpop.permute.xlu0 %962
      %964 = vrot.lane.b32.xlu0 %v577, 24
      %v965 = vpop.permute.xlu0 %964
      %966 = vrot.lane.b32.xlu0 %v578, 24
      %v967 = vpop.permute.xlu0 %966
      %968 = vrot.lane.b32.xlu0 %v937, 24
      %v969 = vpop.permute.xlu0 %968
      %v971 = vunpack.c.l.b16 %v495
      %v972 = vpack.c.b16 %v971, %v971
      %v974 = vshrl.u32 %v937, 16
      %v976 = vshll.u32 %v937, 16
      %v978 = vrot.slane %v976, 1
      %v979 = vor.u32 %v974, %v978
      %v981 = vshll.u32 %v972, 16
      %v983 = vrot.slane %v981, 1
      %v984 = vsel %vm627, %v979, %v983
      %985 = vrot.lane.b32.xlu0 %v651, 32
      %v986 = vpop.permute.xlu0 %985
      %987 = vrot.lane.b32.xlu0 %v663, 32
      %v988 = vpop.permute.xlu0 %987
      %989 = vrot.lane.b32.xlu0 %v675, 32
      %v990 = vpop.permute.xlu0 %989
      %991 = vrot.lane.b32.xlu0 %v687, 32
      %v992 = vpop.permute.xlu0 %991
      %993 = vrot.lane.b32.xlu0 %v699, 32
      %v994 = vpop.permute.xlu0 %993
      %995 = vrot.lane.b32.xlu0 %v711, 32
      %v996 = vpop.permute.xlu0 %995
      %997 = vrot.lane.b32.xlu0 %v723, 32
      %v998 = vpop.permute.xlu0 %997
      %999 = vrot.lane.b32.xlu0 %v735, 32
      %v1000 = vpop.permute.xlu0 %999
      %1001 = vrot.lane.b32.xlu0 %v747, 32
      %v1002 = vpop.permute.xlu0 %1001
      %1003 = vrot.lane.b32.xlu0 %v759, 32
      %v1004 = vpop.permute.xlu0 %1003
      %1005 = vrot.lane.b32.xlu0 %v771, 32
      %v1006 = vpop.permute.xlu0 %1005
      %1007 = vrot.lane.b32.xlu0 %v783, 32
      %v1008 = vpop.permute.xlu0 %1007
      %1009 = vrot.lane.b32.xlu0 %v795, 32
      %v1010 = vpop.permute.xlu0 %1009
      %1011 = vrot.lane.b32.xlu0 %v807, 32
      %v1012 = vpop.permute.xlu0 %1011
      %1013 = vrot.lane.b32.xlu0 %v819, 32
      %v1014 = vpop.permute.xlu0 %1013
      %1015 = vrot.lane.b32.xlu0 %v984, 32
      %v1016 = vpop.permute.xlu0 %1015
      %v1017 = vrot.slane %v937, 1
      %v1018 = vrot.slane %v972, 1
      %v1019 = vsel %vm852, %v1017, %v1018
      %1020 = vrot.lane.b32.xlu0 %v858, 40
      %v1021 = vpop.permute.xlu0 %1020
      %1022 = vrot.lane.b32.xlu0 %v861, 40
      %v1023 = vpop.permute.xlu0 %1022
      %1024 = vrot.lane.b32.xlu0 %v864, 40
      %v1025 = vpop.permute.xlu0 %1024
      %1026 = vrot.lane.b32.xlu0 %v867, 40
      %v1027 = vpop.permute.xlu0 %1026
      %1028 = vrot.lane.b32.xlu0 %v870, 40
      %v1029 = vpop.permute.xlu0 %1028
      %1030 = vrot.lane.b32.xlu0 %v873, 40
      %v1031 = vpop.permute.xlu0 %1030
      %1032 = vrot.lane.b32.xlu0 %v876, 40
      %v1033 = vpop.permute.xlu0 %1032
      %1034 = vrot.lane.b32.xlu0 %v879, 40
      %v1035 = vpop.permute.xlu0 %1034
      %1036 = vrot.lane.b32.xlu0 %v882, 40
      %v1037 = vpop.permute.xlu0 %1036
      %1038 = vrot.lane.b32.xlu0 %v885, 40
      %v1039 = vpop.permute.xlu0 %1038
      %1040 = vrot.lane.b32.xlu0 %v888, 40
      %v1041 = vpop.permute.xlu0 %1040
      %1042 = vrot.lane.b32.xlu0 %v891, 40
      %v1043 = vpop.permute.xlu0 %1042
      %1044 = vrot.lane.b32.xlu0 %v894, 40
      %v1045 = vpop.permute.xlu0 %1044
      %1046 = vrot.lane.b32.xlu0 %v897, 40
      %v1047 = vpop.permute.xlu0 %1046
      %1048 = vrot.lane.b32.xlu0 %v900, 40
      %v1049 = vpop.permute.xlu0 %1048
      %1050 = vrot.lane.b32.xlu0 %v1019, 40
      %v1051 = vpop.permute.xlu0 %1050
      %v1054 = vunpack.c.l.b16 %v496
      %v1055 = vunpack.c.l.b16 %v497
      %v1056 = vpack.c.b16 %v1055, %v1054
      %1057 = vrot.lane.b32.xlu0 %v565, 48
      %v1058 = vpop.permute.xlu0 %1057
      %1059 = vrot.lane.b32.xlu0 %v566, 48
      %v1060 = vpop.permute.xlu0 %1059
      %1061 = vrot.lane.b32.xlu0 %v567, 48
      %v1062 = vpop.permute.xlu0 %1061
      %1063 = vrot.lane.b32.xlu0 %v568, 48
      %v1064 = vpop.permute.xlu0 %1063
      %1065 = vrot.lane.b32.xlu0 %v569, 48
      %v1066 = vpop.permute.xlu0 %1065
      %1067 = vrot.lane.b32.xlu0 %v570, 48
      %v1068 = vpop.permute.xlu0 %1067
      %1069 = vrot.lane.b32.xlu0 %v571, 48
      %v1070 = vpop.permute.xlu0 %1069
      %1071 = vrot.lane.b32.xlu0 %v572, 48
      %v1072 = vpop.permute.xlu0 %1071
      %1073 = vrot.lane.b32.xlu0 %v573, 48
      %v1074 = vpop.permute.xlu0 %1073
      %1075 = vrot.lane.b32.xlu0 %v574, 48
      %v1076 = vpop.permute.xlu0 %1075
      %1077 = vrot.lane.b32.xlu0 %v575, 48
      %v1078 = vpop.permute.xlu0 %1077
      %1079 = vrot.lane.b32.xlu0 %v576, 48
      %v1080 = vpop.permute.xlu0 %1079
      %1081 = vrot.lane.b32.xlu0 %v577, 48
      %v1082 = vpop.permute.xlu0 %1081
      %1083 = vrot.lane.b32.xlu0 %v578, 48
      %v1084 = vpop.permute.xlu0 %1083
      %1085 = vrot.lane.b32.xlu0 %v937, 48
      %v1086 = vpop.permute.xlu0 %1085
      %1087 = vrot.lane.b32.xlu0 %v1056, 48
      %v1088 = vpop.permute.xlu0 %1087
      %v1090 = vunpack.c.l.b16 %v498
      %v1091 = vpack.c.b16 %v1090, %v1090
      %v1093 = vshrl.u32 %v1056, 16
      %v1095 = vshll.u32 %v1056, 16
      %v1097 = vrot.slane %v1095, 1
      %v1098 = vor.u32 %v1093, %v1097
      %v1100 = vshll.u32 %v1091, 16
      %v1102 = vrot.slane %v1100, 1
      %v1103 = vsel %vm627, %v1098, %v1102
      %1104 = vrot.lane.b32.xlu0 %v663, 56
      %v1105 = vpop.permute.xlu0 %1104
      %1106 = vrot.lane.b32.xlu0 %v675, 56
      %v1107 = vpop.permute.xlu0 %1106
      %1108 = vrot.lane.b32.xlu0 %v687, 56
      %v1109 = vpop.permute.xlu0 %1108
      %1110 = vrot.lane.b32.xlu0 %v699, 56
      %v1111 = vpop.permute.xlu0 %1110
      %1112 = vrot.lane.b32.xlu0 %v711, 56
      %v1113 = vpop.permute.xlu0 %1112
      %1114 = vrot.lane.b32.xlu0 %v723, 56
      %v1115 = vpop.permute.xlu0 %1114
      %1116 = vrot.lane.b32.xlu0 %v735, 56
      %v1117 = vpop.permute.xlu0 %1116
      %1118 = vrot.lane.b32.xlu0 %v747, 56
      %v1119 = vpop.permute.xlu0 %1118
      %1120 = vrot.lane.b32.xlu0 %v759, 56
      %v1121 = vpop.permute.xlu0 %1120
      %1122 = vrot.lane.b32.xlu0 %v771, 56
      %v1123 = vpop.permute.xlu0 %1122
      %1124 = vrot.lane.b32.xlu0 %v783, 56
      %v1125 = vpop.permute.xlu0 %1124
      %1126 = vrot.lane.b32.xlu0 %v795, 56
      %v1127 = vpop.permute.xlu0 %1126
      %1128 = vrot.lane.b32.xlu0 %v807, 56
      %v1129 = vpop.permute.xlu0 %1128
      %1130 = vrot.lane.b32.xlu0 %v819, 56
      %v1131 = vpop.permute.xlu0 %1130
      %1132 = vrot.lane.b32.xlu0 %v984, 56
      %v1133 = vpop.permute.xlu0 %1132
      %1134 = vrot.lane.b32.xlu0 %v1103, 56
      %v1135 = vpop.permute.xlu0 %1134
      %v1136 = vrot.slane %v1056, 1
      %v1137 = vrot.slane %v1091, 1
      %v1138 = vsel %vm852, %v1136, %v1137
      %1139 = vrot.lane.b32.xlu0 %v861, 64
      %v1140 = vpop.permute.xlu0 %1139
      %1141 = vrot.lane.b32.xlu0 %v864, 64
      %v1142 = vpop.permute.xlu0 %1141
      %1143 = vrot.lane.b32.xlu0 %v867, 64
      %v1144 = vpop.permute.xlu0 %1143
      %1145 = vrot.lane.b32.xlu0 %v870, 64
      %v1146 = vpop.permute.xlu0 %1145
      %1147 = vrot.lane.b32.xlu0 %v873, 64
      %v1148 = vpop.permute.xlu0 %1147
      %1149 = vrot.lane.b32.xlu0 %v876, 64
      %v1150 = vpop.permute.xlu0 %1149
      %1151 = vrot.lane.b32.xlu0 %v879, 64
      %v1152 = vpop.permute.xlu0 %1151
      %1153 = vrot.lane.b32.xlu0 %v882, 64
      %v1154 = vpop.permute.xlu0 %1153
      %1155 = vrot.lane.b32.xlu0 %v885, 64
      %v1156 = vpop.permute.xlu0 %1155
      %1157 = vrot.lane.b32.xlu0 %v888, 64
      %v1158 = vpop.permute.xlu0 %1157
      %1159 = vrot.lane.b32.xlu0 %v891, 64
      %v1160 = vpop.permute.xlu0 %1159
      %1161 = vrot.lane.b32.xlu0 %v894, 64
      %v1162 = vpop.permute.xlu0 %1161
      %1163 = vrot.lane.b32.xlu0 %v897, 64
      %v1164 = vpop.permute.xlu0 %1163
      %1165 = vrot.lane.b32.xlu0 %v900, 64
      %v1166 = vpop.permute.xlu0 %1165
      %1167 = vrot.lane.b32.xlu0 %v1019, 64
      %v1168 = vpop.permute.xlu0 %1167
      %1169 = vrot.lane.b32.xlu0 %v1138, 64
      %v1170 = vpop.permute.xlu0 %1169
      %v1172 = vsel %vm302, %v563, %v821
      %v1174 = vsel %vm302, %v564, %v823
      %v1176 = vsel %vm302, %v565, %v825
      %v1178 = vsel %vm302, %v566, %v827
      %v1180 = vsel %vm302, %v567, %v829
      %v1182 = vsel %vm302, %v568, %v831
      %v1184 = vsel %vm302, %v569, %v833
      %v1186 = vsel %vm302, %v570, %v835
      %v1188 = vsel %vm302, %v571, %v837
      %v1190 = vsel %vm302, %v572, %v839
      %v1192 = vsel %vm302, %v573, %v841
      %v1194 = vsel %vm302, %v574, %v843
      %v1196 = vsel %vm302, %v575, %v845
      %v1198 = vsel %vm302, %v576, %v847
      %v1200 = vsel %vm302, %v577, %v849
      %v1202 = vsel %vm302, %v578, %v851
      %vm1203 = vcmask 130048
      %v1205 = vsel %vm1203, %v1172, %v902
      %v1207 = vsel %vm1203, %v1174, %v904
      %v1209 = vsel %vm1203, %v1176, %v906
      %v1211 = vsel %vm1203, %v1178, %v908
      %v1213 = vsel %vm1203, %v1180, %v910
      %v1215 = vsel %vm1203, %v1182, %v912
      %v1217 = vsel %vm1203, %v1184, %v914
      %v1219 = vsel %vm1203, %v1186, %v916
      %v1221 = vsel %vm1203, %v1188, %v918
      %v1223 = vsel %vm1203, %v1190, %v920
      %v1225 = vsel %vm1203, %v1192, %v922
      %v1227 = vsel %vm1203, %v1194, %v924
      %v1229 = vsel %vm1203, %v1196, %v926
      %v1231 = vsel %vm1203, %v1198, %v928
      %v1233 = vsel %vm1203, %v1200, %v930
      %v1235 = vsel %vm1203, %v1202, %v932
      %vm1236 = vcmask 195584
      %v1238 = vsel %vm1236, %v1205, %v939
      %v1240 = vsel %vm1236, %v1207, %v941
      %v1242 = vsel %vm1236, %v1209, %v943
      %v1244 = vsel %vm1236, %v1211, %v945
      %v1246 = vsel %vm1236, %v1213, %v947
      %v1248 = vsel %vm1236, %v1215, %v949
      %v1250 = vsel %vm1236, %v1217, %v951
      %v1252 = vsel %vm1236, %v1219, %v953
      %v1254 = vsel %vm1236, %v1221, %v955
      %v1256 = vsel %vm1236, %v1223, %v957
      %v1258 = vsel %vm1236, %v1225, %v959
      %v1260 = vsel %vm1236, %v1227, %v961
      %v1262 = vsel %vm1236, %v1229, %v963
      %v1264 = vsel %vm1236, %v1231, %v965
      %v1266 = vsel %vm1236, %v1233, %v967
      %v1268 = vsel %vm1236, %v1235, %v969
      %vm1269 = vcmask 261120
      %v1271 = vsel %vm1269, %v1238, %v986
      %v1273 = vsel %vm1269, %v1240, %v988
      %v1275 = vsel %vm1269, %v1242, %v990
      %v1277 = vsel %vm1269, %v1244, %v992
      %v1279 = vsel %vm1269, %v1246, %v994
      %v1281 = vsel %vm1269, %v1248, %v996
      %v1283 = vsel %vm1269, %v1250, %v998
      %v1285 = vsel %vm1269, %v1252, %v1000
      %v1287 = vsel %vm1269, %v1254, %v1002
      %v1289 = vsel %vm1269, %v1256, %v1004
      %v1291 = vsel %vm1269, %v1258, %v1006
      %v1293 = vsel %vm1269, %v1260, %v1008
      %v1295 = vsel %vm1269, %v1262, %v1010
      %v1297 = vsel %vm1269, %v1264, %v1012
      %v1299 = vsel %vm1269, %v1266, %v1014
      %v1301 = vsel %vm1269, %v1268, %v1016
      %vm1302 = vcmask 326656
      %v1304 = vsel %vm1302, %v1271, %v1021
      %v1306 = vsel %vm1302, %v1273, %v1023
      %v1308 = vsel %vm1302, %v1275, %v1025
      %v1310 = vsel %vm1302, %v1277, %v1027
      %v1312 = vsel %vm1302, %v1279, %v1029
      %v1314 = vsel %vm1302, %v1281, %v1031
      %v1316 = vsel %vm1302, %v1283, %v1033
      %v1318 = vsel %vm1302, %v1285, %v1035
      %v1320 = vsel %vm1302, %v1287, %v1037
      %v1322 = vsel %vm1302, %v1289, %v1039
      %v1324 = vsel %vm1302, %v1291, %v1041
      %v1326 = vsel %vm1302, %v1293, %v1043
      %v1328 = vsel %vm1302, %v1295, %v1045
      %v1330 = vsel %vm1302, %v1297, %v1047
      %v1332 = vsel %vm1302, %v1299, %v1049
      %v1334 = vsel %vm1302, %v1301, %v1051
      %vm1335 = vcmask 392192
      %v1337 = vsel %vm1335, %v1304, %v1058
      %v1339 = vsel %vm1335, %v1306, %v1060
      %v1341 = vsel %vm1335, %v1308, %v1062
      %v1343 = vsel %vm1335, %v1310, %v1064
      %v1345 = vsel %vm1335, %v1312, %v1066
      %v1347 = vsel %vm1335, %v1314, %v1068
      %v1349 = vsel %vm1335, %v1316, %v1070
      %v1351 = vsel %vm1335, %v1318, %v1072
      %v1353 = vsel %vm1335, %v1320, %v1074
      %v1355 = vsel %vm1335, %v1322, %v1076
      %v1357 = vsel %vm1335, %v1324, %v1078
      %v1359 = vsel %vm1335, %v1326, %v1080
      %v1361 = vsel %vm1335, %v1328, %v1082
      %v1363 = vsel %vm1335, %v1330, %v1084
      %v1365 = vsel %vm1335, %v1332, %v1086
      %v1367 = vsel %vm1335, %v1334, %v1088
      %vm1368 = vcmask 457728
      %v1370 = vsel %vm1368, %v1337, %v1105
      %v1372 = vsel %vm1368, %v1339, %v1107
      %v1374 = vsel %vm1368, %v1341, %v1109
      %v1376 = vsel %vm1368, %v1343, %v1111
      %v1378 = vsel %vm1368, %v1345, %v1113
      %v1380 = vsel %vm1368, %v1347, %v1115
      %v1382 = vsel %vm1368, %v1349, %v1117
      %v1384 = vsel %vm1368, %v1351, %v1119
      %v1386 = vsel %vm1368, %v1353, %v1121
      %v1388 = vsel %vm1368, %v1355, %v1123
      %v1390 = vsel %vm1368, %v1357, %v1125
      %v1392 = vsel %vm1368, %v1359, %v1127
      %v1394 = vsel %vm1368, %v1361, %v1129
      %v1396 = vsel %vm1368, %v1363, %v1131
      %v1398 = vsel %vm1368, %v1365, %v1133
      %v1400 = vsel %vm1368, %v1367, %v1135
      %vm1401 = vcmask 523264
      %v1403 = vsel %vm1401, %v1370, %v1140
      %v1405 = vsel %vm1401, %v1372, %v1142
      %v1407 = vsel %vm1401, %v1374, %v1144
      %v1409 = vsel %vm1401, %v1376, %v1146
      %v1411 = vsel %vm1401, %v1378, %v1148
      %v1413 = vsel %vm1401, %v1380, %v1150
      %v1415 = vsel %vm1401, %v1382, %v1152
      %v1417 = vsel %vm1401, %v1384, %v1154
      %v1419 = vsel %vm1401, %v1386, %v1156
      %v1421 = vsel %vm1401, %v1388, %v1158
      %v1423 = vsel %vm1401, %v1390, %v1160
      %v1425 = vsel %vm1401, %v1392, %v1162
      %v1427 = vsel %vm1401, %v1394, %v1164
      %v1429 = vsel %vm1401, %v1396, %v1166
      %v1431 = vsel %vm1401, %v1398, %v1168
      %v1433 = vsel %vm1401, %v1400, %v1170
      %v1434 = vld [vmem:[%s3] sm:$0xf]
      %v1435 = vld [vmem:[%s3 + $0x4] sm:$0xf]
      %v1436 = vld [vmem:[%s3 + $0x8] sm:$0xf]
      %v1437 = vld [vmem:[%s3 + $0xc] sm:$0xf]
      %v1438 = vld [vmem:[%s3 + $0x10] sm:$0xf]
      %v1439 = vld [vmem:[%s3 + $0x14] sm:$0xf]
      %v1440 = vld [vmem:[%s3 + $0x18] sm:$0xf]
      %v1441 = vld [vmem:[%s3 + $0x1c] sm:$0xf]
      %v1442 = vld [vmem:[%s3 + $0x20] sm:$0xf]
      %v1452 = vunpack.c.l.b16 %v1434
      %v1453 = vunpack.c.l.b16 %v1435
      %v1454 = vunpack.c.l.b16 %v1436
      %v1455 = vunpack.c.l.b16 %v1437
      %v1456 = vunpack.c.l.b16 %v1438
      %v1457 = vunpack.c.l.b16 %v1439
      %v1458 = vunpack.c.l.b16 %v1440
      %v1459 = vunpack.c.l.b16 %v1441
      %v1460 = vunpack.c.l.b16 %v1442
      %v1461 = vpack.c.b16 %v1453, %v1452
      %v1462 = vpack.c.b16 %v1455, %v1454
      %v1463 = vpack.c.b16 %v1457, %v1456
      %v1464 = vpack.c.b16 %v1459, %v1458
      %v1465 = vpack.c.b16 %v1460, %v1460
      %vm1470 = vcmask 588800
      %v1471 = vsel %vm1470, %v1403, 0
      %v1473 = vsel %vm1470, %v1405, 0
      %v1475 = vsel %vm1470, %v1407, 0
      %v1477 = vsel %vm1470, %v1409, 0
      %v1479 = vsel %vm1470, %v1411, 0
      %v1481 = vsel %vm1470, %v1413, 0
      %v1483 = vsel %vm1470, %v1415, 0
      %v1485 = vsel %vm1470, %v1417, 0
      %v1487 = vsel %vm1470, %v1419, 0
      %v1489 = vsel %vm1470, %v1421, 0
      %v1491 = vsel %vm1470, %v1423, 0
      %v1493 = vsel %vm1470, %v1425, 0
      %v1495 = vsel %vm1470, %v1427, 0
      %v1497 = vsel %vm1470, %v1429, 0
      %v1499 = vsel %vm1470, %v1431, 0
      %v1501 = vsel %vm1470, %v1433, 0
      %vm1503 = vcmask 1043456
      %v1505 = vsel %vm1503, %v1465, 0
      %1507 = vmatpush.bf16.msra.mxu0 0
      %1508 = vmatpush.bf16.msra.mxu0 0
      %1509 = vmatpush.bf16.msra.mxu0 0
      %1510 = vmatpush.bf16.msra.mxu0 %v1505
      %1511 = vmatpush.bf16.msra.mxu0 %v1464
      %1512 = vmatpush.bf16.msra.mxu0 %v1463
      %1513 = vmatpush.bf16.msra.mxu0 %v1462
      %1514 = vmatpush.bf16.msra.mxu0 %v1461
      %1515 = vmatmul.bf16.gmra.mxu0 %v1471
      %v1516 = vpop.f32.mrf.mxu0
      %v1517 = vadd.f32 0.0, %v1516
      %v1518 = vpop.f32.mrf.mxu0
      %v1519 = vadd.f32 0.0, %v1518
      %1520 = vmatmul.bf16.gmra.mxu0 %v1473
      %v1521 = vpop.f32.mrf.mxu0
      %v1522 = vadd.f32 0.0, %v1521
      %v1523 = vpop.f32.mrf.mxu0
      %v1524 = vadd.f32 0.0, %v1523
      %1525 = vmatmul.bf16.gmra.mxu0 %v1475
      %v1526 = vpop.f32.mrf.mxu0
      %v1527 = vadd.f32 0.0, %v1526
      %v1528 = vpop.f32.mrf.mxu0
      %v1529 = vadd.f32 0.0, %v1528
      %1530 = vmatmul.bf16.gmra.mxu0 %v1477
      %v1531 = vpop.f32.mrf.mxu0
      %v1532 = vadd.f32 0.0, %v1531
      %v1533 = vpop.f32.mrf.mxu0
      %v1534 = vadd.f32 0.0, %v1533
      %1535 = vmatmul.bf16.gmra.mxu0 %v1479
      %v1536 = vpop.f32.mrf.mxu0
      %v1537 = vadd.f32 0.0, %v1536
      %v1538 = vpop.f32.mrf.mxu0
      %v1539 = vadd.f32 0.0, %v1538
      %1540 = vmatmul.bf16.gmra.mxu0 %v1481
      %v1541 = vpop.f32.mrf.mxu0
      %v1542 = vadd.f32 0.0, %v1541
      %v1543 = vpop.f32.mrf.mxu0
      %v1544 = vadd.f32 0.0, %v1543
      %1545 = vmatmul.bf16.gmra.mxu0 %v1483
      %v1546 = vpop.f32.mrf.mxu0
      %v1547 = vadd.f32 0.0, %v1546
      %v1548 = vpop.f32.mrf.mxu0
      %v1549 = vadd.f32 0.0, %v1548
      %1550 = vmatmul.bf16.gmra.mxu0 %v1485
      %v1551 = vpop.f32.mrf.mxu0
      %v1552 = vadd.f32 0.0, %v1551
      %v1553 = vpop.f32.mrf.mxu0
      %v1554 = vadd.f32 0.0, %v1553
      %1555 = vmatmul.bf16.gmra.mxu0 %v1487
      %v1556 = vpop.f32.mrf.mxu0
      %v1557 = vadd.f32 0.0, %v1556
      %v1558 = vpop.f32.mrf.mxu0
      %v1559 = vadd.f32 0.0, %v1558
      %1560 = vmatmul.bf16.gmra.mxu0 %v1489
      %v1561 = vpop.f32.mrf.mxu0
      %v1562 = vadd.f32 0.0, %v1561
      %v1563 = vpop.f32.mrf.mxu0
      %v1564 = vadd.f32 0.0, %v1563
      %1565 = vmatmul.bf16.gmra.mxu0 %v1491
      %v1566 = vpop.f32.mrf.mxu0
      %v1567 = vadd.f32 0.0, %v1566
      %v1568 = vpop.f32.mrf.mxu0
      %v1569 = vadd.f32 0.0, %v1568
      %1570 = vmatmul.bf16.gmra.mxu0 %v1493
      %v1571 = vpop.f32.mrf.mxu0
      %v1572 = vadd.f32 0.0, %v1571
      %v1573 = vpop.f32.mrf.mxu0
      %v1574 = vadd.f32 0.0, %v1573
      %1575 = vmatmul.bf16.gmra.mxu0 %v1495
      %v1576 = vpop.f32.mrf.mxu0
      %v1577 = vadd.f32 0.0, %v1576
      %v1578 = vpop.f32.mrf.mxu0
      %v1579 = vadd.f32 0.0, %v1578
      %1580 = vmatmul.bf16.gmra.mxu0 %v1497
      %v1581 = vpop.f32.mrf.mxu0
      %v1582 = vadd.f32 0.0, %v1581
      %v1583 = vpop.f32.mrf.mxu0
      %v1584 = vadd.f32 0.0, %v1583
      %1585 = vmatmul.bf16.gmra.mxu0 %v1499
      %v1586 = vpop.f32.mrf.mxu0
      %v1587 = vadd.f32 0.0, %v1586
      %v1588 = vpop.f32.mrf.mxu0
      %v1589 = vadd.f32 0.0, %v1588
      %1590 = vmatmul.bf16.gmra.mxu0 %v1501
      %v1591 = vpop.f32.mrf.mxu0
      %v1592 = vadd.f32 0.0, %v1591
      %v1593 = vpop.f32.mrf.mxu0
      %v1594 = vadd.f32 0.0, %v1593
      %1595 = vdwg.mxu0
      %1596 = vst [vmem:[%s262] sm:$0xff] %v1517
      %1597 = vst [vmem:[%s262 + $0x8] sm:$0xff] %v1519
      %1598 = vst [vmem:[%s262 + $0x10] sm:$0xff] %v1522
      %1599 = vst [vmem:[%s262 + $0x18] sm:$0xff] %v1524
      %1600 = vst [vmem:[%s262 + $0x20] sm:$0xff] %v1527
      %1601 = vst [vmem:[%s262 + $0x28] sm:$0xff] %v1529
      %1602 = vst [vmem:[%s262 + $0x30] sm:$0xff] %v1532
      %1603 = vst [vmem:[%s262 + $0x38] sm:$0xff] %v1534
      %1604 = vst [vmem:[%s262 + $0x40] sm:$0xff] %v1537
      %1605 = vst [vmem:[%s262 + $0x48] sm:$0xff] %v1539
      %1606 = vst [vmem:[%s262 + $0x50] sm:$0xff] %v1542
      %1607 = vst [vmem:[%s262 + $0x58] sm:$0xff] %v1544
      %1608 = vst [vmem:[%s262 + $0x60] sm:$0xff] %v1547
      %1609 = vst [vmem:[%s262 + $0x68] sm:$0xff] %v1549
      %1610 = vst [vmem:[%s262 + $0x70] sm:$0xff] %v1552
      %1611 = vst [vmem:[%s262 + $0x78] sm:$0xff] %v1554
      %1612 = vst [vmem:[%s262 + $0x80] sm:$0xff] %v1557
      %1613 = vst [vmem:[%s262 + $0x88] sm:$0xff] %v1559
      %1614 = vst [vmem:[%s262 + $0x90] sm:$0xff] %v1562
      %1615 = vst [vmem:[%s262 + $0x98] sm:$0xff] %v1564
      %1616 = vst [vmem:[%s262 + $0xa0] sm:$0xff] %v1567
      %1617 = vst [vmem:[%s262 + $0xa8] sm:$0xff] %v1569
      %1618 = vst [vmem:[%s262 + $0xb0] sm:$0xff] %v1572
      %1619 = vst [vmem:[%s262 + $0xb8] sm:$0xff] %v1574
      %1620 = vst [vmem:[%s262 + $0xc0] sm:$0xff] %v1577
      %1621 = vst [vmem:[%s262 + $0xc8] sm:$0xff] %v1579
      %1622 = vst [vmem:[%s262 + $0xd0] sm:$0xff] %v1582
      %1623 = vst [vmem:[%s262 + $0xd8] sm:$0xff] %v1584
      %1624 = vst [vmem:[%s262 + $0xe0] sm:$0xff] %v1587
      %1625 = vst [vmem:[%s262 + $0xe8] sm:$0xff] %v1589
      %1626 = vst [vmem:[%s262 + $0xf0] sm:$0xff] %v1592
      %1627 = vst [vmem:[%s262 + $0xf8] sm:$0xff] %v1594
      %v1628 = vadd.f32 %v1517, %v1519
      %v1629 = vadd.f32 %v1628, %v1522
      %v1630 = vadd.f32 %v1629, %v1524
      %v1631 = vadd.f32 %v1630, %v1527
      %v1632 = vadd.f32 %v1631, %v1529
      %v1633 = vadd.f32 %v1632, %v1532
      %v1634 = vadd.f32 %v1633, %v1534
      %v1635 = vadd.f32 %v1634, %v1537
      %v1636 = vadd.f32 %v1635, %v1539
      %v1637 = vadd.f32 %v1636, %v1542
      %v1638 = vadd.f32 %v1637, %v1544
      %v1639 = vadd.f32 %v1638, %v1547
      %v1640 = vadd.f32 %v1639, %v1549
      %v1641 = vadd.f32 %v1640, %v1552
      %v1642 = vadd.f32 %v1641, %v1554
      %v1643 = vadd.f32 %v1642, %v1557
      %v1644 = vadd.f32 %v1643, %v1559
      %v1645 = vadd.f32 %v1644, %v1562
      %v1646 = vadd.f32 %v1645, %v1564
      %v1647 = vadd.f32 %v1646, %v1567
      %v1648 = vadd.f32 %v1647, %v1569
      %v1649 = vadd.f32 %v1648, %v1572
      %v1650 = vadd.f32 %v1649, %v1574
      %v1651 = vadd.f32 %v1650, %v1577
      %v1652 = vadd.f32 %v1651, %v1579
      %v1653 = vadd.f32 %v1652, %v1582
      %v1654 = vadd.f32 %v1653, %v1584
      %v1655 = vadd.f32 %v1654, %v1587
      %v1656 = vadd.f32 %v1655, %v1589
      %v1657 = vadd.f32 %v1656, %v1592
      %v1658 = vadd.f32 %v1657, %v1594
      %v1659 = vrot.slane %v1658, 4
      %v1660 = vadd.f32 %v1658, %v1659
      %v1661 = vrot.slane %v1660, 2
      %v1662 = vadd.f32 %v1660, %v1661
      %v1663 = vrot.slane %v1662, 1
      %v1664 = vadd.f32 %v1662, %v1663
      %1665 = vst [vmem:[%s265] sm:$0x1] %v1664
      %v1666 = vmul.f32 %v1517, %v1517
      %v1667 = vmul.f32 %v1519, %v1519
      %v1668 = vmul.f32 %v1522, %v1522
      %v1669 = vmul.f32 %v1524, %v1524
      %v1670 = vmul.f32 %v1527, %v1527
      %v1671 = vmul.f32 %v1529, %v1529
      %v1672 = vmul.f32 %v1532, %v1532
      %v1673 = vmul.f32 %v1534, %v1534
      %v1674 = vmul.f32 %v1537, %v1537
      %v1675 = vmul.f32 %v1539, %v1539
      %v1676 = vmul.f32 %v1542, %v1542
      %v1677 = vmul.f32 %v1544, %v1544
      %v1678 = vmul.f32 %v1547, %v1547
      %v1679 = vmul.f32 %v1549, %v1549
      %v1680 = vmul.f32 %v1552, %v1552
      %v1681 = vmul.f32 %v1554, %v1554
      %v1682 = vmul.f32 %v1557, %v1557
      %v1683 = vmul.f32 %v1559, %v1559
      %v1684 = vmul.f32 %v1562, %v1562
      %v1685 = vmul.f32 %v1564, %v1564
      %v1686 = vmul.f32 %v1567, %v1567
      %v1687 = vmul.f32 %v1569, %v1569
      %v1688 = vmul.f32 %v1572, %v1572
      %v1689 = vmul.f32 %v1574, %v1574
      %v1690 = vmul.f32 %v1577, %v1577
      %v1691 = vmul.f32 %v1579, %v1579
      %v1692 = vmul.f32 %v1582, %v1582
      %v1693 = vmul.f32 %v1584, %v1584
      %v1694 = vmul.f32 %v1587, %v1587
      %v1695 = vmul.f32 %v1589, %v1589
      %v1696 = vmul.f32 %v1592, %v1592
      %v1697 = vmul.f32 %v1594, %v1594
      %v1698 = vadd.f32 %v1666, %v1667
      %v1699 = vadd.f32 %v1698, %v1668
      %v1700 = vadd.f32 %v1699, %v1669
      %v1701 = vadd.f32 %v1700, %v1670
      %v1702 = vadd.f32 %v1701, %v1671
      %v1703 = vadd.f32 %v1702, %v1672
      %v1704 = vadd.f32 %v1703, %v1673
      %v1705 = vadd.f32 %v1704, %v1674
      %v1706 = vadd.f32 %v1705, %v1675
      %v1707 = vadd.f32 %v1706, %v1676
      %v1708 = vadd.f32 %v1707, %v1677
      %v1709 = vadd.f32 %v1708, %v1678
      %v1710 = vadd.f32 %v1709, %v1679
      %v1711 = vadd.f32 %v1710, %v1680
      %v1712 = vadd.f32 %v1711, %v1681
      %v1713 = vadd.f32 %v1712, %v1682
      %v1714 = vadd.f32 %v1713, %v1683
      %v1715 = vadd.f32 %v1714, %v1684
      %v1716 = vadd.f32 %v1715, %v1685
      %v1717 = vadd.f32 %v1716, %v1686
      %v1718 = vadd.f32 %v1717, %v1687
      %v1719 = vadd.f32 %v1718, %v1688
      %v1720 = vadd.f32 %v1719, %v1689
      %v1721 = vadd.f32 %v1720, %v1690
      %v1722 = vadd.f32 %v1721, %v1691
      %v1723 = vadd.f32 %v1722, %v1692
      %v1724 = vadd.f32 %v1723, %v1693
      %v1725 = vadd.f32 %v1724, %v1694
      %v1726 = vadd.f32 %v1725, %v1695
      %v1727 = vadd.f32 %v1726, %v1696
      %v1728 = vadd.f32 %v1727, %v1697
      %v1729 = vrot.slane %v1728, 4
      %v1730 = vadd.f32 %v1728, %v1729
      %v1731 = vrot.slane %v1730, 2
      %v1732 = vadd.f32 %v1730, %v1731
      %v1733 = vrot.slane %v1732, 1
      %v1734 = vadd.f32 %v1732, %v1733
      %1735 = vst [vmem:[%s268] sm:$0x1] %v1734
      %p1736 = scmp.lt.s32.totalorder %s18, 1
      %s1737 = scalar_select %p1736, %s18, 1
      %s1738 = smul.addr %s1737, 32
      %s1739 = smul.addr %s1738, 8
      %s1740 = scalar_lea.vmem %s4, %s1739
      %p1741 = scmp.lt.s32.totalorder %s18, 1
      %s1742 = scalar_select %p1741, %s18, 1
      %s1743 = scalar_lea.vmem %s5, %s1742
      %p1744 = scmp.lt.s32.totalorder %s18, 1
      %s1745 = scalar_select %p1744, %s18, 1
      %s1746 = scalar_lea.vmem %s6, %s1745
      // Predicated region
      $region37: #{double_conv.3} parent=35 // pred_check
        %p1747 = pneg %p125
      $region38: #{double_conv.3} parent=35 // pred_check_branch
        %1749 = sbr.rel (%p1747) target = $region40
      $region39: #{double_conv.3} parent=35 // pred_region
        _
      $region40: #{double_conv.3} parent=35 // pred_fallthru
        _
      // Predicated region
      $region41: #{double_conv.3} parent=35 // pred_check
        %p1750 = pneg %p151
      $region42: #{double_conv.3} parent=35 // pred_check_branch
        %1752 = sbr.rel (%p1750) target = $region44
      $region43: #{double_conv.3} parent=35 // pred_region
        _
      $region44: #{double_conv.3} parent=35 // pred_fallthru
        _
      // Predicated region
      $region45: #{double_conv.3} parent=35 // pred_check
        %p1753 = pneg %p177
      $region46: #{double_conv.3} parent=35 // pred_check_branch
        %1755 = sbr.rel (%p1753) target = $region48
      $region47: #{double_conv.3} parent=35 // pred_region
        _
      $region48: #{double_conv.3} parent=35 // pred_fallthru
        _
    $region36: #{double_conv.3} parent=5 // pred_fallthru
      _
    %p1756 = scmp.le.s32.totalorder 2, %s13
    // Predicated region
    $region49: #{double_conv.3} parent=5 // pred_check
      %p1757 = pneg %p1756
    $region50: #{double_conv.3} parent=5 // pred_check_branch
      %1759 = sbr.rel (%p1757) target = $region52
    $region51: #{double_conv.3} parent=5 // pred_region
      %s1760 = ssub.s32 %s13, 2
      // Predicated region
      $region53: #{double_conv.3} parent=51 // pred_check
        %p1761 = pneg %p131
      $region54: #{double_conv.3} parent=51 // pred_check_branch
        %1763 = sbr.rel (%p1761) target = $region56
      $region55: #{double_conv.3} parent=51 // pred_region
        %p1764 = scmp.lt.s32.totalorder %s19, 1
        %s1765 = scalar_select %p1764, %s19, 1
        %s1766 = smul.addr %s1765, 32
        %s1767 = smul.addr %s1766, 8
        %s1768 = scalar_lea.vmem %s4, %s1767
      $region56: #{double_conv.3} parent=51 // pred_fallthru
        _
      // Predicated region
      $region57: #{double_conv.3} parent=51 // pred_check
        %p1769 = pneg %p157
      $region58: #{double_conv.3} parent=51 // pred_check_branch
        %1771 = sbr.rel (%p1769) target = $region60
      $region59: #{double_conv.3} parent=51 // pred_region
        %p1772 = scmp.lt.s32.totalorder %s19, 1
        %s1773 = scalar_select %p1772, %s19, 1
        %s1774 = scalar_lea.vmem %s5, %s1773
      $region60: #{double_conv.3} parent=51 // pred_fallthru
        _
      // Predicated region
      $region61: #{double_conv.3} parent=51 // pred_check
        %p1775 = pneg %p183
      $region62: #{double_conv.3} parent=51 // pred_check_branch
        %1777 = sbr.rel (%p1775) target = $region64
      $region63: #{double_conv.3} parent=51 // pred_region
        %p1778 = scmp.lt.s32.totalorder %s19, 1
        %s1779 = scalar_select %p1778, %s19, 1
        %s1780 = scalar_lea.vmem %s6, %s1779
      $region64: #{double_conv.3} parent=51 // pred_fallthru
        _
    $region52: #{double_conv.3} parent=5 // pred_fallthru
      _
  $region6: #{double_conv.3} parent=0 // loop_footer
    %s17 = sadd.s32 1, %s13
  $region7: #{double_conv.3} parent=0 // loop_footer_branch
    %12 = sbr.rel target = $region3
  $region8: #{double_conv.3} parent=0 // loop_exit
    _

// kernel: double_conv.4
$region0: #{double_conv.4}
  #allocation0 [shape = 'u32[]', space=smem, size = 0x4, offset = 0x4, fixed_abs, tag = 'smem constant byte address 0x4 - core index']
  #allocation1 [shape = 'u32[72,128]{1,0:T(1,128)}', space=vmem, size = 0x9000, scoped, tag = 'internal scratch']
  #allocation2 [shape = 'f32[18,18,128]{2,1,0:T(8,128)}', space=vmem, size = 0x36000, scoped, tag = 'scratch operand']
  %s0 = inlined_call_operand.vmem [shape: f32[2,16,16,128], index: 0, kind: input, shape index: {}]
  %s1 = inlined_call_operand.vmem [shape: f32[1,128], index: 1, kind: input, shape index: {}]
  %s2 = inlined_call_operand.vmem [shape: f32[1,128], index: 2, kind: input, shape index: {}]
  %s3 = inlined_call_operand.vmem [shape: bf16[1152,128], index: 3, kind: input, shape index: {}]
  %s4 = inlined_call_operand.vmem [shape: f32[2,16,16,128], index: 4, kind: output, shape index: {0}]
  %s5 = inlined_call_operand.vmem [shape: f32[2,1,128], index: 5, kind: output, shape index: {1}]
  %s6 = inlined_call_operand.vmem [shape: f32[2,1,128], index: 6, kind: output, shape index: {2}]
  %7 = xla_tuple %s4, %s5, %s6
  %s8 = sld [smem:[#allocation0]]
  $region65: #{double_conv.4} parent=0
    _
  %s10 = ssub.s32 1, %s8
  %s11 = scalar_select 0, %s10, %s8
  loop: start=0, step=1, limit=4
  $region2: #{double_conv.4} parent=0 // loop_pre_header
    _
  $region3: #{double_conv.4} parent=0 // loop_header
    %s13 = sphi 0, %s17
    %p14 = scmp.ge.s32.totalorder %s13, 4
    %s23 = sphi 0, %s25
    %s26 = sphi 0, %s23
    %s27 = sphi 0, %s26
    %s43 = sphi 0, %s27
    %s47 = sphi 0, %s47
    %s49 = sphi 0, %s47
    %s50 = sphi 0, %s49
    %s64 = sphi 0, %s50
    %s68 = sphi 0, %s68
    %s70 = sphi 0, %s68
    %s71 = sphi 0, %s70
    %s85 = sphi 0, %s71
    %s89 = sphi 0, %s89
    %s91 = sphi 0, %s89
    %s92 = sphi 0, %s91
    %s106 = sphi 0, %s92
    %s112 = sphi 0, %s114
    %s115 = sphi 0, %s112
    %s116 = sphi 0, %s115
    %s132 = sphi 0, %s116
    %s138 = sphi 0, %s140
    %s141 = sphi 0, %s138
    %s142 = sphi 0, %s141
    %s158 = sphi 0, %s142
    %s164 = sphi 0, %s166
    %s167 = sphi 0, %s164
    %s168 = sphi 0, %s167
    %s184 = sphi 0, %s168
  $region4: #{double_conv.4} parent=0 // loop_header_branch
    %16 = sbr.rel (%p14) target = $region8
  $region5: #{double_conv.4} parent=0 // loop_body
    %s18 = ssub.s32 %s13, 1
    %s19 = ssub.s32 %s13, 2
    %s20 = sadd.s32 %s13, 1
    %s21 = ssub.s32 %s13, %s20
    %p22 = scmp.eq.s32.totalorder %s21, 0
    %s24 = sadd.s32 %s23, 1
    %s25 = scalar_select %p22, %s23, %s24
    %p28 = pneg %p22
    %p29 = scmp.eq.s32.totalorder %s13, 1
    %p30 = por %p28, %p29
    %p31 = scmp.ne.s32.totalorder %s23, %s26
    %p32 = scmp.eq.s32.totalorder %s13, 0
    %p33 = por %p31, %p32
    %p34 = scmp.ne.s32.totalorder %s23, %s26
    %p35 = scmp.eq.s32.totalorder %s18, 1
    %p36 = por %p34, %p35
    %p37 = scmp.ne.s32.totalorder %s26, %s27
    %p38 = scmp.eq.s32.totalorder %s18, 0
    %p39 = por %p37, %p38
    %p40 = scmp.ne.s32.totalorder %s26, %s27
    %p41 = scmp.eq.s32.totalorder %s19, 1
    %p42 = por %p40, %p41
    %p44 = scmp.ne.s32.totalorder %s27, %s43
    %p45 = scmp.eq.s32.totalorder %s19, 0
    %p46 = por %p44, %p45
    %s48 = sadd.s32 %s47, 1
    %p51 = scmp.eq.s32.totalorder %s13, 1
    %p52 = scmp.ne.s32.totalorder %s47, %s49
    %p53 = scmp.eq.s32.totalorder %s13, 0
    %p54 = por %p52, %p53
    %p55 = scmp.ne.s32.totalorder %s47, %s49
    %p56 = scmp.eq.s32.totalorder %s18, 1
    %p57 = por %p55, %p56
    %p58 = scmp.ne.s32.totalorder %s49, %s50
    %p59 = scmp.eq.s32.totalorder %s18, 0
    %p60 = por %p58, %p59
    %p61 = scmp.ne.s32.totalorder %s49, %s50
    %p62 = scmp.eq.s32.totalorder %s19, 1
    %p63 = por %p61, %p62
    %p65 = scmp.ne.s32.totalorder %s50, %s64
    %p66 = scmp.eq.s32.totalorder %s19, 0
    %p67 = por %p65, %p66
    %s69 = sadd.s32 %s68, 1
    %p72 = scmp.eq.s32.totalorder %s13, 1
    %p73 = scmp.ne.s32.totalorder %s68, %s70
    %p74 = scmp.eq.s32.totalorder %s13, 0
    %p75 = por %p73, %p74
    %p76 = scmp.ne.s32.totalorder %s68, %s70
    %p77 = scmp.eq.s32.totalorder %s18, 1
    %p78 = por %p76, %p77
    %p79 = scmp.ne.s32.totalorder %s70, %s71
    %p80 = scmp.eq.s32.totalorder %s18, 0
    %p81 = por %p79, %p80
    %p82 = scmp.ne.s32.totalorder %s70, %s71
    %p83 = scmp.eq.s32.totalorder %s19, 1
    %p84 = por %p82, %p83
    %p86 = scmp.ne.s32.totalorder %s71, %s85
    %p87 = scmp.eq.s32.totalorder %s19, 0
    %p88 = por %p86, %p87
    %s90 = sadd.s32 %s89, 1
    %p93 = scmp.eq.s32.totalorder %s13, 1
    %p94 = scmp.ne.s32.totalorder %s89, %s91
    %p95 = scmp.eq.s32.totalorder %s13, 0
    %p96 = por %p94, %p95
    %p97 = scmp.ne.s32.totalorder %s89, %s91
    %p98 = scmp.eq.s32.totalorder %s18, 1
    %p99 = por %p97, %p98
    %p100 = scmp.ne.s32.totalorder %s91, %s92
    %p101 = scmp.eq.s32.totalorder %s18, 0
    %p102 = por %p100, %p101
    %p103 = scmp.ne.s32.totalorder %s91, %s92
    %p104 = scmp.eq.s32.totalorder %s19, 1
    %p105 = por %p103, %p104
    %p107 = scmp.ne.s32.totalorder %s92, %s106
    %p108 = scmp.eq.s32.totalorder %s19, 0
    %p109 = por %p107, %p108
    %s110 = ssub.s32 %s13, %s20
    %p111 = scmp.eq.s32.totalorder %s110, 0
    %s113 = sadd.s32 %s112, 1
    %s114 = scalar_select %p111, %s112, %s113
    %p117 = pneg %p111
    %p118 = scmp.eq.s32.totalorder %s13, 1
    %p119 = por %p117, %p118
    %p120 = scmp.ne.s32.totalorder %s112, %s115
    %p121 = scmp.eq.s32.totalorder %s13, 0
    %p122 = por %p120, %p121
    %p123 = scmp.ne.s32.totalorder %s112, %s115
    %p124 = scmp.eq.s32.totalorder %s18, 1
    %p125 = por %p123, %p124
    %p126 = scmp.ne.s32.totalorder %s115, %s116
    %p127 = scmp.eq.s32.totalorder %s18, 0
    %p128 = por %p126, %p127
    %p129 = scmp.ne.s32.totalorder %s115, %s116
    %p130 = scmp.eq.s32.totalorder %s19, 1
    %p131 = por %p129, %p130
    %p133 = scmp.ne.s32.totalorder %s116, %s132
    %p134 = scmp.eq.s32.totalorder %s19, 0
    %p135 = por %p133, %p134
    %s136 = ssub.s32 %s13, %s20
    %p137 = scmp.eq.s32.totalorder %s136, 0
    %s139 = sadd.s32 %s138, 1
    %s140 = scalar_select %p137, %s138, %s139
    %p143 = pneg %p137
    %p144 = scmp.eq.s32.totalorder %s13, 1
    %p145 = por %p143, %p144
    %p146 = scmp.ne.s32.totalorder %s138, %s141
    %p147 = scmp.eq.s32.totalorder %s13, 0
    %p148 = por %p146, %p147
    %p149 = scmp.ne.s32.totalorder %s138, %s141
    %p150 = scmp.eq.s32.totalorder %s18, 1
    %p151 = por %p149, %p150
    %p152 = scmp.ne.s32.totalorder %s141, %s142
    %p153 = scmp.eq.s32.totalorder %s18, 0
    %p154 = por %p152, %p153
    %p155 = scmp.ne.s32.totalorder %s141, %s142
    %p156 = scmp.eq.s32.totalorder %s19, 1
    %p157 = por %p155, %p156
    %p159 = scmp.ne.s32.totalorder %s142, %s158
    %p160 = scmp.eq.s32.totalorder %s19, 0
    %p161 = por %p159, %p160
    %s162 = ssub.s32 %s13, %s20
    %p163 = scmp.eq.s32.totalorder %s162, 0
    %s165 = sadd.s32 %s164, 1
    %s166 = scalar_select %p163, %s164, %s165
    %p169 = pneg %p163
    %p170 = scmp.eq.s32.totalorder %s13, 1
    %p171 = por %p169, %p170
    %p172 = scmp.ne.s32.totalorder %s164, %s167
    %p173 = scmp.eq.s32.totalorder %s13, 0
    %p174 = por %p172, %p173
    %p175 = scmp.ne.s32.totalorder %s164, %s167
    %p176 = scmp.eq.s32.totalorder %s18, 1
    %p177 = por %p175, %p176
    %p178 = scmp.ne.s32.totalorder %s167, %s168
    %p179 = scmp.eq.s32.totalorder %s18, 0
    %p180 = por %p178, %p179
    %p181 = scmp.ne.s32.totalorder %s167, %s168
    %p182 = scmp.eq.s32.totalorder %s19, 1
    %p183 = por %p181, %p182
    %p185 = scmp.ne.s32.totalorder %s168, %s184
    %p186 = scmp.eq.s32.totalorder %s19, 0
    %p187 = por %p185, %p186
    %p188 = scmp.le.s32.totalorder 1, %s13
    %p189 = scmp.lt.s32.totalorder %s13, 3
    %p190 = pnand %p188, %p189
    %p191 = pneg %p190
    // Predicated region
    $region9: #{double_conv.4} parent=5 // pred_check
      _
    $region10: #{double_conv.4} parent=5 // pred_check_branch
      %193 = sbr.rel (%p190) target = $region12
    $region11: #{double_conv.4} parent=5 // pred_region
      %s194 = ssub.s32 %s13, 1
      // Predicated region
      $region13: #{double_conv.4} parent=11 // pred_check
        %p195 = pneg %p60
      $region14: #{double_conv.4} parent=11 // pred_check_branch
        %197 = sbr.rel (%p195) target = $region16
      $region15: #{double_conv.4} parent=11 // pred_region
        _
      $region16: #{double_conv.4} parent=11 // pred_fallthru
        _
      // Predicated region
      $region17: #{double_conv.4} parent=11 // pred_check
        %p198 = pneg %p81
      $region18: #{double_conv.4} parent=11 // pred_check_branch
        %200 = sbr.rel (%p198) target = $region20
      $region19: #{double_conv.4} parent=11 // pred_region
        _
      $region20: #{double_conv.4} parent=11 // pred_fallthru
        _
      // Predicated region
      $region21: #{double_conv.4} parent=11 // pred_check
        %p201 = pneg %p102
      $region22: #{double_conv.4} parent=11 // pred_check_branch
        %203 = sbr.rel (%p201) target = $region24
      $region23: #{double_conv.4} parent=11 // pred_region
        _
      $region24: #{double_conv.4} parent=11 // pred_fallthru
        _
    $region12: #{double_conv.4} parent=5 // pred_fallthru
      _
    %p204 = scmp.lt.s32.totalorder %s13, 2
    // Predicated region
    $region25: #{double_conv.4} parent=5 // pred_check
      %p205 = pneg %p204
    $region26: #{double_conv.4} parent=5 // pred_check_branch
      %207 = sbr.rel (%p205) target = $region28
    $region27: #{double_conv.4} parent=5 // pred_region
      // Predicated region
      $region29: #{double_conv.4} parent=27 // pred_check
        %p208 = pneg %p33
      $region30: #{double_conv.4} parent=27 // pred_check_branch
        %210 = sbr.rel (%p208) target = $region32
      $region31: #{double_conv.4} parent=27 // pred_region
        %p211 = scmp.lt.s32.totalorder %s13, 1
        %s212 = scalar_select %p211, %s13, 1
        %s213 = smul.addr %s212, 32
        %s214 = smul.addr %s213, 8
        %s215 = scalar_lea.vmem %s0, %s214
      $region32: #{double_conv.4} parent=27 // pred_fallthru
        _
    $region28: #{double_conv.4} parent=5 // pred_fallthru
      _
    %p216 = scmp.le.s32.totalorder 1, %s13
    %p217 = scmp.lt.s32.totalorder %s13, 3
    %p218 = pnand %p216, %p217
    %p219 = pneg %p218
    // Predicated region
    $region33: #{double_conv.4} parent=5 // pred_check
      _
    $region34: #{double_conv.4} parent=5 // pred_check_branch
      %221 = sbr.rel (%p218) target = $region36
    $region35: #{double_conv.4} parent=5 // pred_region
      %s222 = ssub.s32 %s13, 1
      %p223 = scmp.lt.s32.totalorder %s18, 1
      %s224 = scalar_select %p223, %s18, 1
      %s225 = smul.addr %s224, 32
      %s226 = smul.addr %s225, 8
      %s227 = scalar_lea.vmem %s0, %s226
      %p228 = pneg %p39
      %p229 = pneg %p36
      %p230 = pneg %p60
      %p231 = pneg %p57
      %p232 = pneg %p81
      %p233 = pneg %p78
      %p234 = pneg %p102
      %p235 = pneg %p99
      %p236 = pneg %p128
      %p237 = pneg %p125
      %p238 = scmp.lt.s32.totalorder %s18, 1
      %s239 = scalar_select %p238, %s18, 1
      %s240 = smul.addr %s239, 32
      %s241 = smul.addr %s240, 8
      %s242 = scalar_lea.vmem %s4, %s241
      %p243 = pneg %p154
      %p244 = pneg %p151
      %p245 = scmp.lt.s32.totalorder %s18, 1
      %s246 = scalar_select %p245, %s18, 1
      %s247 = scalar_lea.vmem %s5, %s246
      %p248 = pneg %p180
      %p249 = pneg %p177
      %p250 = scmp.lt.s32.totalorder %s18, 1
      %s251 = scalar_select %p250, %s18, 1
      %s252 = scalar_lea.vmem %s6, %s251
      %p253 = scmp.lt.s32.totalorder %s18, 1
      %s254 = scalar_select %p253, %s18, 1
      %s255 = smul.addr %s254, 32
      %s256 = smul.addr %s255, 8
      %s257 = scalar_lea.vmem %s0, %s256
      %p258 = scmp.lt.s32.totalorder %s18, 1
      %s259 = scalar_select %p258, %s18, 1
      %s260 = smul.addr %s259, 32
      %s261 = smul.addr %s260, 8
      %s262 = scalar_lea.vmem %s4, %s261
      %p263 = scmp.lt.s32.totalorder %s18, 1
      %s264 = scalar_select %p263, %s18, 1
      %s265 = scalar_lea.vmem %s5, %s264
      %p266 = scmp.lt.s32.totalorder %s18, 1
      %s267 = scalar_select %p266, %s18, 1
      %s268 = scalar_lea.vmem %s6, %s267
      %v269 = vld [vmem:[%s257] sm:$0xff]
      %v270 = vld [vmem:[%s257 + $0x8] sm:$0xff]
      %v271 = vld [vmem:[%s257 + $0x10] sm:$0xff]
      %v272 = vld [vmem:[%s257 + $0x18] sm:$0xff]
      %v273 = vld [vmem:[%s257 + $0x20] sm:$0xff]
      %v274 = vld [vmem:[%s257 + $0x28] sm:$0xff]
      %v275 = vld [vmem:[%s257 + $0x30] sm:$0xff]
      %v276 = vld [vmem:[%s257 + $0x38] sm:$0xff]
      %v277 = vld [vmem:[%s257 + $0x40] sm:$0xff]
      %v278 = vld [vmem:[%s257 + $0x48] sm:$0xff]
      %v279 = vld [vmem:[%s257 + $0x50] sm:$0xff]
      %v280 = vld [vmem:[%s257 + $0x58] sm:$0xff]
      %v281 = vld [vmem:[%s257 + $0x60] sm:$0xff]
      %v282 = vld [vmem:[%s257 + $0x68] sm:$0xff]
      %v283 = vld [vmem:[%s257 + $0x70] sm:$0xff]
      %v284 = vld [vmem:[%s257 + $0x78] sm:$0xff]
      %v285 = vld [vmem:[%s257 + $0x80] sm:$0xff]
      %v286 = vld [vmem:[%s257 + $0x88] sm:$0xff]
      %v287 = vld [vmem:[%s257 + $0x90] sm:$0xff]
      %v288 = vld [vmem:[%s257 + $0x98] sm:$0xff]
      %v289 = vld [vmem:[%s257 + $0xa0] sm:$0xff]
      %v290 = vld [vmem:[%s257 + $0xa8] sm:$0xff]
      %v291 = vld [vmem:[%s257 + $0xb0] sm:$0xff]
      %v292 = vld [vmem:[%s257 + $0xb8] sm:$0xff]
      %v293 = vld [vmem:[%s257 + $0xc0] sm:$0xff]
      %v294 = vld [vmem:[%s257 + $0xc8] sm:$0xff]
      %v295 = vld [vmem:[%s257 + $0xd0] sm:$0xff]
      %v296 = vld [vmem:[%s257 + $0xd8] sm:$0xff]
      %v297 = vld [vmem:[%s257 + $0xe0] sm:$0xff]
      %v298 = vld [vmem:[%s257 + $0xe8] sm:$0xff]
      %v299 = vld [vmem:[%s257 + $0xf0] sm:$0xff]
      %v300 = vld [vmem:[%s257 + $0xf8] sm:$0xff]
      %v301 = vld [vmem:[%s1] sm:$0x1]
      %v302 = vld [vmem:[%s2] sm:$0x1]
      %v304 = vperm.slane %v301, 0
      %v306 = vmul.f32 %v269, %v304
      %v307 = vmul.f32 %v270, %v304
      %v308 = vmul.f32 %v271, %v304
      %v309 = vmul.f32 %v272, %v304
      %v310 = vmul.f32 %v273, %v304
      %v311 = vmul.f32 %v274, %v304
      %v312 = vmul.f32 %v275, %v304
      %v313 = vmul.f32 %v276, %v304
      %v314 = vmul.f32 %v277, %v304
      %v315 = vmul.f32 %v278, %v304
      %v316 = vmul.f32 %v279, %v304
      %v317 = vmul.f32 %v280, %v304
      %v318 = vmul.f32 %v281, %v304
      %v319 = vmul.f32 %v282, %v304
      %v320 = vmul.f32 %v283, %v304
      %v321 = vmul.f32 %v284, %v304
      %v322 = vmul.f32 %v285, %v304
      %v323 = vmul.f32 %v286, %v304
      %v324 = vmul.f32 %v287, %v304
      %v325 = vmul.f32 %v288, %v304
      %v326 = vmul.f32 %v289, %v304
      %v327 = vmul.f32 %v290, %v304
      %v328 = vmul.f32 %v291, %v304
      %v329 = vmul.f32 %v292, %v304
      %v330 = vmul.f32 %v293, %v304
      %v331 = vmul.f32 %v294, %v304
      %v332 = vmul.f32 %v295, %v304
      %v333 = vmul.f32 %v296, %v304
      %v334 = vmul.f32 %v297, %v304
      %v335 = vmul.f32 %v298, %v304
      %v336 = vmul.f32 %v299, %v304
      %v337 = vmul.f32 %v300, %v304
      %v339 = vperm.slane %v302, 0
      %v341 = vadd.f32 %v306, %v339
      %v342 = vadd.f32 %v307, %v339
      %v343 = vadd.f32 %v308, %v339
      %v344 = vadd.f32 %v309, %v339
      %v345 = vadd.f32 %v310, %v339
      %v346 = vadd.f32 %v311, %v339
      %v347 = vadd.f32 %v312, %v339
      %v348 = vadd.f32 %v313, %v339
      %v349 = vadd.f32 %v314, %v339
      %v350 = vadd.f32 %v315, %v339
      %v351 = vadd.f32 %v316, %v339
      %v352 = vadd.f32 %v317, %v339
      %v353 = vadd.f32 %v318, %v339
      %v354 = vadd.f32 %v319, %v339
      %v355 = vadd.f32 %v320, %v339
      %v356 = vadd.f32 %v321, %v339
      %v357 = vadd.f32 %v322, %v339
      %v358 = vadd.f32 %v323, %v339
      %v359 = vadd.f32 %v324, %v339
      %v360 = vadd.f32 %v325, %v339
      %v361 = vadd.f32 %v326, %v339
      %v362 = vadd.f32 %v327, %v339
      %v363 = vadd.f32 %v328, %v339
      %v364 = vadd.f32 %v329, %v339
      %v365 = vadd.f32 %v330, %v339
      %v366 = vadd.f32 %v331, %v339
      %v367 = vadd.f32 %v332, %v339
      %v368 = vadd.f32 %v333, %v339
      %v369 = vadd.f32 %v334, %v339
      %v370 = vadd.f32 %v335, %v339
      %v371 = vadd.f32 %v336, %v339
      %v372 = vadd.f32 %v337, %v339
      %v373 = vmax.f32 %v341, 0.0
      %v374 = vmax.f32 %v342, 0.0
      %v375 = vmax.f32 %v343, 0.0
      %v376 = vmax.f32 %v344, 0.0
      %v377 = vmax.f32 %v345, 0.0
      %v378 = vmax.f32 %v346, 0.0
      %v379 = vmax.f32 %v347, 0.0
      %v380 = vmax.f32 %v348, 0.0
      %v381 = vmax.f32 %v349, 0.0
      %v382 = vmax.f32 %v350, 0.0
      %v383 = vmax.f32 %v351, 0.0
      %v384 = vmax.f32 %v352, 0.0
      %v385 = vmax.f32 %v353, 0.0
      %v386 = vmax.f32 %v354, 0.0
      %v387 = vmax.f32 %v355, 0.0
      %v388 = vmax.f32 %v356, 0.0
      %v389 = vmax.f32 %v357, 0.0
      %v390 = vmax.f32 %v358, 0.0
      %v391 = vmax.f32 %v359, 0.0
      %v392 = vmax.f32 %v360, 0.0
      %v393 = vmax.f32 %v361, 0.0
      %v394 = vmax.f32 %v362, 0.0
      %v395 = vmax.f32 %v363, 0.0
      %v396 = vmax.f32 %v364, 0.0
      %v397 = vmax.f32 %v365, 0.0
      %v398 = vmax.f32 %v366, 0.0
      %v399 = vmax.f32 %v367, 0.0
      %v400 = vmax.f32 %v368, 0.0
      %v401 = vmax.f32 %v369, 0.0
      %v402 = vmax.f32 %v370, 0.0
      %v403 = vmax.f32 %v371, 0.0
      %v404 = vmax.f32 %v372, 0.0
      %405 = vst [vmem:[#allocation2] sm:$0xff] 0.0
      %406 = vst [vmem:[#allocation2 + $0x8] sm:$0xff] 0.0
      %407 = vst [vmem:[#allocation2 + $0x10] sm:$0x3] 0.0
      %408 = vst [vmem:[#allocation2 + $0x18] sm:$0xff] 0.0
      %409 = vst [vmem:[#allocation2 + $0x20] sm:$0xff] 0.0
      %410 = vst [vmem:[#allocation2 + $0x28] sm:$0x3] 0.0
      %411 = vst [vmem:[#allocation2 + $0x30] sm:$0xff] 0.0
      %412 = vst [vmem:[#allocation2 + $0x38] sm:$0xff] 0.0
      %413 = vst [vmem:[#allocation2 + $0x40] sm:$0x3] 0.0
      %414 = vst [vmem:[#allocation2 + $0x48] sm:$0xff] 0.0
      %415 = vst [vmem:[#allocation2 + $0x50] sm:$0xff] 0.0
      %416 = vst [vmem:[#allocation2 + $0x58] sm:$0x3] 0.0
      %417 = vst [vmem:[#allocation2 + $0x60] sm:$0xff] 0.0
      %418 = vst [vmem:[#allocation2 + $0x68] sm:$0xff] 0.0
      %419 = vst [vmem:[#allocation2 + $0x70] sm:$0x3] 0.0
      %420 = vst [vmem:[#allocation2 + $0x78] sm:$0xff] 0.0
      %421 = vst [vmem:[#allocation2 + $0x80] sm:$0xff] 0.0
      %422 = vst [vmem:[#allocation2 + $0x88] sm:$0x3] 0.0
      %423 = vst [vmem:[#allocation2 + $0x90] sm:$0xff] 0.0
      %424 = vst [vmem:[#allocation2 + $0x98] sm:$0xff] 0.0
      %425 = vst [vmem:[#allocation2 + $0xa0] sm:$0x3] 0.0
      %426 = vst [vmem:[#allocation2 + $0xa8] sm:$0xff] 0.0
      %427 = vst [vmem:[#allocation2 + $0xb0] sm:$0xff] 0.0
      %428 = vst [vmem:[#allocation2 + $0xb8] sm:$0x3] 0.0
      %429 = vst [vmem:[#allocation2 + $0xc0] sm:$0xff] 0.0
      %430 = vst [vmem:[#allocation2 + $0xc8] sm:$0xff] 0.0
      %431 = vst [vmem:[#allocation2 + $0xd0] sm:$0x3] 0.0
      %432 = vst [vmem:[#allocation2 + $0xd8] sm:$0xff] 0.0
      %433 = vst [vmem:[#allocation2 + $0xe0] sm:$0xff] 0.0
      %434 = vst [vmem:[#allocation2 + $0xe8] sm:$0x3] 0.0
      %435 = vst [vmem:[#allocation2 + $0xf0] sm:$0xff] 0.0
      %436 = vst [vmem:[#allocation2 + $0xf8] sm:$0xff] 0.0
      %437 = vst [vmem:[#allocation2 + $0x100] sm:$0x3] 0.0
      %438 = vst [vmem:[#allocation2 + $0x108] sm:$0xff] 0.0
      %439 = vst [vmem:[#allocation2 + $0x110] sm:$0xff] 0.0
      %440 = vst [vmem:[#allocation2 + $0x118] sm:$0x3] 0.0
      %441 = vst [vmem:[#allocation2 + $0x120] sm:$0xff] 0.0
      %442 = vst [vmem:[#allocation2 + $0x128] sm:$0xff] 0.0
      %443 = vst [vmem:[#allocation2 + $0x130] sm:$0x3] 0.0
      %444 = vst [vmem:[#allocation2 + $0x138] sm:$0xff] 0.0
      %445 = vst [vmem:[#allocation2 + $0x140] sm:$0xff] 0.0
      %446 = vst [vmem:[#allocation2 + $0x148] sm:$0x3] 0.0
      %447 = vst [vmem:[#allocation2 + $0x150] sm:$0xff] 0.0
      %448 = vst [vmem:[#allocation2 + $0x158] sm:$0xff] 0.0
      %449 = vst [vmem:[#allocation2 + $0x160] sm:$0x3] 0.0
      %450 = vst [vmem:[#allocation2 + $0x168] sm:$0xff] 0.0
      %451 = vst [vmem:[#allocation2 + $0x170] sm:$0xff] 0.0
      %452 = vst [vmem:[#allocation2 + $0x178] sm:$0x3] 0.0
      %453 = vst [vmem:[#allocation2 + $0x180] sm:$0xff] 0.0
      %454 = vst [vmem:[#allocation2 + $0x188] sm:$0xff] 0.0
      %455 = vst [vmem:[#allocation2 + $0x190] sm:$0x3] 0.0
      %456 = vst [vmem:[#allocation2 + $0x198] sm:$0xff] 0.0
      %457 = vst [vmem:[#allocation2 + $0x1a0] sm:$0xff] 0.0
      %458 = vst [vmem:[#allocation2 + $0x1a8] sm:$0x3] 0.0
      %s459 = scalar_lea.vmem [#allocation2], 24
      %460 = vst [vmem:[%s459 + $0x1] sm:$0xff] %v373
      %461 = vst [vmem:[%s459 + $0x9] sm:$0xff] %v374
      %462 = vst [vmem:[%s459 + $0x19] sm:$0xff] %v375
      %463 = vst [vmem:[%s459 + $0x21] sm:$0xff] %v376
      %464 = vst [vmem:[%s459 + $0x31] sm:$0xff] %v377
      %465 = vst [vmem:[%s459 + $0x39] sm:$0xff] %v378
      %466 = vst [vmem:[%s459 + $0x49] sm:$0xff] %v379
      %467 = vst [vmem:[%s459 + $0x51] sm:$0xff] %v380
      %468 = vst [vmem:[%s459 + $0x61] sm:$0xff] %v381
      %469 = vst [vmem:[%s459 + $0x69] sm:$0xff] %v382
      %470 = vst [vmem:[%s459 + $0x79] sm:$0xff] %v383
      %471 = vst [vmem:[%s459 + $0x81] sm:$0xff] %v384
      %472 = vst [vmem:[%s459 + $0x91] sm:$0xff] %v385
      %473 = vst [vmem:[%s459 + $0x99] sm:$0xff] %v386
      %474 = vst [vmem:[%s459 + $0xa9] sm:$0xff] %v387
      %475 = vst [vmem:[%s459 + $0xb1] sm:$0xff] %v388
      %476 = vst [vmem:[%s459 + $0xc1] sm:$0xff] %v389
      %477 = vst [vmem:[%s459 + $0xc9] sm:$0xff] %v390
      %478 = vst [vmem:[%s459 + $0xd9] sm:$0xff] %v391
      %479 = vst [vmem:[%s459 + $0xe1] sm:$0xff] %v392
      %480 = vst [vmem:[%s459 + $0xf1] sm:$0xff] %v393
      %481 = vst [vmem:[%s459 + $0xf9] sm:$0xff] %v394
      %482 = vst [vmem:[%s459 + $0x109] sm:$0xff] %v395
      %483 = vst [vmem:[%s459 + $0x111] sm:$0xff] %v396
      %484 = vst [vmem:[%s459 + $0x121] sm:$0xff] %v397
      %485 = vst [vmem:[%s459 + $0x129] sm:$0xff] %v398
      %486 = vst [vmem:[%s459 + $0x139] sm:$0xff] %v399
      %487 = vst [vmem:[%s459 + $0x141] sm:$0xff] %v400
      %488 = vst [vmem:[%s459 + $0x151] sm:$0xff] %v401
      %489 = vst [vmem:[%s459 + $0x159] sm:$0xff] %v402
      %490 = vst [vmem:[%s459 + $0x169] sm:$0xff] %v403
      %491 = vst [vmem:[%s459 + $0x171] sm:$0xff] %v404
      %v492 = vld [vmem:[#allocation2] sm:$0xff]
      %v493 = vld [vmem:[#allocation2 + $0x8] sm:$0xff]
      %v494 = vld [vmem:[#allocation2 + $0x10] sm:$0x3]
      %v495 = vld [vmem:[#allocation2 + $0x18] sm:$0xff]
      %v496 = vld [vmem:[#allocation2 + $0x20] sm:$0xff]
      %v497 = vld [vmem:[#allocation2 + $0x28] sm:$0x3]
      %v498 = vld [vmem:[#allocation2 + $0x30] sm:$0xff]
      %v499 = vld [vmem:[#allocation2 + $0x38] sm:$0xff]
      %v500 = vld [vmem:[#allocation2 + $0x40] sm:$0x3]
      %v501 = vld [vmem:[#allocation2 + $0x48] sm:$0xff]
      %v502 = vld [vmem:[#allocation2 + $0x50] sm:$0xff]
      %v503 = vld [vmem:[#allocation2 + $0x58] sm:$0x3]
      %v504 = vld [vmem:[#allocation2 + $0x60] sm:$0xff]
      %v505 = vld [vmem:[#allocation2 + $0x68] sm:$0xff]
      %v506 = vld [vmem:[#allocation2 + $0x70] sm:$0x3]
      %v507 = vld [vmem:[#allocation2 + $0x78] sm:$0xff]
      %v508 = vld [vmem:[#allocation2 + $0x80] sm:$0xff]
      %v509 = vld [vmem:[#allocation2 + $0x88] sm:$0x3]
      %v510 = vld [vmem:[#allocation2 + $0x90] sm:$0xff]
      %v511 = vld [vmem:[#allocation2 + $0x98] sm:$0xff]
      %v512 = vld [vmem:[#allocation2 + $0xa0] sm:$0x3]
      %v513 = vld [vmem:[#allocation2 + $0xa8] sm:$0xff]
      %v514 = vld [vmem:[#allocation2 + $0xb0] sm:$0xff]
      %v515 = vld [vmem:[#allocation2 + $0xb8] sm:$0x3]
      %v516 = vld [vmem:[#allocation2 + $0xc0] sm:$0xff]
      %v517 = vld [vmem:[#allocation2 + $0xc8] sm:$0xff]
      %v518 = vld [vmem:[#allocation2 + $0xd0] sm:$0x3]
      %v519 = vld [vmem:[#allocation2 + $0xd8] sm:$0xff]
      %v520 = vld [vmem:[#allocation2 + $0xe0] sm:$0xff]
      %v521 = vld [vmem:[#allocation2 + $0xe8] sm:$0x3]
      %v522 = vld [vmem:[#allocation2 + $0xf0] sm:$0xff]
      %v523 = vld [vmem:[#allocation2 + $0xf8] sm:$0xff]
      %v524 = vld [vmem:[#allocation2 + $0x100] sm:$0x3]
      %v525 = vld [vmem:[#allocation2 + $0x108] sm:$0xff]
      %v526 = vld [vmem:[#allocation2 + $0x110] sm:$0xff]
      %v527 = vld [vmem:[#allocation2 + $0x118] sm:$0x3]
      %v528 = vld [vmem:[#allocation2 + $0x120] sm:$0xff]
      %v529 = vld [vmem:[#allocation2 + $0x128] sm:$0xff]
      %v530 = vld [vmem:[#allocation2 + $0x130] sm:$0x3]
      %v531 = vld [vmem:[#allocation2 + $0x138] sm:$0xff]
      %v532 = vld [vmem:[#allocation2 + $0x140] sm:$0xff]
      %v533 = vld [vmem:[#allocation2 + $0x148] sm:$0x3]
      %v534 = vld [vmem:[#allocation2 + $0x150] sm:$0xff]
      %v535 = vld [vmem:[#allocation2 + $0x158] sm:$0xff]
      %v536 = vld [vmem:[#allocation2 + $0x160] sm:$0x3]
      %v537 = vld [vmem:[#allocation2 + $0x168] sm:$0xff]
      %v538 = vld [vmem:[#allocation2 + $0x170] sm:$0xff]
      %v539 = vld [vmem:[#allocation2 + $0x178] sm:$0x3]
      %v540 = vld [vmem:[#allocation2 + $0x180] sm:$0xff]
      %v541 = vld [vmem:[#allocation2 + $0x188] sm:$0xff]
      %v542 = vld [vmem:[#allocation2 + $0x190] sm:$0x3]
      %v543 = vld [vmem:[#allocation2 + $0x198] sm:$0xff]
      %v544 = vld [vmem:[#allocation2 + $0x1a0] sm:$0xff]
      %v545 = vld [vmem:[#allocation2 + $0x1a8] sm:$0x3]
      %v546 = vpack.c.bf16 %v492, %v492
      %v547 = vpack.c.bf16 %v493, %v493
      %v548 = vpack.c.bf16 %v494, %v494
      %v549 = vpack.c.bf16 %v495, %v495
      %v550 = vpack.c.bf16 %v496, %v496
      %v551 = vpack.c.bf16 %v497, %v497
      %v552 = vpack.c.bf16 %v498, %v498
      %v553 = vpack.c.bf16 %v499, %v499
      %v554 = vpack.c.bf16 %v500, %v500
      %v555 = vpack.c.bf16 %v501, %v501
      %v556 = vpack.c.bf16 %v502, %v502
      %v557 = vpack.c.bf16 %v503, %v503
      %v558 = vpack.c.bf16 %v504, %v504
      %v559 = vpack.c.bf16 %v505, %v505
      %v560 = vpack.c.bf16 %v506, %v506
      %v561 = vpack.c.bf16 %v507, %v507
      %v562 = vpack.c.bf16 %v508, %v508
      %v563 = vpack.c.bf16 %v509, %v509
      %v564 = vpack.c.bf16 %v510, %v510
      %v565 = vpack.c.bf16 %v511, %v511
      %v566 = vpack.c.bf16 %v512, %v512
      %v567 = vpack.c.bf16 %v513, %v513
      %v568 = vpack.c.bf16 %v514, %v514
      %v569 = vpack.c.bf16 %v515, %v515
      %v570 = vpack.c.bf16 %v516, %v516
      %v571 = vpack.c.bf16 %v517, %v517
      %v572 = vpack.c.bf16 %v518, %v518
      %v573 = vpack.c.bf16 %v519, %v519
      %v574 = vpack.c.bf16 %v520, %v520
      %v575 = vpack.c.bf16 %v521, %v521
      %v576 = vpack.c.bf16 %v522, %v522
      %v577 = vpack.c.bf16 %v523, %v523
      %v578 = vpack.c.bf16 %v524, %v524
      %v579 = vpack.c.bf16 %v525, %v525
      %v580 = vpack.c.bf16 %v526, %v526
      %v581 = vpack.c.bf16 %v527, %v527
      %v582 = vpack.c.bf16 %v528, %v528
      %v583 = vpack.c.bf16 %v529, %v529
      %v584 = vpack.c.bf16 %v530, %v530
      %v585 = vpack.c.bf16 %v531, %v531
      %v586 = vpack.c.bf16 %v532, %v532
      %v587 = vpack.c.bf16 %v533, %v533
      %v588 = vpack.c.bf16 %v534, %v534
      %v589 = vpack.c.bf16 %v535, %v535
      %v590 = vpack.c.bf16 %v536, %v536
      %v591 = vpack.c.bf16 %v537, %v537
      %v592 = vpack.c.bf16 %v538, %v538
      %v593 = vpack.c.bf16 %v539, %v539
      %v594 = vpack.c.bf16 %v540, %v540
      %v595 = vpack.c.bf16 %v541, %v541
      %v596 = vpack.c.bf16 %v542, %v542
      %v597 = vpack.c.bf16 %v543, %v543
      %v598 = vpack.c.bf16 %v544, %v544
      %v599 = vpack.c.bf16 %v545, %v545
      %v632 = vunpack.c.l.b16 %v546
      %v633 = vunpack.c.l.b16 %v547
      %v634 = vunpack.c.l.b16 %v549
      %v635 = vunpack.c.l.b16 %v550
      %v636 = vunpack.c.l.b16 %v552
      %v637 = vunpack.c.l.b16 %v553
      %v638 = vunpack.c.l.b16 %v555
      %v639 = vunpack.c.l.b16 %v556
      %v640 = vunpack.c.l.b16 %v558
      %v641 = vunpack.c.l.b16 %v559
      %v642 = vunpack.c.l.b16 %v561
      %v643 = vunpack.c.l.b16 %v562
      %v644 = vunpack.c.l.b16 %v564
      %v645 = vunpack.c.l.b16 %v565
      %v646 = vunpack.c.l.b16 %v567
      %v647 = vunpack.c.l.b16 %v568
      %v648 = vunpack.c.l.b16 %v570
      %v649 = vunpack.c.l.b16 %v571
      %v650 = vunpack.c.l.b16 %v573
      %v651 = vunpack.c.l.b16 %v574
      %v652 = vunpack.c.l.b16 %v576
      %v653 = vunpack.c.l.b16 %v577
      %v654 = vunpack.c.l.b16 %v579
      %v655 = vunpack.c.l.b16 %v580
      %v656 = vunpack.c.l.b16 %v582
      %v657 = vunpack.c.l.b16 %v583
      %v658 = vunpack.c.l.b16 %v585
      %v659 = vunpack.c.l.b16 %v586
      %v660 = vunpack.c.l.b16 %v588
      %v661 = vunpack.c.l.b16 %v589
      %v662 = vunpack.c.l.b16 %v591
      %v663 = vunpack.c.l.b16 %v592
      %v664 = vpack.c.b16 %v633, %v632
      %v665 = vpack.c.b16 %v635, %v634
      %v666 = vpack.c.b16 %v637, %v636
      %v667 = vpack.c.b16 %v639, %v638
      %v668 = vpack.c.b16 %v641, %v640
      %v669 = vpack.c.b16 %v643, %v642
      %v670 = vpack.c.b16 %v645, %v644
      %v671 = vpack.c.b16 %v647, %v646
      %v672 = vpack.c.b16 %v649, %v648
      %v673 = vpack.c.b16 %v651, %v650
      %v674 = vpack.c.b16 %v653, %v652
      %v675 = vpack.c.b16 %v655, %v654
      %v676 = vpack.c.b16 %v657, %v656
      %v677 = vpack.c.b16 %v659, %v658
      %v678 = vpack.c.b16 %v661, %v660
      %v679 = vpack.c.b16 %v663, %v662
      %v712 = vunpack.c.l.b16 %v548
      %v713 = vunpack.c.l.b16 %v551
      %v714 = vunpack.c.l.b16 %v554
      %v715 = vunpack.c.l.b16 %v557
      %v716 = vunpack.c.l.b16 %v560
      %v717 = vunpack.c.l.b16 %v563
      %v718 = vunpack.c.l.b16 %v566
      %v719 = vunpack.c.l.b16 %v569
      %v720 = vunpack.c.l.b16 %v572
      %v721 = vunpack.c.l.b16 %v575
      %v722 = vunpack.c.l.b16 %v578
      %v723 = vunpack.c.l.b16 %v581
      %v724 = vunpack.c.l.b16 %v584
      %v725 = vunpack.c.l.b16 %v587
      %v726 = vunpack.c.l.b16 %v590
      %v727 = vunpack.c.l.b16 %v593
      %v728 = vpack.c.b16 %v712, %v712
      %v729 = vpack.c.b16 %v713, %v713
      %v730 = vpack.c.b16 %v714, %v714
      %v731 = vpack.c.b16 %v715, %v715
      %v732 = vpack.c.b16 %v716, %v716
      %v733 = vpack.c.b16 %v717, %v717
      %v734 = vpack.c.b16 %v718, %v718
      %v735 = vpack.c.b16 %v719, %v719
      %v736 = vpack.c.b16 %v720, %v720
      %v737 = vpack.c.b16 %v721, %v721
      %v738 = vpack.c.b16 %v722, %v722
      %v739 = vpack.c.b16 %v723, %v723
      %v740 = vpack.c.b16 %v724, %v724
      %v741 = vpack.c.b16 %v725, %v725
      %v742 = vpack.c.b16 %v726, %v726
      %v743 = vpack.c.b16 %v727, %v727
      %vm744 = vsmask.f32 7424
      %v746 = vshrl.u32 %v664, 16
      %v748 = vshll.u32 %v664, 16
      %v750 = vrot.slane %v748, 1
      %v751 = vor.u32 %v746, %v750
      %v753 = vshll.u32 %v728, 16
      %v755 = vrot.slane %v753, 1
      %v756 = vsel %vm744, %v751, %v755
      %v758 = vshrl.u32 %v665, 16
      %v760 = vshll.u32 %v665, 16
      %v762 = vrot.slane %v760, 1
      %v763 = vor.u32 %v758, %v762
      %v765 = vshll.u32 %v729, 16
      %v767 = vrot.slane %v765, 1
      %v768 = vsel %vm744, %v763, %v767
      %v770 = vshrl.u32 %v666, 16
      %v772 = vshll.u32 %v666, 16
      %v774 = vrot.slane %v772, 1
      %v775 = vor.u32 %v770, %v774
      %v777 = vshll.u32 %v730, 16
      %v779 = vrot.slane %v777, 1
      %v780 = vsel %vm744, %v775, %v779
      %v782 = vshrl.u32 %v667, 16
      %v784 = vshll.u32 %v667, 16
      %v786 = vrot.slane %v784, 1
      %v787 = vor.u32 %v782, %v786
      %v789 = vshll.u32 %v731, 16
      %v791 = vrot.slane %v789, 1
      %v792 = vsel %vm744, %v787, %v791
      %v794 = vshrl.u32 %v668, 16
      %v796 = vshll.u32 %v668, 16
      %v798 = vrot.slane %v796, 1
      %v799 = vor.u32 %v794, %v798
      %v801 = vshll.u32 %v732, 16
      %v803 = vrot.slane %v801, 1
      %v804 = vsel %vm744, %v799, %v803
      %v806 = vshrl.u32 %v669, 16
      %v808 = vshll.u32 %v669, 16
      %v810 = vrot.slane %v808, 1
      %v811 = vor.u32 %v806, %v810
      %v813 = vshll.u32 %v733, 16
      %v815 = vrot.slane %v813, 1
      %v816 = vsel %vm744, %v811, %v815
      %v818 = vshrl.u32 %v670, 16
      %v820 = vshll.u32 %v670, 16
      %v822 = vrot.slane %v820, 1
      %v823 = vor.u32 %v818, %v822
      %v825 = vshll.u32 %v734, 16
      %v827 = vrot.slane %v825, 1
      %v828 = vsel %vm744, %v823, %v827
      %v830 = vshrl.u32 %v671, 16
      %v832 = vshll.u32 %v671, 16
      %v834 = vrot.slane %v832, 1
      %v835 = vor.u32 %v830, %v834
      %v837 = vshll.u32 %v735, 16
      %v839 = vrot.slane %v837, 1
      %v840 = vsel %vm744, %v835, %v839
      %v842 = vshrl.u32 %v672, 16
      %v844 = vshll.u32 %v672, 16
      %v846 = vrot.slane %v844, 1
      %v847 = vor.u32 %v842, %v846
      %v849 = vshll.u32 %v736, 16
      %v851 = vrot.slane %v849, 1
      %v852 = vsel %vm744, %v847, %v851
      %v854 = vshrl.u32 %v673, 16
      %v856 = vshll.u32 %v673, 16
      %v858 = vrot.slane %v856, 1
      %v859 = vor.u32 %v854, %v858
      %v861 = vshll.u32 %v737, 16
      %v863 = vrot.slane %v861, 1
      %v864 = vsel %vm744, %v859, %v863
      %v866 = vshrl.u32 %v674, 16
      %v868 = vshll.u32 %v674, 16
      %v870 = vrot.slane %v868, 1
      %v871 = vor.u32 %v866, %v870
      %v873 = vshll.u32 %v738, 16
      %v875 = vrot.slane %v873, 1
      %v876 = vsel %vm744, %v871, %v875
      %v878 = vshrl.u32 %v675, 16
      %v880 = vshll.u32 %v675, 16
      %v882 = vrot.slane %v880, 1
      %v883 = vor.u32 %v878, %v882
      %v885 = vshll.u32 %v739, 16
      %v887 = vrot.slane %v885, 1
      %v888 = vsel %vm744, %v883, %v887
      %v890 = vshrl.u32 %v676, 16
      %v892 = vshll.u32 %v676, 16
      %v894 = vrot.slane %v892, 1
      %v895 = vor.u32 %v890, %v894
      %v897 = vshll.u32 %v740, 16
      %v899 = vrot.slane %v897, 1
      %v900 = vsel %vm744, %v895, %v899
      %v902 = vshrl.u32 %v677, 16
      %v904 = vshll.u32 %v677, 16
      %v906 = vrot.slane %v904, 1
      %v907 = vor.u32 %v902, %v906
      %v909 = vshll.u32 %v741, 16
      %v911 = vrot.slane %v909, 1
      %v912 = vsel %vm744, %v907, %v911
      %v914 = vshrl.u32 %v678, 16
      %v916 = vshll.u32 %v678, 16
      %v918 = vrot.slane %v916, 1
      %v919 = vor.u32 %v914, %v918
      %v921 = vshll.u32 %v742, 16
      %v923 = vrot.slane %v921, 1
      %v924 = vsel %vm744, %v919, %v923
      %v926 = vshrl.u32 %v679, 16
      %v928 = vshll.u32 %v679, 16
      %v930 = vrot.slane %v928, 1
      %v931 = vor.u32 %v926, %v930
      %v933 = vshll.u32 %v743, 16
      %v935 = vrot.slane %v933, 1
      %v936 = vsel %vm744, %v931, %v935
      %vm953 = vcmask 1046528
      %v954 = vrot.slane %v664, 1
      %v955 = vrot.slane %v728, 1
      %v956 = vsel %vm953, %v954, %v955
      %v957 = vrot.slane %v665, 1
      %v958 = vrot.slane %v729, 1
      %v959 = vsel %vm953, %v957, %v958
      %v960 = vrot.slane %v666, 1
      %v961 = vrot.slane %v730, 1
      %v962 = vsel %vm953, %v960, %v961
      %v963 = vrot.slane %v667, 1
      %v964 = vrot.slane %v731, 1
      %v965 = vsel %vm953, %v963, %v964
      %v966 = vrot.slane %v668, 1
      %v967 = vrot.slane %v732, 1
      %v968 = vsel %vm953, %v966, %v967
      %v969 = vrot.slane %v669, 1
      %v970 = vrot.slane %v733, 1
      %v971 = vsel %vm953, %v969, %v970
      %v972 = vrot.slane %v670, 1
      %v973 = vrot.slane %v734, 1
      %v974 = vsel %vm953, %v972, %v973
      %v975 = vrot.slane %v671, 1
      %v976 = vrot.slane %v735, 1
      %v977 = vsel %vm953, %v975, %v976
      %v978 = vrot.slane %v672, 1
      %v979 = vrot.slane %v736, 1
      %v980 = vsel %vm953, %v978, %v979
      %v981 = vrot.slane %v673, 1
      %v982 = vrot.slane %v737, 1
      %v983 = vsel %vm953, %v981, %v982
      %v984 = vrot.slane %v674, 1
      %v985 = vrot.slane %v738, 1
      %v986 = vsel %vm953, %v984, %v985
      %v987 = vrot.slane %v675, 1
      %v988 = vrot.slane %v739, 1
      %v989 = vsel %vm953, %v987, %v988
      %v990 = vrot.slane %v676, 1
      %v991 = vrot.slane %v740, 1
      %v992 = vsel %vm953, %v990, %v991
      %v993 = vrot.slane %v677, 1
      %v994 = vrot.slane %v741, 1
      %v995 = vsel %vm953, %v993, %v994
      %v996 = vrot.slane %v678, 1
      %v997 = vrot.slane %v742, 1
      %v998 = vsel %vm953, %v996, %v997
      %v999 = vrot.slane %v679, 1
      %v1000 = vrot.slane %v743, 1
      %v1001 = vsel %vm953, %v999, %v1000
      %v1020 = vunpack.c.l.b16 %v594
      %v1021 = vunpack.c.l.b16 %v595
      %v1022 = vpack.c.b16 %v1021, %v1020
      %v1025 = vunpack.c.l.b16 %v596
      %v1026 = vpack.c.b16 %v1025, %v1025
      %v1028 = vshrl.u32 %v1022, 16
      %v1030 = vshll.u32 %v1022, 16
      %v1032 = vrot.slane %v1030, 1
      %v1033 = vor.u32 %v1028, %v1032
      %v1035 = vshll.u32 %v1026, 16
      %v1037 = vrot.slane %v1035, 1
      %v1038 = vsel %vm744, %v1033, %v1037
      %v1040 = vrot.slane %v1022, 1
      %v1041 = vrot.slane %v1026, 1
      %v1042 = vsel %vm953, %v1040, %v1041
      %v1046 = vunpack.c.l.b16 %v597
      %v1047 = vunpack.c.l.b16 %v598
      %v1048 = vpack.c.b16 %v1047, %v1046
      %v1051 = vunpack.c.l.b16 %v599
      %v1052 = vpack.c.b16 %v1051, %v1051
      %v1054 = vshrl.u32 %v1048, 16
      %v1056 = vshll.u32 %v1048, 16
      %v1058 = vrot.slane %v1056, 1
      %v1059 = vor.u32 %v1054, %v1058
      %v1061 = vshll.u32 %v1052, 16
      %v1063 = vrot.slane %v1061, 1
      %v1064 = vsel %vm744, %v1059, %v1063
      %v1066 = vrot.slane %v1048, 1
      %v1067 = vrot.slane %v1052, 1
      %v1068 = vsel %vm953, %v1066, %v1067
      %v1070 = vld [vmem:[%s3] sm:$0xf]
      %v1071 = vld [vmem:[%s3 + $0x4] sm:$0xf]
      %v1072 = vld [vmem:[%s3 + $0x8] sm:$0xf]
      %v1073 = vld [vmem:[%s3 + $0xc] sm:$0xf]
      %v1074 = vld [vmem:[%s3 + $0x10] sm:$0xf]
      %v1075 = vld [vmem:[%s3 + $0x14] sm:$0xf]
      %v1076 = vld [vmem:[%s3 + $0x18] sm:$0xf]
      %v1077 = vld [vmem:[%s3 + $0x1c] sm:$0xf]
      %v1078 = vld [vmem:[%s3 + $0x20] sm:$0xf]
      %v1079 = vld [vmem:[%s3 + $0x24] sm:$0xf]
      %v1080 = vld [vmem:[%s3 + $0x28] sm:$0xf]
      %v1081 = vld [vmem:[%s3 + $0x2c] sm:$0xf]
      %v1082 = vld [vmem:[%s3 + $0x30] sm:$0xf]
      %v1083 = vld [vmem:[%s3 + $0x34] sm:$0xf]
      %v1084 = vld [vmem:[%s3 + $0x38] sm:$0xf]
      %v1085 = vld [vmem:[%s3 + $0x3c] sm:$0xf]
      %v1086 = vld [vmem:[%s3 + $0x40] sm:$0xf]
      %v1087 = vld [vmem:[%s3 + $0x44] sm:$0xf]
      %v1088 = vld [vmem:[%s3 + $0x48] sm:$0xf]
      %v1089 = vld [vmem:[%s3 + $0x4c] sm:$0xf]
      %v1090 = vld [vmem:[%s3 + $0x50] sm:$0xf]
      %v1091 = vld [vmem:[%s3 + $0x54] sm:$0xf]
      %v1092 = vld [vmem:[%s3 + $0x58] sm:$0xf]
      %v1093 = vld [vmem:[%s3 + $0x5c] sm:$0xf]
      %v1094 = vld [vmem:[%s3 + $0x60] sm:$0xf]
      %v1095 = vld [vmem:[%s3 + $0x64] sm:$0xf]
      %v1096 = vld [vmem:[%s3 + $0x68] sm:$0xf]
      %v1097 = vld [vmem:[%s3 + $0x6c] sm:$0xf]
      %v1098 = vld [vmem:[%s3 + $0x70] sm:$0xf]
      %v1099 = vld [vmem:[%s3 + $0x74] sm:$0xf]
      %v1100 = vld [vmem:[%s3 + $0x78] sm:$0xf]
      %v1101 = vld [vmem:[%s3 + $0x7c] sm:$0xf]
      %v1102 = vld [vmem:[%s3 + $0x80] sm:$0xf]
      %v1103 = vld [vmem:[%s3 + $0x84] sm:$0xf]
      %v1104 = vld [vmem:[%s3 + $0x88] sm:$0xf]
      %v1105 = vld [vmem:[%s3 + $0x8c] sm:$0xf]
      %v1106 = vld [vmem:[%s3 + $0x90] sm:$0xf]
      %v1107 = vld [vmem:[%s3 + $0x94] sm:$0xf]
      %v1108 = vld [vmem:[%s3 + $0x98] sm:$0xf]
      %v1109 = vld [vmem:[%s3 + $0x9c] sm:$0xf]
      %v1110 = vld [vmem:[%s3 + $0xa0] sm:$0xf]
      %v1111 = vld [vmem:[%s3 + $0xa4] sm:$0xf]
      %v1112 = vld [vmem:[%s3 + $0xa8] sm:$0xf]
      %v1113 = vld [vmem:[%s3 + $0xac] sm:$0xf]
      %v1114 = vld [vmem:[%s3 + $0xb0] sm:$0xf]
      %v1115 = vld [vmem:[%s3 + $0xb4] sm:$0xf]
      %v1116 = vld [vmem:[%s3 + $0xb8] sm:$0xf]
      %v1117 = vld [vmem:[%s3 + $0xbc] sm:$0xf]
      %v1118 = vld [vmem:[%s3 + $0xc0] sm:$0xf]
      %v1119 = vld [vmem:[%s3 + $0xc4] sm:$0xf]
      %v1120 = vld [vmem:[%s3 + $0xc8] sm:$0xf]
      %v1121 = vld [vmem:[%s3 + $0xcc] sm:$0xf]
      %v1122 = vld [vmem:[%s3 + $0xd0] sm:$0xf]
      %v1123 = vld [vmem:[%s3 + $0xd4] sm:$0xf]
      %v1124 = vld [vmem:[%s3 + $0xd8] sm:$0xf]
      %v1125 = vld [vmem:[%s3 + $0xdc] sm:$0xf]
      %v1126 = vld [vmem:[%s3 + $0xe0] sm:$0xf]
      %v1127 = vld [vmem:[%s3 + $0xe4] sm:$0xf]
      %v1128 = vld [vmem:[%s3 + $0xe8] sm:$0xf]
      %v1129 = vld [vmem:[%s3 + $0xec] sm:$0xf]
      %v1130 = vld [vmem:[%s3 + $0xf0] sm:$0xf]
      %v1131 = vld [vmem:[%s3 + $0xf4] sm:$0xf]
      %v1132 = vld [vmem:[%s3 + $0xf8] sm:$0xf]
      %v1133 = vld [vmem:[%s3 + $0xfc] sm:$0xf]
      %v1134 = vld [vmem:[%s3 + $0x100] sm:$0xf]
      %v1135 = vld [vmem:[%s3 + $0x104] sm:$0xf]
      %v1136 = vld [vmem:[%s3 + $0x108] sm:$0xf]
      %v1137 = vld [vmem:[%s3 + $0x10c] sm:$0xf]
      %v1138 = vld [vmem:[%s3 + $0x110] sm:$0xf]
      %v1139 = vld [vmem:[%s3 + $0x114] sm:$0xf]
      %v1140 = vld [vmem:[%s3 + $0x118] sm:$0xf]
      %v1141 = vld [vmem:[%s3 + $0x11c] sm:$0xf]
      %v1142 = vld [vmem:[%s3 + $0x120] sm:$0xf]
      %v1143 = vld [vmem:[%s3 + $0x124] sm:$0xf]
      %v1144 = vld [vmem:[%s3 + $0x128] sm:$0xf]
      %v1145 = vld [vmem:[%s3 + $0x12c] sm:$0xf]
      %v1146 = vld [vmem:[%s3 + $0x130] sm:$0xf]
      %v1147 = vld [vmem:[%s3 + $0x134] sm:$0xf]
      %v1148 = vld [vmem:[%s3 + $0x138] sm:$0xf]
      %v1149 = vld [vmem:[%s3 + $0x13c] sm:$0xf]
      %v1150 = vld [vmem:[%s3 + $0x140] sm:$0xf]
      %v1151 = vld [vmem:[%s3 + $0x144] sm:$0xf]
      %v1152 = vld [vmem:[%s3 + $0x148] sm:$0xf]
      %v1153 = vld [vmem:[%s3 + $0x14c] sm:$0xf]
      %v1154 = vld [vmem:[%s3 + $0x150] sm:$0xf]
      %v1155 = vld [vmem:[%s3 + $0x154] sm:$0xf]
      %v1156 = vld [vmem:[%s3 + $0x158] sm:$0xf]
      %v1157 = vld [vmem:[%s3 + $0x15c] sm:$0xf]
      %v1158 = vld [vmem:[%s3 + $0x160] sm:$0xf]
      %v1159 = vld [vmem:[%s3 + $0x164] sm:$0xf]
      %v1160 = vld [vmem:[%s3 + $0x168] sm:$0xf]
      %v1161 = vld [vmem:[%s3 + $0x16c] sm:$0xf]
      %v1162 = vld [vmem:[%s3 + $0x170] sm:$0xf]
      %v1163 = vld [vmem:[%s3 + $0x174] sm:$0xf]
      %v1164 = vld [vmem:[%s3 + $0x178] sm:$0xf]
      %v1165 = vld [vmem:[%s3 + $0x17c] sm:$0xf]
      %v1166 = vld [vmem:[%s3 + $0x180] sm:$0xf]
      %v1167 = vld [vmem:[%s3 + $0x184] sm:$0xf]
      %v1168 = vld [vmem:[%s3 + $0x188] sm:$0xf]
      %v1169 = vld [vmem:[%s3 + $0x18c] sm:$0xf]
      %v1170 = vld [vmem:[%s3 + $0x190] sm:$0xf]
      %v1171 = vld [vmem:[%s3 + $0x194] sm:$0xf]
      %v1172 = vld [vmem:[%s3 + $0x198] sm:$0xf]
      %v1173 = vld [vmem:[%s3 + $0x19c] sm:$0xf]
      %v1174 = vld [vmem:[%s3 + $0x1a0] sm:$0xf]
      %v1175 = vld [vmem:[%s3 + $0x1a4] sm:$0xf]
      %v1176 = vld [vmem:[%s3 + $0x1a8] sm:$0xf]
      %v1177 = vld [vmem:[%s3 + $0x1ac] sm:$0xf]
      %v1178 = vld [vmem:[%s3 + $0x1b0] sm:$0xf]
      %v1179 = vld [vmem:[%s3 + $0x1b4] sm:$0xf]
      %v1180 = vld [vmem:[%s3 + $0x1b8] sm:$0xf]
      %v1181 = vld [vmem:[%s3 + $0x1bc] sm:$0xf]
      %v1182 = vld [vmem:[%s3 + $0x1c0] sm:$0xf]
      %v1183 = vld [vmem:[%s3 + $0x1c4] sm:$0xf]
      %v1184 = vld [vmem:[%s3 + $0x1c8] sm:$0xf]
      %v1185 = vld [vmem:[%s3 + $0x1cc] sm:$0xf]
      %v1186 = vld [vmem:[%s3 + $0x1d0] sm:$0xf]
      %v1187 = vld [vmem:[%s3 + $0x1d4] sm:$0xf]
      %v1188 = vld [vmem:[%s3 + $0x1d8] sm:$0xf]
      %v1189 = vld [vmem:[%s3 + $0x1dc] sm:$0xf]
      %v1190 = vld [vmem:[%s3 + $0x1e0] sm:$0xf]
      %v1191 = vld [vmem:[%s3 + $0x1e4] sm:$0xf]
      %v1192 = vld [vmem:[%s3 + $0x1e8] sm:$0xf]
      %v1193 = vld [vmem:[%s3 + $0x1ec] sm:$0xf]
      %v1194 = vld [vmem:[%s3 + $0x1f0] sm:$0xf]
      %v1195 = vld [vmem:[%s3 + $0x1f4] sm:$0xf]
      %v1196 = vld [vmem:[%s3 + $0x1f8] sm:$0xf]
      %v1197 = vld [vmem:[%s3 + $0x1fc] sm:$0xf]
      %v1198 = vld [vmem:[%s3 + $0x200] sm:$0xf]
      %v1199 = vld [vmem:[%s3 + $0x204] sm:$0xf]
      %v1200 = vld [vmem:[%s3 + $0x208] sm:$0xf]
      %v1201 = vld [vmem:[%s3 + $0x20c] sm:$0xf]
      %v1202 = vld [vmem:[%s3 + $0x210] sm:$0xf]
      %v1203 = vld [vmem:[%s3 + $0x214] sm:$0xf]
      %v1204 = vld [vmem:[%s3 + $0x218] sm:$0xf]
      %v1205 = vld [vmem:[%s3 + $0x21c] sm:$0xf]
      %v1206 = vld [vmem:[%s3 + $0x220] sm:$0xf]
      %v1207 = vld [vmem:[%s3 + $0x224] sm:$0xf]
      %v1208 = vld [vmem:[%s3 + $0x228] sm:$0xf]
      %v1209 = vld [vmem:[%s3 + $0x22c] sm:$0xf]
      %v1210 = vld [vmem:[%s3 + $0x230] sm:$0xf]
      %v1211 = vld [vmem:[%s3 + $0x234] sm:$0xf]
      %v1212 = vld [vmem:[%s3 + $0x238] sm:$0xf]
      %v1213 = vld [vmem:[%s3 + $0x23c] sm:$0xf]
      %v1358 = vunpack.c.l.b16 %v1070
      %v1359 = vunpack.c.l.b16 %v1071
      %v1360 = vunpack.c.l.b16 %v1072
      %v1361 = vunpack.c.l.b16 %v1073
      %v1362 = vunpack.c.l.b16 %v1074
      %v1363 = vunpack.c.l.b16 %v1075
      %v1364 = vunpack.c.l.b16 %v1076
      %v1365 = vunpack.c.l.b16 %v1077
      %v1366 = vunpack.c.l.b16 %v1078
      %v1367 = vunpack.c.l.b16 %v1079
      %v1368 = vunpack.c.l.b16 %v1080
      %v1369 = vunpack.c.l.b16 %v1081
      %v1370 = vunpack.c.l.b16 %v1082
      %v1371 = vunpack.c.l.b16 %v1083
      %v1372 = vunpack.c.l.b16 %v1084
      %v1373 = vunpack.c.l.b16 %v1085
      %v1374 = vunpack.c.l.b16 %v1086
      %v1375 = vunpack.c.l.b16 %v1087
      %v1376 = vunpack.c.l.b16 %v1088
      %v1377 = vunpack.c.l.b16 %v1089
      %v1378 = vunpack.c.l.b16 %v1090
      %v1379 = vunpack.c.l.b16 %v1091
      %v1380 = vunpack.c.l.b16 %v1092
      %v1381 = vunpack.c.l.b16 %v1093
      %v1382 = vunpack.c.l.b16 %v1094
      %v1383 = vunpack.c.l.b16 %v1095
      %v1384 = vunpack.c.l.b16 %v1096
      %v1385 = vunpack.c.l.b16 %v1097
      %v1386 = vunpack.c.l.b16 %v1098
      %v1387 = vunpack.c.l.b16 %v1099
      %v1388 = vunpack.c.l.b16 %v1100
      %v1389 = vunpack.c.l.b16 %v1101
      %v1390 = vunpack.c.l.b16 %v1102
      %v1391 = vunpack.c.l.b16 %v1103
      %v1392 = vunpack.c.l.b16 %v1104
      %v1393 = vunpack.c.l.b16 %v1105
      %v1394 = vunpack.c.l.b16 %v1106
      %v1395 = vunpack.c.l.b16 %v1107
      %v1396 = vunpack.c.l.b16 %v1108
      %v1397 = vunpack.c.l.b16 %v1109
      %v1398 = vunpack.c.l.b16 %v1110
      %v1399 = vunpack.c.l.b16 %v1111
      %v1400 = vunpack.c.l.b16 %v1112
      %v1401 = vunpack.c.l.b16 %v1113
      %v1402 = vunpack.c.l.b16 %v1114
      %v1403 = vunpack.c.l.b16 %v1115
      %v1404 = vunpack.c.l.b16 %v1116
      %v1405 = vunpack.c.l.b16 %v1117
      %v1406 = vunpack.c.l.b16 %v1118
      %v1407 = vunpack.c.l.b16 %v1119
      %v1408 = vunpack.c.l.b16 %v1120
      %v1409 = vunpack.c.l.b16 %v1121
      %v1410 = vunpack.c.l.b16 %v1122
      %v1411 = vunpack.c.l.b16 %v1123
      %v1412 = vunpack.c.l.b16 %v1124
      %v1413 = vunpack.c.l.b16 %v1125
      %v1414 = vunpack.c.l.b16 %v1126
      %v1415 = vunpack.c.l.b16 %v1127
      %v1416 = vunpack.c.l.b16 %v1128
      %v1417 = vunpack.c.l.b16 %v1129
      %v1418 = vunpack.c.l.b16 %v1130
      %v1419 = vunpack.c.l.b16 %v1131
      %v1420 = vunpack.c.l.b16 %v1132
      %v1421 = vunpack.c.l.b16 %v1133
      %v1422 = vunpack.c.l.b16 %v1134
      %v1423 = vunpack.c.l.b16 %v1135
      %v1424 = vunpack.c.l.b16 %v1136
      %v1425 = vunpack.c.l.b16 %v1137
      %v1426 = vunpack.c.l.b16 %v1138
      %v1427 = vunpack.c.l.b16 %v1139
      %v1428 = vunpack.c.l.b16 %v1140
      %v1429 = vunpack.c.l.b16 %v1141
      %v1430 = vunpack.c.l.b16 %v1142
      %v1431 = vunpack.c.l.b16 %v1143
      %v1432 = vunpack.c.l.b16 %v1144
      %v1433 = vunpack.c.l.b16 %v1145
      %v1434 = vunpack.c.l.b16 %v1146
      %v1435 = vunpack.c.l.b16 %v1147
      %v1436 = vunpack.c.l.b16 %v1148
      %v1437 = vunpack.c.l.b16 %v1149
      %v1438 = vunpack.c.l.b16 %v1150
      %v1439 = vunpack.c.l.b16 %v1151
      %v1440 = vunpack.c.l.b16 %v1152
      %v1441 = vunpack.c.l.b16 %v1153
      %v1442 = vunpack.c.l.b16 %v1154
      %v1443 = vunpack.c.l.b16 %v1155
      %v1444 = vunpack.c.l.b16 %v1156
      %v1445 = vunpack.c.l.b16 %v1157
      %v1446 = vunpack.c.l.b16 %v1158
      %v1447 = vunpack.c.l.b16 %v1159
      %v1448 = vunpack.c.l.b16 %v1160
      %v1449 = vunpack.c.l.b16 %v1161
      %v1450 = vunpack.c.l.b16 %v1162
      %v1451 = vunpack.c.l.b16 %v1163
      %v1452 = vunpack.c.l.b16 %v1164
      %v1453 = vunpack.c.l.b16 %v1165
      %v1454 = vunpack.c.l.b16 %v1166
      %v1455 = vunpack.c.l.b16 %v1167
      %v1456 = vunpack.c.l.b16 %v1168
      %v1457 = vunpack.c.l.b16 %v1169
      %v1458 = vunpack.c.l.b16 %v1170
      %v1459 = vunpack.c.l.b16 %v1171
      %v1460 = vunpack.c.l.b16 %v1172
      %v1461 = vunpack.c.l.b16 %v1173
      %v1462 = vunpack.c.l.b16 %v1174
      %v1463 = vunpack.c.l.b16 %v1175
      %v1464 = vunpack.c.l.b16 %v1176
      %v1465 = vunpack.c.l.b16 %v1177
      %v1466 = vunpack.c.l.b16 %v1178
      %v1467 = vunpack.c.l.b16 %v1179
      %v1468 = vunpack.c.l.b16 %v1180
      %v1469 = vunpack.c.l.b16 %v1181
      %v1470 = vunpack.c.l.b16 %v1182
      %v1471 = vunpack.c.l.b16 %v1183
      %v1472 = vunpack.c.l.b16 %v1184
      %v1473 = vunpack.c.l.b16 %v1185
      %v1474 = vunpack.c.l.b16 %v1186
      %v1475 = vunpack.c.l.b16 %v1187
      %v1476 = vunpack.c.l.b16 %v1188
      %v1477 = vunpack.c.l.b16 %v1189
      %v1478 = vunpack.c.l.b16 %v1190
      %v1479 = vunpack.c.l.b16 %v1191
      %v1480 = vunpack.c.l.b16 %v1192
      %v1481 = vunpack.c.l.b16 %v1193
      %v1482 = vunpack.c.l.b16 %v1194
      %v1483 = vunpack.c.l.b16 %v1195
      %v1484 = vunpack.c.l.b16 %v1196
      %v1485 = vunpack.c.l.b16 %v1197
      %v1486 = vunpack.c.l.b16 %v1198
      %v1487 = vunpack.c.l.b16 %v1199
      %v1488 = vunpack.c.l.b16 %v1200
      %v1489 = vunpack.c.l.b16 %v1201
      %v1490 = vunpack.c.l.b16 %v1202
      %v1491 = vunpack.c.l.b16 %v1203
      %v1492 = vunpack.c.l.b16 %v1204
      %v1493 = vunpack.c.l.b16 %v1205
      %v1494 = vunpack.c.l.b16 %v1206
      %v1495 = vunpack.c.l.b16 %v1207
      %v1496 = vunpack.c.l.b16 %v1208
      %v1497 = vunpack.c.l.b16 %v1209
      %v1498 = vunpack.c.l.b16 %v1210
      %v1499 = vunpack.c.l.b16 %v1211
      %v1500 = vunpack.c.l.b16 %v1212
      %v1501 = vunpack.c.l.b16 %v1213
      %v1502 = vpack.c.b16 %v1359, %v1358
      %v1503 = vpack.c.b16 %v1361, %v1360
      %v1504 = vpack.c.b16 %v1363, %v1362
      %v1505 = vpack.c.b16 %v1365, %v1364
      %v1506 = vpack.c.b16 %v1367, %v1366
      %v1507 = vpack.c.b16 %v1369, %v1368
      %v1508 = vpack.c.b16 %v1371, %v1370
      %v1509 = vpack.c.b16 %v1373, %v1372
      %v1510 = vpack.c.b16 %v1375, %v1374
      %v1511 = vpack.c.b16 %v1377, %v1376
      %v1512 = vpack.c.b16 %v1379, %v1378
      %v1513 = vpack.c.b16 %v1381, %v1380
      %v1514 = vpack.c.b16 %v1383, %v1382
      %v1515 = vpack.c.b16 %v1385, %v1384
      %v1516 = vpack.c.b16 %v1387, %v1386
      %v1517 = vpack.c.b16 %v1389, %v1388
      %v1518 = vpack.c.b16 %v1391, %v1390
      %v1519 = vpack.c.b16 %v1393, %v1392
      %v1520 = vpack.c.b16 %v1395, %v1394
      %v1521 = vpack.c.b16 %v1397, %v1396
      %v1522 = vpack.c.b16 %v1399, %v1398
      %v1523 = vpack.c.b16 %v1401, %v1400
      %v1524 = vpack.c.b16 %v1403, %v1402
      %v1525 = vpack.c.b16 %v1405, %v1404
      %v1526 = vpack.c.b16 %v1407, %v1406
      %v1527 = vpack.c.b16 %v1409, %v1408
      %v1528 = vpack.c.b16 %v1411, %v1410
      %v1529 = vpack.c.b16 %v1413, %v1412
      %v1530 = vpack.c.b16 %v1415, %v1414
      %v1531 = vpack.c.b16 %v1417, %v1416
      %v1532 = vpack.c.b16 %v1419, %v1418
      %v1533 = vpack.c.b16 %v1421, %v1420
      %v1534 = vpack.c.b16 %v1423, %v1422
      %v1535 = vpack.c.b16 %v1425, %v1424
      %v1536 = vpack.c.b16 %v1427, %v1426
      %v1537 = vpack.c.b16 %v1429, %v1428
      %v1538 = vpack.c.b16 %v1431, %v1430
      %v1539 = vpack.c.b16 %v1433, %v1432
      %v1540 = vpack.c.b16 %v1435, %v1434
      %v1541 = vpack.c.b16 %v1437, %v1436
      %v1542 = vpack.c.b16 %v1439, %v1438
      %v1543 = vpack.c.b16 %v1441, %v1440
      %v1544 = vpack.c.b16 %v1443, %v1442
      %v1545 = vpack.c.b16 %v1445, %v1444
      %v1546 = vpack.c.b16 %v1447, %v1446
      %v1547 = vpack.c.b16 %v1449, %v1448
      %v1548 = vpack.c.b16 %v1451, %v1450
      %v1549 = vpack.c.b16 %v1453, %v1452
      %v1550 = vpack.c.b16 %v1455, %v1454
      %v1551 = vpack.c.b16 %v1457, %v1456
      %v1552 = vpack.c.b16 %v1459, %v1458
      %v1553 = vpack.c.b16 %v1461, %v1460
      %v1554 = vpack.c.b16 %v1463, %v1462
      %v1555 = vpack.c.b16 %v1465, %v1464
      %v1556 = vpack.c.b16 %v1467, %v1466
      %v1557 = vpack.c.b16 %v1469, %v1468
      %v1558 = vpack.c.b16 %v1471, %v1470
      %v1559 = vpack.c.b16 %v1473, %v1472
      %v1560 = vpack.c.b16 %v1475, %v1474
      %v1561 = vpack.c.b16 %v1477, %v1476
      %v1562 = vpack.c.b16 %v1479, %v1478
      %v1563 = vpack.c.b16 %v1481, %v1480
      %v1564 = vpack.c.b16 %v1483, %v1482
      %v1565 = vpack.c.b16 %v1485, %v1484
      %v1566 = vpack.c.b16 %v1487, %v1486
      %v1567 = vpack.c.b16 %v1489, %v1488
      %v1568 = vpack.c.b16 %v1491, %v1490
      %v1569 = vpack.c.b16 %v1493, %v1492
      %v1570 = vpack.c.b16 %v1495, %v1494
      %v1571 = vpack.c.b16 %v1497, %v1496
      %v1572 = vpack.c.b16 %v1499, %v1498
      %v1573 = vpack.c.b16 %v1501, %v1500
      %1646 = vmatpush.bf16.msra.mxu0 %v1509
      %1647 = vmatpush.bf16.msra.mxu0 %v1508
      %1648 = vmatpush.bf16.msra.mxu0 %v1507
      %1649 = vmatpush.bf16.msra.mxu0 %v1506
      %1650 = vmatpush.bf16.msra.mxu0 %v1505
      %1651 = vmatpush.bf16.msra.mxu0 %v1504
      %1652 = vmatpush.bf16.msra.mxu0 %v1503
      %1653 = vmatpush.bf16.msra.mxu0 %v1502
      %1654 = vmatmul.bf16.gmra.mxu0 %v664
      %v1655 = vpop.f32.mrf.mxu0
      %v1656 = vadd.f32 0.0, %v1655
      %v1657 = vpop.f32.mrf.mxu0
      %v1658 = vadd.f32 0.0, %v1657
      %1659 = vmatmul.bf16.gmra.mxu0 %v665
      %v1660 = vpop.f32.mrf.mxu0
      %v1661 = vadd.f32 0.0, %v1660
      %v1662 = vpop.f32.mrf.mxu0
      %v1663 = vadd.f32 0.0, %v1662
      %1664 = vmatmul.bf16.gmra.mxu0 %v666
      %v1665 = vpop.f32.mrf.mxu0
      %v1666 = vadd.f32 0.0, %v1665
      %v1667 = vpop.f32.mrf.mxu0
      %v1668 = vadd.f32 0.0, %v1667
      %1669 = vmatmul.bf16.gmra.mxu0 %v667
      %v1670 = vpop.f32.mrf.mxu0
      %v1671 = vadd.f32 0.0, %v1670
      %v1672 = vpop.f32.mrf.mxu0
      %v1673 = vadd.f32 0.0, %v1672
      %1674 = vmatmul.bf16.gmra.mxu0 %v668
      %v1675 = vpop.f32.mrf.mxu0
      %v1676 = vadd.f32 0.0, %v1675
      %v1677 = vpop.f32.mrf.mxu0
      %v1678 = vadd.f32 0.0, %v1677
      %1679 = vmatmul.bf16.gmra.mxu0 %v669
      %v1680 = vpop.f32.mrf.mxu0
      %v1681 = vadd.f32 0.0, %v1680
      %v1682 = vpop.f32.mrf.mxu0
      %v1683 = vadd.f32 0.0, %v1682
      %1684 = vmatmul.bf16.gmra.mxu0 %v670
      %v1685 = vpop.f32.mrf.mxu0
      %v1686 = vadd.f32 0.0, %v1685
      %v1687 = vpop.f32.mrf.mxu0
      %v1688 = vadd.f32 0.0, %v1687
      %1689 = vmatmul.bf16.gmra.mxu0 %v671
      %v1690 = vpop.f32.mrf.mxu0
      %v1691 = vadd.f32 0.0, %v1690
      %v1692 = vpop.f32.mrf.mxu0
      %v1693 = vadd.f32 0.0, %v1692
      %1694 = vmatmul.bf16.gmra.mxu0 %v672
      %v1695 = vpop.f32.mrf.mxu0
      %v1696 = vadd.f32 0.0, %v1695
      %v1697 = vpop.f32.mrf.mxu0
      %v1698 = vadd.f32 0.0, %v1697
      %1699 = vmatmul.bf16.gmra.mxu0 %v673
      %v1700 = vpop.f32.mrf.mxu0
      %v1701 = vadd.f32 0.0, %v1700
      %v1702 = vpop.f32.mrf.mxu0
      %v1703 = vadd.f32 0.0, %v1702
      %1704 = vmatmul.bf16.gmra.mxu0 %v674
      %v1705 = vpop.f32.mrf.mxu0
      %v1706 = vadd.f32 0.0, %v1705
      %v1707 = vpop.f32.mrf.mxu0
      %v1708 = vadd.f32 0.0, %v1707
      %1709 = vmatmul.bf16.gmra.mxu0 %v675
      %v1710 = vpop.f32.mrf.mxu0
      %v1711 = vadd.f32 0.0, %v1710
      %v1712 = vpop.f32.mrf.mxu0
      %v1713 = vadd.f32 0.0, %v1712
      %1714 = vmatmul.bf16.gmra.mxu0 %v676
      %v1715 = vpop.f32.mrf.mxu0
      %v1716 = vadd.f32 0.0, %v1715
      %v1717 = vpop.f32.mrf.mxu0
      %v1718 = vadd.f32 0.0, %v1717
      %1719 = vmatmul.bf16.gmra.mxu0 %v677
      %v1720 = vpop.f32.mrf.mxu0
      %v1721 = vadd.f32 0.0, %v1720
      %v1722 = vpop.f32.mrf.mxu0
      %v1723 = vadd.f32 0.0, %v1722
      %1724 = vmatmul.bf16.gmra.mxu0 %v678
      %v1725 = vpop.f32.mrf.mxu0
      %v1726 = vadd.f32 0.0, %v1725
      %v1727 = vpop.f32.mrf.mxu0
      %v1728 = vadd.f32 0.0, %v1727
      %1729 = vmatmul.bf16.gmra.mxu0 %v679
      %v1730 = vpop.f32.mrf.mxu0
      %v1731 = vadd.f32 0.0, %v1730
      %v1732 = vpop.f32.mrf.mxu0
      %v1733 = vadd.f32 0.0, %v1732
      %1734 = vdwg.mxu0
      %1735 = vmatpush.bf16.msra.mxu0 %v1517
      %1736 = vmatpush.bf16.msra.mxu0 %v1516
      %1737 = vmatpush.bf16.msra.mxu0 %v1515
      %1738 = vmatpush.bf16.msra.mxu0 %v1514
      %1739 = vmatpush.bf16.msra.mxu0 %v1513
      %1740 = vmatpush.bf16.msra.mxu0 %v1512
      %1741 = vmatpush.bf16.msra.mxu0 %v1511
      %1742 = vmatpush.bf16.msra.mxu0 %v1510
      %1743 = vmatmul.bf16.gmra.mxu0 %v756
      %v1744 = vpop.f32.mrf.mxu0
      %v1745 = vadd.f32 %v1656, %v1744
      %v1746 = vpop.f32.mrf.mxu0
      %v1747 = vadd.f32 %v1658, %v1746
      %1748 = vmatmul.bf16.gmra.mxu0 %v768
      %v1749 = vpop.f32.mrf.mxu0
      %v1750 = vadd.f32 %v1661, %v1749
      %v1751 = vpop.f32.mrf.mxu0
      %v1752 = vadd.f32 %v1663, %v1751
      %1753 = vmatmul.bf16.gmra.mxu0 %v780
      %v1754 = vpop.f32.mrf.mxu0
      %v1755 = vadd.f32 %v1666, %v1754
      %v1756 = vpop.f32.mrf.mxu0
      %v1757 = vadd.f32 %v1668, %v1756
      %1758 = vmatmul.bf16.gmra.mxu0 %v792
      %v1759 = vpop.f32.mrf.mxu0
      %v1760 = vadd.f32 %v1671, %v1759
      %v1761 = vpop.f32.mrf.mxu0
      %v1762 = vadd.f32 %v1673, %v1761
      %1763 = vmatmul.bf16.gmra.mxu0 %v804
      %v1764 = vpop.f32.mrf.mxu0
      %v1765 = vadd.f32 %v1676, %v1764
      %v1766 = vpop.f32.mrf.mxu0
      %v1767 = vadd.f32 %v1678, %v1766
      %1768 = vmatmul.bf16.gmra.mxu0 %v816
      %v1769 = vpop.f32.mrf.mxu0
      %v1770 = vadd.f32 %v1681, %v1769
      %v1771 = vpop.f32.mrf.mxu0
      %v1772 = vadd.f32 %v1683, %v1771
      %1773 = vmatmul.bf16.gmra.mxu0 %v828
      %v1774 = vpop.f32.mrf.mxu0
      %v1775 = vadd.f32 %v1686, %v1774
      %v1776 = vpop.f32.mrf.mxu0
      %v1777 = vadd.f32 %v1688, %v1776
      %1778 = vmatmul.bf16.gmra.mxu0 %v840
      %v1779 = vpop.f32.mrf.mxu0
      %v1780 = vadd.f32 %v1691, %v1779
      %v1781 = vpop.f32.mrf.mxu0
      %v1782 = vadd.f32 %v1693, %v1781
      %1783 = vmatmul.bf16.gmra.mxu0 %v852
      %v1784 = vpop.f32.mrf.mxu0
      %v1785 = vadd.f32 %v1696, %v1784
      %v1786 = vpop.f32.mrf.mxu0
      %v1787 = vadd.f32 %v1698, %v1786
      %1788 = vmatmul.bf16.gmra.mxu0 %v864
      %v1789 = vpop.f32.mrf.mxu0
      %v1790 = vadd.f32 %v1701, %v1789
      %v1791 = vpop.f32.mrf.mxu0
      %v1792 = vadd.f32 %v1703, %v1791
      %1793 = vmatmul.bf16.gmra.mxu0 %v876
      %v1794 = vpop.f32.mrf.mxu0
      %v1795 = vadd.f32 %v1706, %v1794
      %v1796 = vpop.f32.mrf.mxu0
      %v1797 = vadd.f32 %v1708, %v1796
      %1798 = vmatmul.bf16.gmra.mxu0 %v888
      %v1799 = vpop.f32.mrf.mxu0
      %v1800 = vadd.f32 %v1711, %v1799
      %v1801 = vpop.f32.mrf.mxu0
      %v1802 = vadd.f32 %v1713, %v1801
      %1803 = vmatmul.bf16.gmra.mxu0 %v900
      %v1804 = vpop.f32.mrf.mxu0
      %v1805 = vadd.f32 %v1716, %v1804
      %v1806 = vpop.f32.mrf.mxu0
      %v1807 = vadd.f32 %v1718, %v1806
      %1808 = vmatmul.bf16.gmra.mxu0 %v912
      %v1809 = vpop.f32.mrf.mxu0
      %v1810 = vadd.f32 %v1721, %v1809
      %v1811 = vpop.f32.mrf.mxu0
      %v1812 = vadd.f32 %v1723, %v1811
      %1813 = vmatmul.bf16.gmra.mxu0 %v924
      %v1814 = vpop.f32.mrf.mxu0
      %v1815 = vadd.f32 %v1726, %v1814
      %v1816 = vpop.f32.mrf.mxu0
      %v1817 = vadd.f32 %v1728, %v1816
      %1818 = vmatmul.bf16.gmra.mxu0 %v936
      %v1819 = vpop.f32.mrf.mxu0
      %v1820 = vadd.f32 %v1731, %v1819
      %v1821 = vpop.f32.mrf.mxu0
      %v1822 = vadd.f32 %v1733, %v1821
      %1823 = vdwg.mxu0
      %1824 = vmatpush.bf16.msra.mxu0 %v1525
      %1825 = vmatpush.bf16.msra.mxu0 %v1524
      %1826 = vmatpush.bf16.msra.mxu0 %v1523
      %1827 = vmatpush.bf16.msra.mxu0 %v1522
      %1828 = vmatpush.bf16.msra.mxu0 %v1521
      %1829 = vmatpush.bf16.msra.mxu0 %v1520
      %1830 = vmatpush.bf16.msra.mxu0 %v1519
      %1831 = vmatpush.bf16.msra.mxu0 %v1518
      %1832 = vmatmul.bf16.gmra.mxu0 %v956
      %v1833 = vpop.f32.mrf.mxu0
      %v1834 = vadd.f32 %v1745, %v1833
      %v1835 = vpop.f32.mrf.mxu0
      %v1836 = vadd.f32 %v1747, %v1835
      %1837 = vmatmul.bf16.gmra.mxu0 %v959
      %v1838 = vpop.f32.mrf.mxu0
      %v1839 = vadd.f32 %v1750, %v1838
      %v1840 = vpop.f32.mrf.mxu0
      %v1841 = vadd.f32 %v1752, %v1840
      %1842 = vmatmul.bf16.gmra.mxu0 %v962
      %v1843 = vpop.f32.mrf.mxu0
      %v1844 = vadd.f32 %v1755, %v1843
      %v1845 = vpop.f32.mrf.mxu0
      %v1846 = vadd.f32 %v1757, %v1845
      %1847 = vmatmul.bf16.gmra.mxu0 %v965
      %v1848 = vpop.f32.mrf.mxu0
      %v1849 = vadd.f32 %v1760, %v1848
      %v1850 = vpop.f32.mrf.mxu0
      %v1851 = vadd.f32 %v1762, %v1850
      %1852 = vmatmul.bf16.gmra.mxu0 %v968
      %v1853 = vpop.f32.mrf.mxu0
      %v1854 = vadd.f32 %v1765, %v1853
      %v1855 = vpop.f32.mrf.mxu0
      %v1856 = vadd.f32 %v1767, %v1855
      %1857 = vmatmul.bf16.gmra.mxu0 %v971
      %v1858 = vpop.f32.mrf.mxu0
      %v1859 = vadd.f32 %v1770, %v1858
      %v1860 = vpop.f32.mrf.mxu0
      %v1861 = vadd.f32 %v1772, %v1860
      %1862 = vmatmul.bf16.gmra.mxu0 %v974
      %v1863 = vpop.f32.mrf.mxu0
      %v1864 = vadd.f32 %v1775, %v1863
      %v1865 = vpop.f32.mrf.mxu0
      %v1866 = vadd.f32 %v1777, %v1865
      %1867 = vmatmul.bf16.gmra.mxu0 %v977
      %v1868 = vpop.f32.mrf.mxu0
      %v1869 = vadd.f32 %v1780, %v1868
      %v1870 = vpop.f32.mrf.mxu0
      %v1871 = vadd.f32 %v1782, %v1870
      %1872 = vmatmul.bf16.gmra.mxu0 %v980
      %v1873 = vpop.f32.mrf.mxu0
      %v1874 = vadd.f32 %v1785, %v1873
      %v1875 = vpop.f32.mrf.mxu0
      %v1876 = vadd.f32 %v1787, %v1875
      %1877 = vmatmul.bf16.gmra.mxu0 %v983
      %v1878 = vpop.f32.mrf.mxu0
      %v1879 = vadd.f32 %v1790, %v1878
      %v1880 = vpop.f32.mrf.mxu0
      %v1881 = vadd.f32 %v1792, %v1880
      %1882 = vmatmul.bf16.gmra.mxu0 %v986
      %v1883 = vpop.f32.mrf.mxu0
      %v1884 = vadd.f32 %v1795, %v1883
      %v1885 = vpop.f32.mrf.mxu0
      %v1886 = vadd.f32 %v1797, %v1885
      %1887 = vmatmul.bf16.gmra.mxu0 %v989
      %v1888 = vpop.f32.mrf.mxu0
      %v1889 = vadd.f32 %v1800, %v1888
      %v1890 = vpop.f32.mrf.mxu0
      %v1891 = vadd.f32 %v1802, %v1890
      %1892 = vmatmul.bf16.gmra.mxu0 %v992
      %v1893 = vpop.f32.mrf.mxu0
      %v1894 = vadd.f32 %v1805, %v1893
      %v1895 = vpop.f32.mrf.mxu0
      %v1896 = vadd.f32 %v1807, %v1895
      %1897 = vmatmul.bf16.gmra.mxu0 %v995
      %v1898 = vpop.f32.mrf.mxu0
      %v1899 = vadd.f32 %v1810, %v1898
      %v1900 = vpop.f32.mrf.mxu0
      %v1901 = vadd.f32 %v1812, %v1900
      %1902 = vmatmul.bf16.gmra.mxu0 %v998
      %v1903 = vpop.f32.mrf.mxu0
      %v1904 = vadd.f32 %v1815, %v1903
      %v1905 = vpop.f32.mrf.mxu0
      %v1906 = vadd.f32 %v1817, %v1905
      %1907 = vmatmul.bf16.gmra.mxu0 %v1001
      %v1908 = vpop.f32.mrf.mxu0
      %v1909 = vadd.f32 %v1820, %v1908
      %v1910 = vpop.f32.mrf.mxu0
      %v1911 = vadd.f32 %v1822, %v1910
      %1912 = vdwg.mxu0
      %1913 = vmatpush.bf16.msra.mxu0 %v1533
      %1914 = vmatpush.bf16.msra.mxu0 %v1532
      %1915 = vmatpush.bf16.msra.mxu0 %v1531
      %1916 = vmatpush.bf16.msra.mxu0 %v1530
      %1917 = vmatpush.bf16.msra.mxu0 %v1529
      %1918 = vmatpush.bf16.msra.mxu0 %v1528
      %1919 = vmatpush.bf16.msra.mxu0 %v1527
      %1920 = vmatpush.bf16.msra.mxu0 %v1526
      %1921 = vmatmul.bf16.gmra.mxu0 %v665
      %v1922 = vpop.f32.mrf.mxu0
      %v1923 = vadd.f32 %v1834, %v1922
      %v1924 = vpop.f32.mrf.mxu0
      %v1925 = vadd.f32 %v1836, %v1924
      %1926 = vmatmul.bf16.gmra.mxu0 %v666
      %v1927 = vpop.f32.mrf.mxu0
      %v1928 = vadd.f32 %v1839, %v1927
      %v1929 = vpop.f32.mrf.mxu0
      %v1930 = vadd.f32 %v1841, %v1929
      %1931 = vmatmul.bf16.gmra.mxu0 %v667
      %v1932 = vpop.f32.mrf.mxu0
      %v1933 = vadd.f32 %v1844, %v1932
      %v1934 = vpop.f32.mrf.mxu0
      %v1935 = vadd.f32 %v1846, %v1934
      %1936 = vmatmul.bf16.gmra.mxu0 %v668
      %v1937 = vpop.f32.mrf.mxu0
      %v1938 = vadd.f32 %v1849, %v1937
      %v1939 = vpop.f32.mrf.mxu0
      %v1940 = vadd.f32 %v1851, %v1939
      %1941 = vmatmul.bf16.gmra.mxu0 %v669
      %v1942 = vpop.f32.mrf.mxu0
      %v1943 = vadd.f32 %v1854, %v1942
      %v1944 = vpop.f32.mrf.mxu0
      %v1945 = vadd.f32 %v1856, %v1944
      %1946 = vmatmul.bf16.gmra.mxu0 %v670
      %v1947 = vpop.f32.mrf.mxu0
      %v1948 = vadd.f32 %v1859, %v1947
      %v1949 = vpop.f32.mrf.mxu0
      %v1950 = vadd.f32 %v1861, %v1949
      %1951 = vmatmul.bf16.gmra.mxu0 %v671
      %v1952 = vpop.f32.mrf.mxu0
      %v1953 = vadd.f32 %v1864, %v1952
      %v1954 = vpop.f32.mrf.mxu0
      %v1955 = vadd.f32 %v1866, %v1954
      %1956 = vmatmul.bf16.gmra.mxu0 %v672
      %v1957 = vpop.f32.mrf.mxu0
      %v1958 = vadd.f32 %v1869, %v1957
      %v1959 = vpop.f32.mrf.mxu0
      %v1960 = vadd.f32 %v1871, %v1959
      %1961 = vmatmul.bf16.gmra.mxu0 %v673
      %v1962 = vpop.f32.mrf.mxu0
      %v1963 = vadd.f32 %v1874, %v1962
      %v1964 = vpop.f32.mrf.mxu0
      %v1965 = vadd.f32 %v1876, %v1964
      %1966 = vmatmul.bf16.gmra.mxu0 %v674
      %v1967 = vpop.f32.mrf.mxu0
      %v1968 = vadd.f32 %v1879, %v1967
      %v1969 = vpop.f32.mrf.mxu0
      %v1970 = vadd.f32 %v1881, %v1969
      %1971 = vmatmul.bf16.gmra.mxu0 %v675
      %v1972 = vpop.f32.mrf.mxu0
      %v1973 = vadd.f32 %v1884, %v1972
      %v1974 = vpop.f32.mrf.mxu0
      %v1975 = vadd.f32 %v1886, %v1974
      %1976 = vmatmul.bf16.gmra.mxu0 %v676
      %v1977 = vpop.f32.mrf.mxu0
      %v1978 = vadd.f32 %v1889, %v1977
      %v1979 = vpop.f32.mrf.mxu0
      %v1980 = vadd.f32 %v1891, %v1979
      %1981 = vmatmul.bf16.gmra.mxu0 %v677
      %v1982 = vpop.f32.mrf.mxu0
      %v1983 = vadd.f32 %v1894, %v1982
      %v1984 = vpop.f32.mrf.mxu0
      %v1985 = vadd.f32 %v1896, %v1984
      %1986 = vmatmul.bf16.gmra.mxu0 %v678
      %v1987 = vpop.f32.mrf.mxu0
      %v1988 = vadd.f32 %v1899, %v1987
      %v1989 = vpop.f32.mrf.mxu0
      %v1990 = vadd.f32 %v1901, %v1989
      %1991 = vmatmul.bf16.gmra.mxu0 %v679
      %v1992 = vpop.f32.mrf.mxu0
      %v1993 = vadd.f32 %v1904, %v1992
      %v1994 = vpop.f32.mrf.mxu0
      %v1995 = vadd.f32 %v1906, %v1994
      %1996 = vmatmul.bf16.gmra.mxu0 %v1022
      %v1997 = vpop.f32.mrf.mxu0
      %v1998 = vadd.f32 %v1909, %v1997
      %v1999 = vpop.f32.mrf.mxu0
      %v2000 = vadd.f32 %v1911, %v1999
      %2001 = vdwg.mxu0
      %2002 = vmatpush.bf16.msra.mxu0 %v1541
      %2003 = vmatpush.bf16.msra.mxu0 %v1540
      %2004 = vmatpush.bf16.msra.mxu0 %v1539
      %2005 = vmatpush.bf16.msra.mxu0 %v1538
      %2006 = vmatpush.bf16.msra.mxu0 %v1537
      %2007 = vmatpush.bf16.msra.mxu0 %v1536
      %2008 = vmatpush.bf16.msra.mxu0 %v1535
      %2009 = vmatpush.bf16.msra.mxu0 %v1534
      %2010 = vmatmul.bf16.gmra.mxu0 %v768
      %v2011 = vpop.f32.mrf.mxu0
      %v2012 = vadd.f32 %v1923, %v2011
      %v2013 = vpop.f32.mrf.mxu0
      %v2014 = vadd.f32 %v1925, %v2013
      %2015 = vmatmul.bf16.gmra.mxu0 %v780
      %v2016 = vpop.f32.mrf.mxu0
      %v2017 = vadd.f32 %v1928, %v2016
      %v2018 = vpop.f32.mrf.mxu0
      %v2019 = vadd.f32 %v1930, %v2018
      %2020 = vmatmul.bf16.gmra.mxu0 %v792
      %v2021 = vpop.f32.mrf.mxu0
      %v2022 = vadd.f32 %v1933, %v2021
      %v2023 = vpop.f32.mrf.mxu0
      %v2024 = vadd.f32 %v1935, %v2023
      %2025 = vmatmul.bf16.gmra.mxu0 %v804
      %v2026 = vpop.f32.mrf.mxu0
      %v2027 = vadd.f32 %v1938, %v2026
      %v2028 = vpop.f32.mrf.mxu0
      %v2029 = vadd.f32 %v1940, %v2028
      %2030 = vmatmul.bf16.gmra.mxu0 %v816
      %v2031 = vpop.f32.mrf.mxu0
      %v2032 = vadd.f32 %v1943, %v2031
      %v2033 = vpop.f32.mrf.mxu0
      %v2034 = vadd.f32 %v1945, %v2033
      %2035 = vmatmul.bf16.gmra.mxu0 %v828
      %v2036 = vpop.f32.mrf.mxu0
      %v2037 = vadd.f32 %v1948, %v2036
      %v2038 = vpop.f32.mrf.mxu0
      %v2039 = vadd.f32 %v1950, %v2038
      %2040 = vmatmul.bf16.gmra.mxu0 %v840
      %v2041 = vpop.f32.mrf.mxu0
      %v2042 = vadd.f32 %v1953, %v2041
      %v2043 = vpop.f32.mrf.mxu0
      %v2044 = vadd.f32 %v1955, %v2043
      %2045 = vmatmul.bf16.gmra.mxu0 %v852
      %v2046 = vpop.f32.mrf.mxu0
      %v2047 = vadd.f32 %v1958, %v2046
      %v2048 = vpop.f32.mrf.mxu0
      %v2049 = vadd.f32 %v1960, %v2048
      %2050 = vmatmul.bf16.gmra.mxu0 %v864
      %v2051 = vpop.f32.mrf.mxu0
      %v2052 = vadd.f32 %v1963, %v2051
      %v2053 = vpop.f32.mrf.mxu0
      %v2054 = vadd.f32 %v1965, %v2053
      %2055 = vmatmul.bf16.gmra.mxu0 %v876
      %v2056 = vpop.f32.mrf.mxu0
      %v2057 = vadd.f32 %v1968, %v2056
      %v2058 = vpop.f32.mrf.mxu0
      %v2059 = vadd.f32 %v1970, %v2058
      %2060 = vmatmul.bf16.gmra.mxu0 %v888
      %v2061 = vpop.f32.mrf.mxu0
      %v2062 = vadd.f32 %v1973, %v2061
      %v2063 = vpop.f32.mrf.mxu0
      %v2064 = vadd.f32 %v1975, %v2063
      %2065 = vmatmul.bf16.gmra.mxu0 %v900
      %v2066 = vpop.f32.mrf.mxu0
      %v2067 = vadd.f32 %v1978, %v2066
      %v2068 = vpop.f32.mrf.mxu0
      %v2069 = vadd.f32 %v1980, %v2068
      %2070 = vmatmul.bf16.gmra.mxu0 %v912
      %v2071 = vpop.f32.mrf.mxu0
      %v2072 = vadd.f32 %v1983, %v2071
      %v2073 = vpop.f32.mrf.mxu0
      %v2074 = vadd.f32 %v1985, %v2073
      %2075 = vmatmul.bf16.gmra.mxu0 %v924
      %v2076 = vpop.f32.mrf.mxu0
      %v2077 = vadd.f32 %v1988, %v2076
      %v2078 = vpop.f32.mrf.mxu0
      %v2079 = vadd.f32 %v1990, %v2078
      %2080 = vmatmul.bf16.gmra.mxu0 %v936
      %v2081 = vpop.f32.mrf.mxu0
      %v2082 = vadd.f32 %v1993, %v2081
      %v2083 = vpop.f32.mrf.mxu0
      %v2084 = vadd.f32 %v1995, %v2083
      %2085 = vmatmul.bf16.gmra.mxu0 %v1038
      %v2086 = vpop.f32.mrf.mxu0
      %v2087 = vadd.f32 %v1998, %v2086
      %v2088 = vpop.f32.mrf.mxu0
      %v2089 = vadd.f32 %v2000, %v2088
      %2090 = vdwg.mxu0
      %2091 = vmatpush.bf16.msra.mxu0 %v1549
      %2092 = vmatpush.bf16.msra.mxu0 %v1548
      %2093 = vmatpush.bf16.msra.mxu0 %v1547
      %2094 = vmatpush.bf16.msra.mxu0 %v1546
      %2095 = vmatpush.bf16.msra.mxu0 %v1545
      %2096 = vmatpush.bf16.msra.mxu0 %v1544
      %2097 = vmatpush.bf16.msra.mxu0 %v1543
      %2098 = vmatpush.bf16.msra.mxu0 %v1542
      %2099 = vmatmul.bf16.gmra.mxu0 %v959
      %v2100 = vpop.f32.mrf.mxu0
      %v2101 = vadd.f32 %v2012, %v2100
      %v2102 = vpop.f32.mrf.mxu0
      %v2103 = vadd.f32 %v2014, %v2102
      %2104 = vmatmul.bf16.gmra.mxu0 %v962
      %v2105 = vpop.f32.mrf.mxu0
      %v2106 = vadd.f32 %v2017, %v2105
      %v2107 = vpop.f32.mrf.mxu0
      %v2108 = vadd.f32 %v2019, %v2107
      %2109 = vmatmul.bf16.gmra.mxu0 %v965
      %v2110 = vpop.f32.mrf.mxu0
      %v2111 = vadd.f32 %v2022, %v2110
      %v2112 = vpop.f32.mrf.mxu0
      %v2113 = vadd.f32 %v2024, %v2112
      %2114 = vmatmul.bf16.gmra.mxu0 %v968
      %v2115 = vpop.f32.mrf.mxu0
      %v2116 = vadd.f32 %v2027, %v2115
      %v2117 = vpop.f32.mrf.mxu0
      %v2118 = vadd.f32 %v2029, %v2117
      %2119 = vmatmul.bf16.gmra.mxu0 %v971
      %v2120 = vpop.f32.mrf.mxu0
      %v2121 = vadd.f32 %v2032, %v2120
      %v2122 = vpop.f32.mrf.mxu0
      %v2123 = vadd.f32 %v2034, %v2122
      %2124 = vmatmul.bf16.gmra.mxu0 %v974
      %v2125 = vpop.f32.mrf.mxu0
      %v2126 = vadd.f32 %v2037, %v2125
      %v2127 = vpop.f32.mrf.mxu0
      %v2128 = vadd.f32 %v2039, %v2127
      %2129 = vmatmul.bf16.gmra.mxu0 %v977
      %v2130 = vpop.f32.mrf.mxu0
      %v2131 = vadd.f32 %v2042, %v2130
      %v2132 = vpop.f32.mrf.mxu0
      %v2133 = vadd.f32 %v2044, %v2132
      %2134 = vmatmul.bf16.gmra.mxu0 %v980
      %v2135 = vpop.f32.mrf.mxu0
      %v2136 = vadd.f32 %v2047, %v2135
      %v2137 = vpop.f32.mrf.mxu0
      %v2138 = vadd.f32 %v2049, %v2137
      %2139 = vmatmul.bf16.gmra.mxu0 %v983
      %v2140 = vpop.f32.mrf.mxu0
      %v2141 = vadd.f32 %v2052, %v2140
      %v2142 = vpop.f32.mrf.mxu0
      %v2143 = vadd.f32 %v2054, %v2142
      %2144 = vmatmul.bf16.gmra.mxu0 %v986
      %v2145 = vpop.f32.mrf.mxu0
      %v2146 = vadd.f32 %v2057, %v2145
      %v2147 = vpop.f32.mrf.mxu0
      %v2148 = vadd.f32 %v2059, %v2147
      %2149 = vmatmul.bf16.gmra.mxu0 %v989
      %v2150 = vpop.f32.mrf.mxu0
      %v2151 = vadd.f32 %v2062, %v2150
      %v2152 = vpop.f32.mrf.mxu0
      %v2153 = vadd.f32 %v2064, %v2152
      %2154 = vmatmul.bf16.gmra.mxu0 %v992
      %v2155 = vpop.f32.mrf.mxu0
      %v2156 = vadd.f32 %v2067, %v2155
      %v2157 = vpop.f32.mrf.mxu0
      %v2158 = vadd.f32 %v2069, %v2157
      %2159 = vmatmul.bf16.gmra.mxu0 %v995
      %v2160 = vpop.f32.mrf.mxu0
      %v2161 = vadd.f32 %v2072, %v2160
      %v2162 = vpop.f32.mrf.mxu0
      %v2163 = vadd.f32 %v2074, %v2162
      %2164 = vmatmul.bf16.gmra.mxu0 %v998
      %v2165 = vpop.f32.mrf.mxu0
      %v2166 = vadd.f32 %v2077, %v2165
      %v2167 = vpop.f32.mrf.mxu0
      %v2168 = vadd.f32 %v2079, %v2167
      %2169 = vmatmul.bf16.gmra.mxu0 %v1001
      %v2170 = vpop.f32.mrf.mxu0
      %v2171 = vadd.f32 %v2082, %v2170
      %v2172 = vpop.f32.mrf.mxu0
      %v2173 = vadd.f32 %v2084, %v2172
      %2174 = vmatmul.bf16.gmra.mxu0 %v1042
      %v2175 = vpop.f32.mrf.mxu0
      %v2176 = vadd.f32 %v2087, %v2175
      %v2177 = vpop.f32.mrf.mxu0
      %v2178 = vadd.f32 %v2089, %v2177
      %2179 = vdwg.mxu0
      %2180 = vmatpush.bf16.msra.mxu0 %v1557
      %2181 = vmatpush.bf16.msra.mxu0 %v1556
      %2182 = vmatpush.bf16.msra.mxu0 %v1555
      %2183 = vmatpush.bf16.msra.mxu0 %v1554
      %2184 = vmatpush.bf16.msra.mxu0 %v1553
      %2185 = vmatpush.bf16.msra.mxu0 %v1552
      %2186 = vmatpush.bf16.msra.mxu0 %v1551
      %2187 = vmatpush.bf16.msra.mxu0 %v1550
      %2188 = vmatmul.bf16.gmra.mxu0 %v666
      %v2189 = vpop.f32.mrf.mxu0
      %v2190 = vadd.f32 %v2101, %v2189
      %v2191 = vpop.f32.mrf.mxu0
      %v2192 = vadd.f32 %v2103, %v2191
      %2193 = vmatmul.bf16.gmra.mxu0 %v667
      %v2194 = vpop.f32.mrf.mxu0
      %v2195 = vadd.f32 %v2106, %v2194
      %v2196 = vpop.f32.mrf.mxu0
      %v2197 = vadd.f32 %v2108, %v2196
      %2198 = vmatmul.bf16.gmra.mxu0 %v668
      %v2199 = vpop.f32.mrf.mxu0
      %v2200 = vadd.f32 %v2111, %v2199
      %v2201 = vpop.f32.mrf.mxu0
      %v2202 = vadd.f32 %v2113, %v2201
      %2203 = vmatmul.bf16.gmra.mxu0 %v669
      %v2204 = vpop.f32.mrf.mxu0
      %v2205 = vadd.f32 %v2116, %v2204
      %v2206 = vpop.f32.mrf.mxu0
      %v2207 = vadd.f32 %v2118, %v2206
      %2208 = vmatmul.bf16.gmra.mxu0 %v670
      %v2209 = vpop.f32.mrf.mxu0
      %v2210 = vadd.f32 %v2121, %v2209
      %v2211 = vpop.f32.mrf.mxu0
      %v2212 = vadd.f32 %v2123, %v2211
      %2213 = vmatmul.bf16.gmra.mxu0 %v671
      %v2214 = vpop.f32.mrf.mxu0
      %v2215 = vadd.f32 %v2126, %v2214
      %v2216 = vpop.f32.mrf.mxu0
      %v2217 = vadd.f32 %v2128, %v2216
      %2218 = vmatmul.bf16.gmra.mxu0 %v672
      %v2219 = vpop.f32.mrf.mxu0
      %v2220 = vadd.f32 %v2131, %v2219
      %v2221 = vpop.f32.mrf.mxu0
      %v2222 = vadd.f32 %v2133, %v2221
      %2223 = vmatmul.bf16.gmra.mxu0 %v673
      %v2224 = vpop.f32.mrf.mxu0
      %v2225 = vadd.f32 %v2136, %v2224
      %v2226 = vpop.f32.mrf.mxu0
      %v2227 = vadd.f32 %v2138, %v2226
      %2228 = vmatmul.bf16.gmra.mxu0 %v674
      %v2229 = vpop.f32.mrf.mxu0
      %v2230 = vadd.f32 %v2141, %v2229
      %v2231 = vpop.f32.mrf.mxu0
      %v2232 = vadd.f32 %v2143, %v2231
      %2233 = vmatmul.bf16.gmra.mxu0 %v675
      %v2234 = vpop.f32.mrf.mxu0
      %v2235 = vadd.f32 %v2146, %v2234
      %v2236 = vpop.f32.mrf.mxu0
      %v2237 = vadd.f32 %v2148, %v2236
      %2238 = vmatmul.bf16.gmra.mxu0 %v676
      %v2239 = vpop.f32.mrf.mxu0
      %v2240 = vadd.f32 %v2151, %v2239
      %v2241 = vpop.f32.mrf.mxu0
      %v2242 = vadd.f32 %v2153, %v2241
      %2243 = vmatmul.bf16.gmra.mxu0 %v677
      %v2244 = vpop.f32.mrf.mxu0
      %v2245 = vadd.f32 %v2156, %v2244
      %v2246 = vpop.f32.mrf.mxu0
      %v2247 = vadd.f32 %v2158, %v2246
      %2248 = vmatmul.bf16.gmra.mxu0 %v678
      %v2249 = vpop.f32.mrf.mxu0
      %v2250 = vadd.f32 %v2161, %v2249
      %v2251 = vpop.f32.mrf.mxu0
      %v2252 = vadd.f32 %v2163, %v2251
      %2253 = vmatmul.bf16.gmra.mxu0 %v679
      %v2254 = vpop.f32.mrf.mxu0
      %v2255 = vadd.f32 %v2166, %v2254
      %v2256 = vpop.f32.mrf.mxu0
      %v2257 = vadd.f32 %v2168, %v2256
      %2258 = vmatmul.bf16.gmra.mxu0 %v1022
      %v2259 = vpop.f32.mrf.mxu0
      %v2260 = vadd.f32 %v2171, %v2259
      %v2261 = vpop.f32.mrf.mxu0
      %v2262 = vadd.f32 %v2173, %v2261
      %2263 = vmatmul.bf16.gmra.mxu0 %v1048
      %v2264 = vpop.f32.mrf.mxu0
      %v2265 = vadd.f32 %v2176, %v2264
      %v2266 = vpop.f32.mrf.mxu0
      %v2267 = vadd.f32 %v2178, %v2266
      %2268 = vdwg.mxu0
      %2269 = vmatpush.bf16.msra.mxu0 %v1565
      %2270 = vmatpush.bf16.msra.mxu0 %v1564
      %2271 = vmatpush.bf16.msra.mxu0 %v1563
      %2272 = vmatpush.bf16.msra.mxu0 %v1562
      %2273 = vmatpush.bf16.msra.mxu0 %v1561
      %2274 = vmatpush.bf16.msra.mxu0 %v1560
      %2275 = vmatpush.bf16.msra.mxu0 %v1559
      %2276 = vmatpush.bf16.msra.mxu0 %v1558
      %2277 = vmatmul.bf16.gmra.mxu0 %v780
      %v2278 = vpop.f32.mrf.mxu0
      %v2279 = vadd.f32 %v2190, %v2278
      %v2280 = vpop.f32.mrf.mxu0
      %v2281 = vadd.f32 %v2192, %v2280
      %2282 = vmatmul.bf16.gmra.mxu0 %v792
      %v2283 = vpop.f32.mrf.mxu0
      %v2284 = vadd.f32 %v2195, %v2283
      %v2285 = vpop.f32.mrf.mxu0
      %v2286 = vadd.f32 %v2197, %v2285
      %2287 = vmatmul.bf16.gmra.mxu0 %v804
      %v2288 = vpop.f32.mrf.mxu0
      %v2289 = vadd.f32 %v2200, %v2288
      %v2290 = vpop.f32.mrf.mxu0
      %v2291 = vadd.f32 %v2202, %v2290
      %2292 = vmatmul.bf16.gmra.mxu0 %v816
      %v2293 = vpop.f32.mrf.mxu0
      %v2294 = vadd.f32 %v2205, %v2293
      %v2295 = vpop.f32.mrf.mxu0
      %v2296 = vadd.f32 %v2207, %v2295
      %2297 = vmatmul.bf16.gmra.mxu0 %v828
      %v2298 = vpop.f32.mrf.mxu0
      %v2299 = vadd.f32 %v2210, %v2298
      %v2300 = vpop.f32.mrf.mxu0
      %v2301 = vadd.f32 %v2212, %v2300
      %2302 = vmatmul.bf16.gmra.mxu0 %v840
      %v2303 = vpop.f32.mrf.mxu0
      %v2304 = vadd.f32 %v2215, %v2303
      %v2305 = vpop.f32.mrf.mxu0
      %v2306 = vadd.f32 %v2217, %v2305
      %2307 = vmatmul.bf16.gmra.mxu0 %v852
      %v2308 = vpop.f32.mrf.mxu0
      %v2309 = vadd.f32 %v2220, %v2308
      %v2310 = vpop.f32.mrf.mxu0
      %v2311 = vadd.f32 %v2222, %v2310
      %2312 = vmatmul.bf16.gmra.mxu0 %v864
      %v2313 = vpop.f32.mrf.mxu0
      %v2314 = vadd.f32 %v2225, %v2313
      %v2315 = vpop.f32.mrf.mxu0
      %v2316 = vadd.f32 %v2227, %v2315
      %2317 = vmatmul.bf16.gmra.mxu0 %v876
      %v2318 = vpop.f32.mrf.mxu0
      %v2319 = vadd.f32 %v2230, %v2318
      %v2320 = vpop.f32.mrf.mxu0
      %v2321 = vadd.f32 %v2232, %v2320
      %2322 = vmatmul.bf16.gmra.mxu0 %v888
      %v2323 = vpop.f32.mrf.mxu0
      %v2324 = vadd.f32 %v2235, %v2323
      %v2325 = vpop.f32.mrf.mxu0
      %v2326 = vadd.f32 %v2237, %v2325
      %2327 = vmatmul.bf16.gmra.mxu0 %v900
      %v2328 = vpop.f32.mrf.mxu0
      %v2329 = vadd.f32 %v2240, %v2328
      %v2330 = vpop.f32.mrf.mxu0
      %v2331 = vadd.f32 %v2242, %v2330
      %2332 = vmatmul.bf16.gmra.mxu0 %v912
      %v2333 = vpop.f32.mrf.mxu0
      %v2334 = vadd.f32 %v2245, %v2333
      %v2335 = vpop.f32.mrf.mxu0
      %v2336 = vadd.f32 %v2247, %v2335
      %2337 = vmatmul.bf16.gmra.mxu0 %v924
      %v2338 = vpop.f32.mrf.mxu0
      %v2339 = vadd.f32 %v2250, %v2338
      %v2340 = vpop.f32.mrf.mxu0
      %v2341 = vadd.f32 %v2252, %v2340
      %2342 = vmatmul.bf16.gmra.mxu0 %v936
      %v2343 = vpop.f32.mrf.mxu0
      %v2344 = vadd.f32 %v2255, %v2343
      %v2345 = vpop.f32.mrf.mxu0
      %v2346 = vadd.f32 %v2257, %v2345
      %2347 = vmatmul.bf16.gmra.mxu0 %v1038
      %v2348 = vpop.f32.mrf.mxu0
      %v2349 = vadd.f32 %v2260, %v2348
      %v2350 = vpop.f32.mrf.mxu0
      %v2351 = vadd.f32 %v2262, %v2350
      %2352 = vmatmul.bf16.gmra.mxu0 %v1064
      %v2353 = vpop.f32.mrf.mxu0
      %v2354 = vadd.f32 %v2265, %v2353
      %v2355 = vpop.f32.mrf.mxu0
      %v2356 = vadd.f32 %v2267, %v2355
      %2357 = vdwg.mxu0
      %2358 = vmatpush.bf16.msra.mxu0 %v1573
      %2359 = vmatpush.bf16.msra.mxu0 %v1572
      %2360 = vmatpush.bf16.msra.mxu0 %v1571
      %2361 = vmatpush.bf16.msra.mxu0 %v1570
      %2362 = vmatpush.bf16.msra.mxu0 %v1569
      %2363 = vmatpush.bf16.msra.mxu0 %v1568
      %2364 = vmatpush.bf16.msra.mxu0 %v1567
      %2365 = vmatpush.bf16.msra.mxu0 %v1566
      %2366 = vmatmul.bf16.gmra.mxu0 %v962
      %v2367 = vpop.f32.mrf.mxu0
      %v2368 = vadd.f32 %v2279, %v2367
      %v2369 = vpop.f32.mrf.mxu0
      %v2370 = vadd.f32 %v2281, %v2369
      %2371 = vmatmul.bf16.gmra.mxu0 %v965
      %v2372 = vpop.f32.mrf.mxu0
      %v2373 = vadd.f32 %v2284, %v2372
      %v2374 = vpop.f32.mrf.mxu0
      %v2375 = vadd.f32 %v2286, %v2374
      %2376 = vmatmul.bf16.gmra.mxu0 %v968
      %v2377 = vpop.f32.mrf.mxu0
      %v2378 = vadd.f32 %v2289, %v2377
      %v2379 = vpop.f32.mrf.mxu0
      %v2380 = vadd.f32 %v2291, %v2379
      %2381 = vmatmul.bf16.gmra.mxu0 %v971
      %v2382 = vpop.f32.mrf.mxu0
      %v2383 = vadd.f32 %v2294, %v2382
      %v2384 = vpop.f32.mrf.mxu0
      %v2385 = vadd.f32 %v2296, %v2384
      %2386 = vmatmul.bf16.gmra.mxu0 %v974
      %v2387 = vpop.f32.mrf.mxu0
      %v2388 = vadd.f32 %v2299, %v2387
      %v2389 = vpop.f32.mrf.mxu0
      %v2390 = vadd.f32 %v2301, %v2389
      %2391 = vmatmul.bf16.gmra.mxu0 %v977
      %v2392 = vpop.f32.mrf.mxu0
      %v2393 = vadd.f32 %v2304, %v2392
      %v2394 = vpop.f32.mrf.mxu0
      %v2395 = vadd.f32 %v2306, %v2394
      %2396 = vmatmul.bf16.gmra.mxu0 %v980
      %v2397 = vpop.f32.mrf.mxu0
      %v2398 = vadd.f32 %v2309, %v2397
      %v2399 = vpop.f32.mrf.mxu0
      %v2400 = vadd.f32 %v2311, %v2399
      %2401 = vmatmul.bf16.gmra.mxu0 %v983
      %v2402 = vpop.f32.mrf.mxu0
      %v2403 = vadd.f32 %v2314, %v2402
      %v2404 = vpop.f32.mrf.mxu0
      %v2405 = vadd.f32 %v2316, %v2404
      %2406 = vmatmul.bf16.gmra.mxu0 %v986
      %v2407 = vpop.f32.mrf.mxu0
      %v2408 = vadd.f32 %v2319, %v2407
      %v2409 = vpop.f32.mrf.mxu0
      %v2410 = vadd.f32 %v2321, %v2409
      %2411 = vmatmul.bf16.gmra.mxu0 %v989
      %v2412 = vpop.f32.mrf.mxu0
      %v2413 = vadd.f32 %v2324, %v2412
      %v2414 = vpop.f32.mrf.mxu0
      %v2415 = vadd.f32 %v2326, %v2414
      %2416 = vmatmul.bf16.gmra.mxu0 %v992
      %v2417 = vpop.f32.mrf.mxu0
      %v2418 = vadd.f32 %v2329, %v2417
      %v2419 = vpop.f32.mrf.mxu0
      %v2420 = vadd.f32 %v2331, %v2419
      %2421 = vmatmul.bf16.gmra.mxu0 %v995
      %v2422 = vpop.f32.mrf.mxu0
      %v2423 = vadd.f32 %v2334, %v2422
      %v2424 = vpop.f32.mrf.mxu0
      %v2425 = vadd.f32 %v2336, %v2424
      %2426 = vmatmul.bf16.gmra.mxu0 %v998
      %v2427 = vpop.f32.mrf.mxu0
      %v2428 = vadd.f32 %v2339, %v2427
      %v2429 = vpop.f32.mrf.mxu0
      %v2430 = vadd.f32 %v2341, %v2429
      %2431 = vmatmul.bf16.gmra.mxu0 %v1001
      %v2432 = vpop.f32.mrf.mxu0
      %v2433 = vadd.f32 %v2344, %v2432
      %v2434 = vpop.f32.mrf.mxu0
      %v2435 = vadd.f32 %v2346, %v2434
      %2436 = vmatmul.bf16.gmra.mxu0 %v1042
      %v2437 = vpop.f32.mrf.mxu0
      %v2438 = vadd.f32 %v2349, %v2437
      %v2439 = vpop.f32.mrf.mxu0
      %v2440 = vadd.f32 %v2351, %v2439
      %2441 = vmatmul.bf16.gmra.mxu0 %v1068
      %v2442 = vpop.f32.mrf.mxu0
      %v2443 = vadd.f32 %v2354, %v2442
      %v2444 = vpop.f32.mrf.mxu0
      %v2445 = vadd.f32 %v2356, %v2444
      %2446 = vdwg.mxu0
      %2447 = vst [vmem:[%s262] sm:$0xff] %v2368
      %2448 = vst [vmem:[%s262 + $0x8] sm:$0xff] %v2370
      %2449 = vst [vmem:[%s262 + $0x10] sm:$0xff] %v2373
      %2450 = vst [vmem:[%s262 + $0x18] sm:$0xff] %v2375
      %2451 = vst [vmem:[%s262 + $0x20] sm:$0xff] %v2378
      %2452 = vst [vmem:[%s262 + $0x28] sm:$0xff] %v2380
      %2453 = vst [vmem:[%s262 + $0x30] sm:$0xff] %v2383
      %2454 = vst [vmem:[%s262 + $0x38] sm:$0xff] %v2385
      %2455 = vst [vmem:[%s262 + $0x40] sm:$0xff] %v2388
      %2456 = vst [vmem:[%s262 + $0x48] sm:$0xff] %v2390
      %2457 = vst [vmem:[%s262 + $0x50] sm:$0xff] %v2393
      %2458 = vst [vmem:[%s262 + $0x58] sm:$0xff] %v2395
      %2459 = vst [vmem:[%s262 + $0x60] sm:$0xff] %v2398
      %2460 = vst [vmem:[%s262 + $0x68] sm:$0xff] %v2400
      %2461 = vst [vmem:[%s262 + $0x70] sm:$0xff] %v2403
      %2462 = vst [vmem:[%s262 + $0x78] sm:$0xff] %v2405
      %2463 = vst [vmem:[%s262 + $0x80] sm:$0xff] %v2408
      %2464 = vst [vmem:[%s262 + $0x88] sm:$0xff] %v2410
      %2465 = vst [vmem:[%s262 + $0x90] sm:$0xff] %v2413
      %2466 = vst [vmem:[%s262 + $0x98] sm:$0xff] %v2415
      %2467 = vst [vmem:[%s262 + $0xa0] sm:$0xff] %v2418
      %2468 = vst [vmem:[%s262 + $0xa8] sm:$0xff] %v2420
      %2469 = vst [vmem:[%s262 + $0xb0] sm:$0xff] %v2423
      %2470 = vst [vmem:[%s262 + $0xb8] sm:$0xff] %v2425
      %2471 = vst [vmem:[%s262 + $0xc0] sm:$0xff] %v2428
      %2472 = vst [vmem:[%s262 + $0xc8] sm:$0xff] %v2430
      %2473 = vst [vmem:[%s262 + $0xd0] sm:$0xff] %v2433
      %2474 = vst [vmem:[%s262 + $0xd8] sm:$0xff] %v2435
      %2475 = vst [vmem:[%s262 + $0xe0] sm:$0xff] %v2438
      %2476 = vst [vmem:[%s262 + $0xe8] sm:$0xff] %v2440
      %2477 = vst [vmem:[%s262 + $0xf0] sm:$0xff] %v2443
      %2478 = vst [vmem:[%s262 + $0xf8] sm:$0xff] %v2445
      %v2479 = vadd.f32 %v2368, %v2370
      %v2480 = vadd.f32 %v2479, %v2373
      %v2481 = vadd.f32 %v2480, %v2375
      %v2482 = vadd.f32 %v2481, %v2378
      %v2483 = vadd.f32 %v2482, %v2380
      %v2484 = vadd.f32 %v2483, %v2383
      %v2485 = vadd.f32 %v2484, %v2385
      %v2486 = vadd.f32 %v2485, %v2388
      %v2487 = vadd.f32 %v2486, %v2390
      %v2488 = vadd.f32 %v2487, %v2393
      %v2489 = vadd.f32 %v2488, %v2395
      %v2490 = vadd.f32 %v2489, %v2398
      %v2491 = vadd.f32 %v2490, %v2400
      %v2492 = vadd.f32 %v2491, %v2403
      %v2493 = vadd.f32 %v2492, %v2405
      %v2494 = vadd.f32 %v2493, %v2408
      %v2495 = vadd.f32 %v2494, %v2410
      %v2496 = vadd.f32 %v2495, %v2413
      %v2497 = vadd.f32 %v2496, %v2415
      %v2498 = vadd.f32 %v2497, %v2418
      %v2499 = vadd.f32 %v2498, %v2420
      %v2500 = vadd.f32 %v2499, %v2423
      %v2501 = vadd.f32 %v2500, %v2425
      %v2502 = vadd.f32 %v2501, %v2428
      %v2503 = vadd.f32 %v2502, %v2430
      %v2504 = vadd.f32 %v2503, %v2433
      %v2505 = vadd.f32 %v2504, %v2435
      %v2506 = vadd.f32 %v2505, %v2438
      %v2507 = vadd.f32 %v2506, %v2440
      %v2508 = vadd.f32 %v2507, %v2443
      %v2509 = vadd.f32 %v2508, %v2445
      %v2510 = vrot.slane %v2509, 4
      %v2511 = vadd.f32 %v2509, %v2510
      %v2512 = vrot.slane %v2511, 2
      %v2513 = vadd.f32 %v2511, %v2512
      %v2514 = vrot.slane %v2513, 1
      %v2515 = vadd.f32 %v2513, %v2514
      %2516 = vst [vmem:[%s265] sm:$0x1] %v2515
      %v2517 = vmul.f32 %v2368, %v2368
      %v2518 = vmul.f32 %v2370, %v2370
      %v2519 = vmul.f32 %v2373, %v2373
      %v2520 = vmul.f32 %v2375, %v2375
      %v2521 = vmul.f32 %v2378, %v2378
      %v2522 = vmul.f32 %v2380, %v2380
      %v2523 = vmul.f32 %v2383, %v2383
      %v2524 = vmul.f32 %v2385, %v2385
      %v2525 = vmul.f32 %v2388, %v2388
      %v2526 = vmul.f32 %v2390, %v2390
      %v2527 = vmul.f32 %v2393, %v2393
      %v2528 = vmul.f32 %v2395, %v2395
      %v2529 = vmul.f32 %v2398, %v2398
      %v2530 = vmul.f32 %v2400, %v2400
      %v2531 = vmul.f32 %v2403, %v2403
      %v2532 = vmul.f32 %v2405, %v2405
      %v2533 = vmul.f32 %v2408, %v2408
      %v2534 = vmul.f32 %v2410, %v2410
      %v2535 = vmul.f32 %v2413, %v2413
      %v2536 = vmul.f32 %v2415, %v2415
      %v2537 = vmul.f32 %v2418, %v2418
      %v2538 = vmul.f32 %v2420, %v2420
      %v2539 = vmul.f32 %v2423, %v2423
      %v2540 = vmul.f32 %v2425, %v2425
      %v2541 = vmul.f32 %v2428, %v2428
      %v2542 = vmul.f32 %v2430, %v2430
      %v2543 = vmul.f32 %v2433, %v2433
      %v2544 = vmul.f32 %v2435, %v2435
      %v2545 = vmul.f32 %v2438, %v2438
      %v2546 = vmul.f32 %v2440, %v2440
      %v2547 = vmul.f32 %v2443, %v2443
      %v2548 = vmul.f32 %v2445, %v2445
      %v2549 = vadd.f32 %v2517, %v2518
      %v2550 = vadd.f32 %v2549, %v2519
      %v2551 = vadd.f32 %v2550, %v2520
      %v2552 = vadd.f32 %v2551, %v2521
      %v2553 = vadd.f32 %v2552, %v2522
      %v2554 = vadd.f32 %v2553, %v2523
      %v2555 = vadd.f32 %v2554, %v2524
      %v2556 = vadd.f32 %v2555, %v2525
      %v2557 = vadd.f32 %v2556, %v2526
      %v2558 = vadd.f32 %v2557, %v2527
      %v2559 = vadd.f32 %v2558, %v2528
      %v2560 = vadd.f32 %v2559, %v2529
      %v2561 = vadd.f32 %v2560, %v2530
      %v2562 = vadd.f32 %v2561, %v2531
      %v2563 = vadd.f32 %v2562, %v2532
      %v2564 = vadd.f32 %v2563, %v2533
      %v2565 = vadd.f32 %v2564, %v2534
      %v2566 = vadd.f32 %v2565, %v2535
      %v2567 = vadd.f32 %v2566, %v2536
      %v2568 = vadd.f32 %v2567, %v2537
      %v2569 = vadd.f32 %v2568, %v2538
      %v2570 = vadd.f32 %v2569, %v2539
      %v2571 = vadd.f32 %v2570, %v2540
      %v2572 = vadd.f32 %v2571, %v2541
      %v2573 = vadd.f32 %v2572, %v2542
      %v2574 = vadd.f32 %v2573, %v2543
      %v2575 = vadd.f32 %v2574, %v2544
      %v2576 = vadd.f32 %v2575, %v2545
      %v2577 = vadd.f32 %v2576, %v2546
      %v2578 = vadd.f32 %v2577, %v2547
      %v2579 = vadd.f32 %v2578, %v2548
      %v2580 = vrot.slane %v2579, 4
      %v2581 = vadd.f32 %v2579, %v2580
      %v2582 = vrot.slane %v2581, 2
      %v2583 = vadd.f32 %v2581, %v2582
      %v2584 = vrot.slane %v2583, 1
      %v2585 = vadd.f32 %v2583, %v2584
      %2586 = vst [vmem:[%s268] sm:$0x1] %v2585
      %p2587 = scmp.lt.s32.totalorder %s18, 1
      %s2588 = scalar_select %p2587, %s18, 1
      %s2589 = smul.addr %s2588, 32
      %s2590 = smul.addr %s2589, 8
      %s2591 = scalar_lea.vmem %s4, %s2590
      %p2592 = scmp.lt.s32.totalorder %s18, 1
      %s2593 = scalar_select %p2592, %s18, 1
      %s2594 = scalar_lea.vmem %s5, %s2593
      %p2595 = scmp.lt.s32.totalorder %s18, 1
      %s2596 = scalar_select %p2595, %s18, 1
      %s2597 = scalar_lea.vmem %s6, %s2596
      // Predicated region
      $region37: #{double_conv.4} parent=35 // pred_check
        %p2598 = pneg %p125
      $region38: #{double_conv.4} parent=35 // pred_check_branch
        %2600 = sbr.rel (%p2598) target = $region40
      $region39: #{double_conv.4} parent=35 // pred_region
        _
      $region40: #{double_conv.4} parent=35 // pred_fallthru
        _
      // Predicated region
      $region41: #{double_conv.4} parent=35 // pred_check
        %p2601 = pneg %p151
      $region42: #{double_conv.4} parent=35 // pred_check_branch
        %2603 = sbr.rel (%p2601) target = $region44
      $region43: #{double_conv.4} parent=35 // pred_region
        _
      $region44: #{double_conv.4} parent=35 // pred_fallthru
        _
      // Predicated region
      $region45: #{double_conv.4} parent=35 // pred_check
        %p2604 = pneg %p177
      $region46: #{double_conv.4} parent=35 // pred_check_branch
        %2606 = sbr.rel (%p2604) target = $region48
      $region47: #{double_conv.4} parent=35 // pred_region
        _
      $region48: #{double_conv.4} parent=35 // pred_fallthru
        _
    $region36: #{double_conv.4} parent=5 // pred_fallthru
      _
    %p2607 = scmp.le.s32.totalorder 2, %s13
    // Predicated region
    $region49: #{double_conv.4} parent=5 // pred_check
      %p2608 = pneg %p2607
    $region50: #{double_conv.4} parent=5 // pred_check_branch
      %2610 = sbr.rel (%p2608) target = $region52
    $region51: #{double_conv.4} parent=5 // pred_region
      %s2611 = ssub.s32 %s13, 2
      // Predicated region
      $region53: #{double_conv.4} parent=51 // pred_check
        %p2612 = pneg %p131
      $region54: #{double_conv.4} parent=51 // pred_check_branch
        %2614 = sbr.rel (%p2612) target = $region56
      $region55: #{double_conv.4} parent=51 // pred_region
        %p2615 = scmp.lt.s32.totalorder %s19, 1
        %s2616 = scalar_select %p2615, %s19, 1
        %s2617 = smul.addr %s2616, 32
        %s2618 = smul.addr %s2617, 8
        %s2619 = scalar_lea.vmem %s4, %s2618
      $region56: #{double_conv.4} parent=51 // pred_fallthru
        _
      // Predicated region
      $region57: #{double_conv.4} parent=51 // pred_check
        %p2620 = pneg %p157
      $region58: #{double_conv.4} parent=51 // pred_check_branch
        %2622 = sbr.rel (%p2620) target = $region60
      $region59: #{double_conv.4} parent=51 // pred_region
        %p2623 = scmp.lt.s32.totalorder %s19, 1
        %s2624 = scalar_select %p2623, %s19, 1
        %s2625 = scalar_lea.vmem %s5, %s2624
      $region60: #{double_conv.4} parent=51 // pred_fallthru
        _
      // Predicated region
      $region61: #{double_conv.4} parent=51 // pred_check
        %p2626 = pneg %p183
      $region62: #{double_conv.4} parent=51 // pred_check_branch
        %2628 = sbr.rel (%p2626) target = $region64
      $region63: #{double_conv.4} parent=51 // pred_region
        %p2629 = scmp.lt.s32.totalorder %s19, 1
        %s2630 = scalar_select %p2629, %s19, 1
        %s2631 = scalar_lea.vmem %s6, %s2630
      $region64: #{double_conv.4} parent=51 // pred_fallthru
        _
    $region52: #{double_conv.4} parent=5 // pred_fallthru
      _
  $region6: #{double_conv.4} parent=0 // loop_footer
    %s17 = sadd.s32 1, %s13
  $region7: #{double_conv.4} parent=0 // loop_footer_branch
    %12 = sbr.rel target = $region3
  $region8: #{double_conv.4} parent=0 // loop_exit
    _

</llo_original>
